<compile_context>
chip_gen: v6e
topology: v6e:2x2x1
jax: 0.10.0
libtpu: 0.0.40
codegen_flags: <defaults>
</compile_context>

<pallas_src>
import functools

import jax
import jax.numpy as jnp
from jax import lax
from jax.experimental import pallas as pl
from jax.experimental.pallas import tpu as pltpu


def _pack_conv_weight(w_hwio, in_pack, out_order):
    """Packed-matmul weight for a 'valid' conv whose input width pixels are packed
    `in_pack`-per-lane-group and whose output columns come out `len(out_order)`
    at a time as lane blocks (conv-column offsets given by `out_order`).

    Row index k = ((di*2 + dv)*in_pack + s)*Cin + c multiplies input element
    x[row + di, in_pack*(u + dv) + s, c]; the lane block at position p (conv
    column offset j = out_order[p]) receives W[di, in_pack*dv + s - j, c, :]
    when that tap offset lies in [0, KW), else 0.
    """
    KH, KW, Cin, Cout = w_hwio.shape
    zero = jnp.zeros((Cin, Cout), w_hwio.dtype)
    rows = []
    for di in range(KH):
        for dv in range(2):
            for s in range(in_pack):
                cols = []
                for j in out_order:
                    dj = in_pack * dv + s - j
                    cols.append(w_hwio[di, dj] if 0 <= dj < KW else zero)
                rows.append(jnp.concatenate(cols, axis=1))
    return jnp.concatenate(rows, axis=0)  # (KH*2*in_pack*Cin, len(out_order)*Cout)


def _fused_kernel(x_ref, w1_ref, b1_ref, w2_ref, b2_ref, o_ref, *,
                  B, KH, U1, R1, Hp2, Wp2, C0, C1):
    """Fused conv+ReLU+pool (x2). One grid step, whole batch.

    x_ref : (B, H, W//4, 4*Cin)  width-quad-packed NHWC input
    w1_ref: (KH*2*4*Cin, 4*C0)   block-1 packed weight, column order (0,2,1,3)
    b1_ref: (1, 2*C0)            block-1 bias tiled twice (pair-packed layout)
    w2_ref: (KH*2*2*C0, 2*C1)    block-2 packed weight, column order (0,1)
    b2_ref: (1, C1)
    o_ref : (B, Hp2, Wp2, C1)    NHWC output
    """
    w1 = w1_ref[...]
    w2 = w2_ref[...]
    b1t = b1_ref[...]
    b2 = b2_ref[...]
    half1 = 2 * C0

    outs = []
    for b in range(B):
        # ---- block 1: quad-packed conv rows -> pair-packed pooled rows ----
        xp2 = []  # pooled1 rows in pair-packed layout: (U1, 2*C0)
        for pi in range(R1 // 2):
            cq = []
            for dr in range(2):
                r = 2 * pi + dr
                pieces = []
                for di in range(KH):
                    row = x_ref[b, r + di]          # (W//4, 4*Cin)
                    pieces.append(row[0:U1, :])
                    pieces.append(row[1:1 + U1, :])
                patch = jnp.concatenate(pieces, axis=1)      # (U1, KH*2*4*Cin)
                cq.append(jnp.dot(patch, w1,
                                  preferred_element_type=jnp.float32))  # (U1, 4*C0)
            # cq columns = conv cols [4u+0 | 4u+2 | 4u+1 | 4u+3]; max of halves +
            # max of the two conv rows == 2x2 max-pool (bias/ReLU commute with max).
            m = jnp.maximum(jnp.maximum(cq[0][:, :half1], cq[0][:, half1:]),
                            jnp.maximum(cq[1][:, :half1], cq[1][:, half1:]))
            xp2.append(jnp.maximum(m + b1t, 0.0))            # (U1, 2*C0)

        # ---- block 2: pair-packed conv rows -> final pooled rows ----
        out_rows = []
        for po in range(Hp2):
            pair = []
            for dr in range(2):
                r2 = 2 * po + dr
                patch2 = jnp.concatenate(
                    [xp2[r2 + di][du:du + Wp2, :]
                     for di in range(KH) for du in range(2)],
                    axis=1)                                  # (Wp2, KH*2*2*C0)
                pair.append(jnp.dot(patch2, w2,
                                    preferred_element_type=jnp.float32))  # (Wp2, 2*C1)
            m2 = jnp.maximum(jnp.maximum(pair[0][:, :C1], pair[0][:, C1:]),
                             jnp.maximum(pair[1][:, :C1], pair[1][:, C1:]))
            out_rows.append(jnp.maximum(m2 + b2, 0.0))       # (Wp2, C1)
        outs.append(jnp.stack(out_rows, axis=0))             # (Hp2, Wp2, C1)

    o_ref[...] = jnp.stack(outs, axis=0).astype(o_ref.dtype)  # single store


def simple_cnn_conv_blocks(x_nchw, params):
    """Pallas version of SimpleCNNContainerConvBlocks.forward (NCHW in / NCHW out)."""
    w1, b1 = params["w1"], params["b1"]
    w2, b2 = params["w2"], params["b2"]
    B, Cin, H, W = x_nchw.shape
    KH, KW, _, C0 = w1.shape
    _, _, _, C1 = w2.shape
    assert KH == KW and KW <= 3, "specialized for kernel_size <= 3"

    # geometry (valid conv, 2x2/2 floor pooling)
    Hout1, Wout1 = H - KH + 1, W - KW + 1
    Hp1, Wp1 = Hout1 // 2, Wout1 // 2
    Hout2, Wout2 = Hp1 - KH + 1, Wp1 - KW + 1
    Hp2, Wp2 = Hout2 // 2, Wout2 // 2
    assert Hp2 >= 1 and Wp2 >= 1

    # only the part of block 1 that block 2 actually consumes is computed
    Hp1u = 2 * Hp2 + KH - 1          # pooled-1 rows used
    Wp1u = 2 * Wp2 + KW - 1          # pooled-1 cols used
    R1 = 2 * Hp1u                    # conv-1 rows computed
    U1 = pl.cdiv(2 * Wp1u, 4)        # conv-1 column quads computed
    n_rows1 = R1 + KH - 1            # input rows read
    assert Hp1u <= Hp1 and Wp1u <= Wp1
    assert U1 >= Wp2 + 1             # enough patch rows for block 2
    assert 4 * U1 <= Wout1           # computed conv-1 columns exist
    assert 4 * U1 + KW - 1 <= W      # every non-zero weight sees real data
    assert n_rows1 <= H

    # NCHW -> NHWC, pad W to a multiple of 4, pack width quads into the lane dim.
    x = jnp.transpose(x_nchw, (0, 2, 3, 1))
    W_pad = 4 * ((W + 3) // 4)
    if W_pad != W:
        x = jnp.pad(x, ((0, 0), (0, 0), (0, W_pad - W), (0, 0)))
    assert 4 * (U1 + 1) <= W_pad
    xq = x.reshape(B, H, W_pad // 4, 4 * Cin)

    w1p = _pack_conv_weight(w1, in_pack=4, out_order=(0, 2, 1, 3))  # (96, 4*C0)
    w2p = _pack_conv_weight(w2, in_pack=2, out_order=(0, 1))        # (96, 2*C1)
    b1t = jnp.concatenate([b1, b1], axis=1)                         # (1, 2*C0)

    kernel = functools.partial(
        _fused_kernel, B=B, KH=KH, U1=U1, R1=R1, Hp2=Hp2, Wp2=Wp2, C0=C0, C1=C1)

    out_nhwc = pl.pallas_call(
        kernel,
        out_shape=jax.ShapeDtypeStruct((B, Hp2, Wp2, C1), jnp.float32),
        grid=(1,),
        in_specs=[
            pl.BlockSpec(xq.shape, lambda i: (0, 0, 0, 0)),
            pl.BlockSpec(w1p.shape, lambda i: (0, 0)),
            pl.BlockSpec(b1t.shape, lambda i: (0, 0)),
            pl.BlockSpec(w2p.shape, lambda i: (0, 0)),
            pl.BlockSpec(b2.shape, lambda i: (0, 0)),
        ],
        out_specs=pl.BlockSpec((B, Hp2, Wp2, C1), lambda i: (0, 0, 0, 0)),
        compiler_params=pltpu.CompilerParams(dimension_semantics=("arbitrary",)),
    )(xq, w1p, b1t, w2p, b2)

    return jnp.transpose(out_nhwc, (0, 3, 1, 2))      # NHWC -> NCHW


def _reference(x_nchw, params):
    """Pure-JAX reference for validation."""
    x = jnp.transpose(x_nchw, (0, 2, 3, 1))
    for wk, bk in (("w1", "b1"), ("w2", "b2")):
        y = lax.conv_general_dilated(
            x, params[wk], window_strides=(1, 1), padding="VALID",
            dimension_numbers=("NHWC", "HWIO", "NHWC"))
        y = jnp.maximum(y + params[bk][0], 0.0)
        x = lax.reduce_window(
            y, -jnp.inf, lax.max,
            window_dimensions=(1, 2, 2, 1), window_strides=(1, 2, 2, 1),
            padding="VALID")
    return jnp.transpose(x, (0, 3, 1, 2))


def init_params(key, input_channel, num_filters, kernel_size):
    k1, k2, k3, k4 = jax.random.split(key, 4)
    c0, c1 = num_filters
    scale1 = 1.0 / (input_channel * kernel_size * kernel_size) ** 0.5
    scale2 = 1.0 / (c0 * kernel_size * kernel_size) ** 0.5
    return {
        # HWIO layout (PyTorch OIHW transposed)
        "w1": scale1 * jax.random.normal(
            k1, (kernel_size, kernel_size, input_channel, c0), jnp.float32),
        "b1": scale1 * jax.random.normal(k2, (1, c0), jnp.float32),
        "w2": scale2 * jax.random.normal(
            k3, (kernel_size, kernel_size, c0, c1), jnp.float32),
        "b2": scale2 * jax.random.normal(k4, (1, c1), jnp.float32),
    }


if __name__ == "__main__":
    key = jax.random.PRNGKey(0)
    kx, kp = jax.random.split(key)

    B, Cin, H, W = 2, 4, 16, 16
    num_filters = [8, 8]
    kernel_size = 3

    x = jax.random.normal(kx, (B, Cin, H, W), jnp.float32)
    params = init_params(kp, Cin, num_filters, kernel_size)

    out = jax.block_until_ready(simple_cnn_conv_blocks(x, params))
    ref = jax.block_until_ready(_reference(x, params))

    assert out.shape == ref.shape, (out.shape, ref.shape)   # (2, 8, 2, 2)
    assert jnp.allclose(out, ref, atol=1e-5, rtol=1e-5), float(
        jnp.max(jnp.abs(out - ref)))
    print("KERNEL_OK")
</pallas_src>

<mosaic_0001>
module attributes {stable_mosaic.version = 11 : i64} {
  func.func @_fused_kernel(%arg0: i32, %arg1: memref<2x16x4x16xf32, #tpu.memory_space<vmem>>, %arg2: memref<96x32xf32, #tpu.memory_space<vmem>>, %arg3: memref<1x16xf32, #tpu.memory_space<vmem>>, %arg4: memref<96x16xf32, #tpu.memory_space<vmem>>, %arg5: memref<1x8xf32, #tpu.memory_space<vmem>>, %arg6: memref<2x2x2x8xf32, #tpu.memory_space<vmem>>) attributes {dimension_semantics = [#tpu.dimension_semantics<arbitrary>], iteration_bounds = array<i64: 1>, scalar_prefetch = 0 : i64, scratch_operands = 0 : i64, tpu.core_type = #tpu.core_type<tc>, window_params = [{pipeline_mode = #tpu.pipeline_mode<synchronous>, transform_indices = @transform_0, window_bounds = array<i64: 2, 16, 4, 16>}, {pipeline_mode = #tpu.pipeline_mode<synchronous>, transform_indices = @transform_1, window_bounds = array<i64: 96, 32>}, {pipeline_mode = #tpu.pipeline_mode<synchronous>, transform_indices = @transform_2, window_bounds = array<i64: 1, 16>}, {pipeline_mode = #tpu.pipeline_mode<synchronous>, transform_indices = @transform_3, window_bounds = array<i64: 96, 16>}, {pipeline_mode = #tpu.pipeline_mode<synchronous>, transform_indices = @transform_4, window_bounds = array<i64: 1, 8>}, {pipeline_mode = #tpu.pipeline_mode<synchronous>, transform_indices = @transform_5, window_bounds = array<i64: 2, 2, 2, 8>}]} {
    %c0 = arith.constant 0 : index
    %c0_0 = arith.constant 0 : index
    %0 = vector.load %arg2[%c0, %c0_0] : memref<96x32xf32, #tpu.memory_space<vmem>>, vector<96x32xf32>
    %c0_1 = arith.constant 0 : index
    %c0_2 = arith.constant 0 : index
    %1 = vector.load %arg4[%c0_1, %c0_2] : memref<96x16xf32, #tpu.memory_space<vmem>>, vector<96x16xf32>
    %c0_3 = arith.constant 0 : index
    %c0_4 = arith.constant 0 : index
    %2 = vector.load %arg3[%c0_3, %c0_4] : memref<1x16xf32, #tpu.memory_space<vmem>>, vector<1x16xf32>
    %c0_5 = arith.constant 0 : index
    %c0_6 = arith.constant 0 : index
    %3 = vector.load %arg5[%c0_5, %c0_6] : memref<1x8xf32, #tpu.memory_space<vmem>>, vector<1x8xf32>
    %c0_7 = arith.constant 0 : index
    %c0_8 = arith.constant 0 : index
    %c0_9 = arith.constant 0 : index
    %c0_10 = arith.constant 0 : index
    %4 = vector.load %arg1[%c0_7, %c0_8, %c0_9, %c0_10] : memref<2x16x4x16xf32, #tpu.memory_space<vmem>>, vector<1x1x4x16xf32>
    %5 = vector.shape_cast %4 : vector<1x1x4x16xf32> to vector<4x16xf32>
    %6 = vector.extract_strided_slice %5 {offsets = [0, 0], sizes = [3, 16], strides = [1, 1]} : vector<4x16xf32> to vector<3x16xf32>
    %7 = vector.extract_strided_slice %5 {offsets = [1, 0], sizes = [3, 16], strides = [1, 1]} : vector<4x16xf32> to vector<3x16xf32>
    %c0_11 = arith.constant 0 : index
    %c1 = arith.constant 1 : index
    %c0_12 = arith.constant 0 : index
    %c0_13 = arith.constant 0 : index
    %8 = vector.load %arg1[%c0_11, %c1, %c0_12, %c0_13] : memref<2x16x4x16xf32, #tpu.memory_space<vmem>>, vector<1x1x4x16xf32>
    %9 = vector.shape_cast %8 : vector<1x1x4x16xf32> to vector<4x16xf32>
    %10 = vector.extract_strided_slice %9 {offsets = [0, 0], sizes = [3, 16], strides = [1, 1]} : vector<4x16xf32> to vector<3x16xf32>
    %11 = vector.extract_strided_slice %9 {offsets = [1, 0], sizes = [3, 16], strides = [1, 1]} : vector<4x16xf32> to vector<3x16xf32>
    %c0_14 = arith.constant 0 : index
    %c2 = arith.constant 2 : index
    %c0_15 = arith.constant 0 : index
    %c0_16 = arith.constant 0 : index
    %12 = vector.load %arg1[%c0_14, %c2, %c0_15, %c0_16] : memref<2x16x4x16xf32, #tpu.memory_space<vmem>>, vector<1x1x4x16xf32>
    %13 = vector.shape_cast %12 : vector<1x1x4x16xf32> to vector<4x16xf32>
    %14 = vector.extract_strided_slice %13 {offsets = [0, 0], sizes = [3, 16], strides = [1, 1]} : vector<4x16xf32> to vector<3x16xf32>
    %15 = vector.extract_strided_slice %13 {offsets = [1, 0], sizes = [3, 16], strides = [1, 1]} : vector<4x16xf32> to vector<3x16xf32>
    %16 = tpu.concatenate %6, %7, %10, %11, %14, %15 in 1 : vector<3x16xf32>, vector<3x16xf32>, vector<3x16xf32>, vector<3x16xf32>, vector<3x16xf32>, vector<3x16xf32> -> vector<3x96xf32>
    %cst = arith.constant dense<0.000000e+00> : vector<3x32xf32>
    %17 = tpu.matmul %16, %0, %cst {dimension_numbers = #tpu.dot_dimension_numbers<[1], [0], [0], [1], [0, 0, 1, 1], [], []>} : vector<3x96xf32>, vector<96x32xf32>, vector<3x32xf32> -> vector<3x32xf32>
    %c0_17 = arith.constant 0 : index
    %c1_18 = arith.constant 1 : index
    %c0_19 = arith.constant 0 : index
    %c0_20 = arith.constant 0 : index
    %18 = vector.load %arg1[%c0_17, %c1_18, %c0_19, %c0_20] : memref<2x16x4x16xf32, #tpu.memory_space<vmem>>, vector<1x1x4x16xf32>
    %19 = vector.shape_cast %18 : vector<1x1x4x16xf32> to vector<4x16xf32>
    %20 = vector.extract_strided_slice %19 {offsets = [0, 0], sizes = [3, 16], strides = [1, 1]} : vector<4x16xf32> to vector<3x16xf32>
    %21 = vector.extract_strided_slice %19 {offsets = [1, 0], sizes = [3, 16], strides = [1, 1]} : vector<4x16xf32> to vector<3x16xf32>
    %c0_21 = arith.constant 0 : index
    %c2_22 = arith.constant 2 : index
    %c0_23 = arith.constant 0 : index
    %c0_24 = arith.constant 0 : index
    %22 = vector.load %arg1[%c0_21, %c2_22, %c0_23, %c0_24] : memref<2x16x4x16xf32, #tpu.memory_space<vmem>>, vector<1x1x4x16xf32>
    %23 = vector.shape_cast %22 : vector<1x1x4x16xf32> to vector<4x16xf32>
    %24 = vector.extract_strided_slice %23 {offsets = [0, 0], sizes = [3, 16], strides = [1, 1]} : vector<4x16xf32> to vector<3x16xf32>
    %25 = vector.extract_strided_slice %23 {offsets = [1, 0], sizes = [3, 16], strides = [1, 1]} : vector<4x16xf32> to vector<3x16xf32>
    %c0_25 = arith.constant 0 : index
    %c3 = arith.constant 3 : index
    %c0_26 = arith.constant 0 : index
    %c0_27 = arith.constant 0 : index
    %26 = vector.load %arg1[%c0_25, %c3, %c0_26, %c0_27] : memref<2x16x4x16xf32, #tpu.memory_space<vmem>>, vector<1x1x4x16xf32>
    %27 = vector.shape_cast %26 : vector<1x1x4x16xf32> to vector<4x16xf32>
    %28 = vector.extract_strided_slice %27 {offsets = [0, 0], sizes = [3, 16], strides = [1, 1]} : vector<4x16xf32> to vector<3x16xf32>
    %29 = vector.extract_strided_slice %27 {offsets = [1, 0], sizes = [3, 16], strides = [1, 1]} : vector<4x16xf32> to vector<3x16xf32>
    %30 = tpu.concatenate %20, %21, %24, %25, %28, %29 in 1 : vector<3x16xf32>, vector<3x16xf32>, vector<3x16xf32>, vector<3x16xf32>, vector<3x16xf32>, vector<3x16xf32> -> vector<3x96xf32>
    %cst_28 = arith.constant dense<0.000000e+00> : vector<3x32xf32>
    %31 = tpu.matmul %30, %0, %cst_28 {dimension_numbers = #tpu.dot_dimension_numbers<[1], [0], [0], [1], [0, 0, 1, 1], [], []>} : vector<3x96xf32>, vector<96x32xf32>, vector<3x32xf32> -> vector<3x32xf32>
    %32 = vector.extract_strided_slice %17 {offsets = [0, 0], sizes = [3, 16], strides = [1, 1]} : vector<3x32xf32> to vector<3x16xf32>
    %33 = vector.extract_strided_slice %17 {offsets = [0, 16], sizes = [3, 16], strides = [1, 1]} : vector<3x32xf32> to vector<3x16xf32>
    %34 = arith.maximumf %32, %33 : vector<3x16xf32>
    %35 = vector.extract_strided_slice %31 {offsets = [0, 0], sizes = [3, 16], strides = [1, 1]} : vector<3x32xf32> to vector<3x16xf32>
    %36 = vector.extract_strided_slice %31 {offsets = [0, 16], sizes = [3, 16], strides = [1, 1]} : vector<3x32xf32> to vector<3x16xf32>
    %37 = arith.maximumf %35, %36 : vector<3x16xf32>
    %38 = arith.maximumf %34, %37 : vector<3x16xf32>
    %39 = vector.broadcast %2 : vector<1x16xf32> to vector<3x16xf32>
    %40 = arith.addf %38, %39 : vector<3x16xf32>
    %cst_29 = arith.constant 0.000000e+00 : f32
    %41 = vector.broadcast %cst_29 : f32 to vector<3x16xf32>
    %42 = arith.maximumf %40, %41 : vector<3x16xf32>
    %c0_30 = arith.constant 0 : index
    %c2_31 = arith.constant 2 : index
    %c0_32 = arith.constant 0 : index
    %c0_33 = arith.constant 0 : index
    %43 = vector.load %arg1[%c0_30, %c2_31, %c0_32, %c0_33] : memref<2x16x4x16xf32, #tpu.memory_space<vmem>>, vector<1x1x4x16xf32>
    %44 = vector.shape_cast %43 : vector<1x1x4x16xf32> to vector<4x16xf32>
    %45 = vector.extract_strided_slice %44 {offsets = [0, 0], sizes = [3, 16], strides = [1, 1]} : vector<4x16xf32> to vector<3x16xf32>
    %46 = vector.extract_strided_slice %44 {offsets = [1, 0], sizes = [3, 16], strides = [1, 1]} : vector<4x16xf32> to vector<3x16xf32>
    %c0_34 = arith.constant 0 : index
    %c3_35 = arith.constant 3 : index
    %c0_36 = arith.constant 0 : index
    %c0_37 = arith.constant 0 : index
    %47 = vector.load %arg1[%c0_34, %c3_35, %c0_36, %c0_37] : memref<2x16x4x16xf32, #tpu.memory_space<vmem>>, vector<1x1x4x16xf32>
    %48 = vector.shape_cast %47 : vector<1x1x4x16xf32> to vector<4x16xf32>
    %49 = vector.extract_strided_slice %48 {offsets = [0, 0], sizes = [3, 16], strides = [1, 1]} : vector<4x16xf32> to vector<3x16xf32>
    %50 = vector.extract_strided_slice %48 {offsets = [1, 0], sizes = [3, 16], strides = [1, 1]} : vector<4x16xf32> to vector<3x16xf32>
    %c0_38 = arith.constant 0 : index
    %c4 = arith.constant 4 : index
    %c0_39 = arith.constant 0 : index
    %c0_40 = arith.constant 0 : index
    %51 = vector.load %arg1[%c0_38, %c4, %c0_39, %c0_40] : memref<2x16x4x16xf32, #tpu.memory_space<vmem>>, vector<1x1x4x16xf32>
    %52 = vector.shape_cast %51 : vector<1x1x4x16xf32> to vector<4x16xf32>
    %53 = vector.extract_strided_slice %52 {offsets = [0, 0], sizes = [3, 16], strides = [1, 1]} : vector<4x16xf32> to vector<3x16xf32>
    %54 = vector.extract_strided_slice %52 {offsets = [1, 0], sizes = [3, 16], strides = [1, 1]} : vector<4x16xf32> to vector<3x16xf32>
    %55 = tpu.concatenate %45, %46, %49, %50, %53, %54 in 1 : vector<3x16xf32>, vector<3x16xf32>, vector<3x16xf32>, vector<3x16xf32>, vector<3x16xf32>, vector<3x16xf32> -> vector<3x96xf32>
    %cst_41 = arith.constant dense<0.000000e+00> : vector<3x32xf32>
    %56 = tpu.matmul %55, %0, %cst_41 {dimension_numbers = #tpu.dot_dimension_numbers<[1], [0], [0], [1], [0, 0, 1, 1], [], []>} : vector<3x96xf32>, vector<96x32xf32>, vector<3x32xf32> -> vector<3x32xf32>
    %c0_42 = arith.constant 0 : index
    %c3_43 = arith.constant 3 : index
    %c0_44 = arith.constant 0 : index
    %c0_45 = arith.constant 0 : index
    %57 = vector.load %arg1[%c0_42, %c3_43, %c0_44, %c0_45] : memref<2x16x4x16xf32, #tpu.memory_space<vmem>>, vector<1x1x4x16xf32>
    %58 = vector.shape_cast %57 : vector<1x1x4x16xf32> to vector<4x16xf32>
    %59 = vector.extract_strided_slice %58 {offsets = [0, 0], sizes = [3, 16], strides = [1, 1]} : vector<4x16xf32> to vector<3x16xf32>
    %60 = vector.extract_strided_slice %58 {offsets = [1, 0], sizes = [3, 16], strides = [1, 1]} : vector<4x16xf32> to vector<3x16xf32>
    %c0_46 = arith.constant 0 : index
    %c4_47 = arith.constant 4 : index
    %c0_48 = arith.constant 0 : index
    %c0_49 = arith.constant 0 : index
    %61 = vector.load %arg1[%c0_46, %c4_47, %c0_48, %c0_49] : memref<2x16x4x16xf32, #tpu.memory_space<vmem>>, vector<1x1x4x16xf32>
    %62 = vector.shape_cast %61 : vector<1x1x4x16xf32> to vector<4x16xf32>
    %63 = vector.extract_strided_slice %62 {offsets = [0, 0], sizes = [3, 16], strides = [1, 1]} : vector<4x16xf32> to vector<3x16xf32>
    %64 = vector.extract_strided_slice %62 {offsets = [1, 0], sizes = [3, 16], strides = [1, 1]} : vector<4x16xf32> to vector<3x16xf32>
    %c0_50 = arith.constant 0 : index
    %c5 = arith.constant 5 : index
    %c0_51 = arith.constant 0 : index
    %c0_52 = arith.constant 0 : index
    %65 = vector.load %arg1[%c0_50, %c5, %c0_51, %c0_52] : memref<2x16x4x16xf32, #tpu.memory_space<vmem>>, vector<1x1x4x16xf32>
    %66 = vector.shape_cast %65 : vector<1x1x4x16xf32> to vector<4x16xf32>
    %67 = vector.extract_strided_slice %66 {offsets = [0, 0], sizes = [3, 16], strides = [1, 1]} : vector<4x16xf32> to vector<3x16xf32>
    %68 = vector.extract_strided_slice %66 {offsets = [1, 0], sizes = [3, 16], strides = [1, 1]} : vector<4x16xf32> to vector<3x16xf32>
    %69 = tpu.concatenate %59, %60, %63, %64, %67, %68 in 1 : vector<3x16xf32>, vector<3x16xf32>, vector<3x16xf32>, vector<3x16xf32>, vector<3x16xf32>, vector<3x16xf32> -> vector<3x96xf32>
    %cst_53 = arith.constant dense<0.000000e+00> : vector<3x32xf32>
    %70 = tpu.matmul %69, %0, %cst_53 {dimension_numbers = #tpu.dot_dimension_numbers<[1], [0], [0], [1], [0, 0, 1, 1], [], []>} : vector<3x96xf32>, vector<96x32xf32>, vector<3x32xf32> -> vector<3x32xf32>
    %71 = vector.extract_strided_slice %56 {offsets = [0, 0], sizes = [3, 16], strides = [1, 1]} : vector<3x32xf32> to vector<3x16xf32>
    %72 = vector.extract_strided_slice %56 {offsets = [0, 16], sizes = [3, 16], strides = [1, 1]} : vector<3x32xf32> to vector<3x16xf32>
    %73 = arith.maximumf %71, %72 : vector<3x16xf32>
    %74 = vector.extract_strided_slice %70 {offsets = [0, 0], sizes = [3, 16], strides = [1, 1]} : vector<3x32xf32> to vector<3x16xf32>
    %75 = vector.extract_strided_slice %70 {offsets = [0, 16], sizes = [3, 16], strides = [1, 1]} : vector<3x32xf32> to vector<3x16xf32>
    %76 = arith.maximumf %74, %75 : vector<3x16xf32>
    %77 = arith.maximumf %73, %76 : vector<3x16xf32>
    %78 = vector.broadcast %2 : vector<1x16xf32> to vector<3x16xf32>
    %79 = arith.addf %77, %78 : vector<3x16xf32>
    %cst_54 = arith.constant 0.000000e+00 : f32
    %80 = vector.broadcast %cst_54 : f32 to vector<3x16xf32>
    %81 = arith.maximumf %79, %80 : vector<3x16xf32>
    %c0_55 = arith.constant 0 : index
    %c4_56 = arith.constant 4 : index
    %c0_57 = arith.constant 0 : index
    %c0_58 = arith.constant 0 : index
    %82 = vector.load %arg1[%c0_55, %c4_56, %c0_57, %c0_58] : memref<2x16x4x16xf32, #tpu.memory_space<vmem>>, vector<1x1x4x16xf32>
    %83 = vector.shape_cast %82 : vector<1x1x4x16xf32> to vector<4x16xf32>
    %84 = vector.extract_strided_slice %83 {offsets = [0, 0], sizes = [3, 16], strides = [1, 1]} : vector<4x16xf32> to vector<3x16xf32>
    %85 = vector.extract_strided_slice %83 {offsets = [1, 0], sizes = [3, 16], strides = [1, 1]} : vector<4x16xf32> to vector<3x16xf32>
    %c0_59 = arith.constant 0 : index
    %c5_60 = arith.constant 5 : index
    %c0_61 = arith.constant 0 : index
    %c0_62 = arith.constant 0 : index
    %86 = vector.load %arg1[%c0_59, %c5_60, %c0_61, %c0_62] : memref<2x16x4x16xf32, #tpu.memory_space<vmem>>, vector<1x1x4x16xf32>
    %87 = vector.shape_cast %86 : vector<1x1x4x16xf32> to vector<4x16xf32>
    %88 = vector.extract_strided_slice %87 {offsets = [0, 0], sizes = [3, 16], strides = [1, 1]} : vector<4x16xf32> to vector<3x16xf32>
    %89 = vector.extract_strided_slice %87 {offsets = [1, 0], sizes = [3, 16], strides = [1, 1]} : vector<4x16xf32> to vector<3x16xf32>
    %c0_63 = arith.constant 0 : index
    %c6 = arith.constant 6 : index
    %c0_64 = arith.constant 0 : index
    %c0_65 = arith.constant 0 : index
    %90 = vector.load %arg1[%c0_63, %c6, %c0_64, %c0_65] : memref<2x16x4x16xf32, #tpu.memory_space<vmem>>, vector<1x1x4x16xf32>
    %91 = vector.shape_cast %90 : vector<1x1x4x16xf32> to vector<4x16xf32>
    %92 = vector.extract_strided_slice %91 {offsets = [0, 0], sizes = [3, 16], strides = [1, 1]} : vector<4x16xf32> to vector<3x16xf32>
    %93 = vector.extract_strided_slice %91 {offsets = [1, 0], sizes = [3, 16], strides = [1, 1]} : vector<4x16xf32> to vector<3x16xf32>
    %94 = tpu.concatenate %84, %85, %88, %89, %92, %93 in 1 : vector<3x16xf32>, vector<3x16xf32>, vector<3x16xf32>, vector<3x16xf32>, vector<3x16xf32>, vector<3x16xf32> -> vector<3x96xf32>
    %cst_66 = arith.constant dense<0.000000e+00> : vector<3x32xf32>
    %95 = tpu.matmul %94, %0, %cst_66 {dimension_numbers = #tpu.dot_dimension_numbers<[1], [0], [0], [1], [0, 0, 1, 1], [], []>} : vector<3x96xf32>, vector<96x32xf32>, vector<3x32xf32> -> vector<3x32xf32>
    %c0_67 = arith.constant 0 : index
    %c5_68 = arith.constant 5 : index
    %c0_69 = arith.constant 0 : index
    %c0_70 = arith.constant 0 : index
    %96 = vector.load %arg1[%c0_67, %c5_68, %c0_69, %c0_70] : memref<2x16x4x16xf32, #tpu.memory_space<vmem>>, vector<1x1x4x16xf32>
    %97 = vector.shape_cast %96 : vector<1x1x4x16xf32> to vector<4x16xf32>
    %98 = vector.extract_strided_slice %97 {offsets = [0, 0], sizes = [3, 16], strides = [1, 1]} : vector<4x16xf32> to vector<3x16xf32>
    %99 = vector.extract_strided_slice %97 {offsets = [1, 0], sizes = [3, 16], strides = [1, 1]} : vector<4x16xf32> to vector<3x16xf32>
    %c0_71 = arith.constant 0 : index
    %c6_72 = arith.constant 6 : index
    %c0_73 = arith.constant 0 : index
    %c0_74 = arith.constant 0 : index
    %100 = vector.load %arg1[%c0_71, %c6_72, %c0_73, %c0_74] : memref<2x16x4x16xf32, #tpu.memory_space<vmem>>, vector<1x1x4x16xf32>
    %101 = vector.shape_cast %100 : vector<1x1x4x16xf32> to vector<4x16xf32>
    %102 = vector.extract_strided_slice %101 {offsets = [0, 0], sizes = [3, 16], strides = [1, 1]} : vector<4x16xf32> to vector<3x16xf32>
    %103 = vector.extract_strided_slice %101 {offsets = [1, 0], sizes = [3, 16], strides = [1, 1]} : vector<4x16xf32> to vector<3x16xf32>
    %c0_75 = arith.constant 0 : index
    %c7 = arith.constant 7 : index
    %c0_76 = arith.constant 0 : index
    %c0_77 = arith.constant 0 : index
    %104 = vector.load %arg1[%c0_75, %c7, %c0_76, %c0_77] : memref<2x16x4x16xf32, #tpu.memory_space<vmem>>, vector<1x1x4x16xf32>
    %105 = vector.shape_cast %104 : vector<1x1x4x16xf32> to vector<4x16xf32>
    %106 = vector.extract_strided_slice %105 {offsets = [0, 0], sizes = [3, 16], strides = [1, 1]} : vector<4x16xf32> to vector<3x16xf32>
    %107 = vector.extract_strided_slice %105 {offsets = [1, 0], sizes = [3, 16], strides = [1, 1]} : vector<4x16xf32> to vector<3x16xf32>
    %108 = tpu.concatenate %98, %99, %102, %103, %106, %107 in 1 : vector<3x16xf32>, vector<3x16xf32>, vector<3x16xf32>, vector<3x16xf32>, vector<3x16xf32>, vector<3x16xf32> -> vector<3x96xf32>
    %cst_78 = arith.constant dense<0.000000e+00> : vector<3x32xf32>
    %109 = tpu.matmul %108, %0, %cst_78 {dimension_numbers = #tpu.dot_dimension_numbers<[1], [0], [0], [1], [0, 0, 1, 1], [], []>} : vector<3x96xf32>, vector<96x32xf32>, vector<3x32xf32> -> vector<3x32xf32>
    %110 = vector.extract_strided_slice %95 {offsets = [0, 0], sizes = [3, 16], strides = [1, 1]} : vector<3x32xf32> to vector<3x16xf32>
    %111 = vector.extract_strided_slice %95 {offsets = [0, 16], sizes = [3, 16], strides = [1, 1]} : vector<3x32xf32> to vector<3x16xf32>
    %112 = arith.maximumf %110, %111 : vector<3x16xf32>
    %113 = vector.extract_strided_slice %109 {offsets = [0, 0], sizes = [3, 16], strides = [1, 1]} : vector<3x32xf32> to vector<3x16xf32>
    %114 = vector.extract_strided_slice %109 {offsets = [0, 16], sizes = [3, 16], strides = [1, 1]} : vector<3x32xf32> to vector<3x16xf32>
    %115 = arith.maximumf %113, %114 : vector<3x16xf32>
    %116 = arith.maximumf %112, %115 : vector<3x16xf32>
    %117 = vector.broadcast %2 : vector<1x16xf32> to vector<3x16xf32>
    %118 = arith.addf %116, %117 : vector<3x16xf32>
    %cst_79 = arith.constant 0.000000e+00 : f32
    %119 = vector.broadcast %cst_79 : f32 to vector<3x16xf32>
    %120 = arith.maximumf %118, %119 : vector<3x16xf32>
    %c0_80 = arith.constant 0 : index
    %c6_81 = arith.constant 6 : index
    %c0_82 = arith.constant 0 : index
    %c0_83 = arith.constant 0 : index
    %121 = vector.load %arg1[%c0_80, %c6_81, %c0_82, %c0_83] : memref<2x16x4x16xf32, #tpu.memory_space<vmem>>, vector<1x1x4x16xf32>
    %122 = vector.shape_cast %121 : vector<1x1x4x16xf32> to vector<4x16xf32>
    %123 = vector.extract_strided_slice %122 {offsets = [0, 0], sizes = [3, 16], strides = [1, 1]} : vector<4x16xf32> to vector<3x16xf32>
    %124 = vector.extract_strided_slice %122 {offsets = [1, 0], sizes = [3, 16], strides = [1, 1]} : vector<4x16xf32> to vector<3x16xf32>
    %c0_84 = arith.constant 0 : index
    %c7_85 = arith.constant 7 : index
    %c0_86 = arith.constant 0 : index
    %c0_87 = arith.constant 0 : index
    %125 = vector.load %arg1[%c0_84, %c7_85, %c0_86, %c0_87] : memref<2x16x4x16xf32, #tpu.memory_space<vmem>>, vector<1x1x4x16xf32>
    %126 = vector.shape_cast %125 : vector<1x1x4x16xf32> to vector<4x16xf32>
    %127 = vector.extract_strided_slice %126 {offsets = [0, 0], sizes = [3, 16], strides = [1, 1]} : vector<4x16xf32> to vector<3x16xf32>
    %128 = vector.extract_strided_slice %126 {offsets = [1, 0], sizes = [3, 16], strides = [1, 1]} : vector<4x16xf32> to vector<3x16xf32>
    %c0_88 = arith.constant 0 : index
    %c8 = arith.constant 8 : index
    %c0_89 = arith.constant 0 : index
    %c0_90 = arith.constant 0 : index
    %129 = vector.load %arg1[%c0_88, %c8, %c0_89, %c0_90] : memref<2x16x4x16xf32, #tpu.memory_space<vmem>>, vector<1x1x4x16xf32>
    %130 = vector.shape_cast %129 : vector<1x1x4x16xf32> to vector<4x16xf32>
    %131 = vector.extract_strided_slice %130 {offsets = [0, 0], sizes = [3, 16], strides = [1, 1]} : vector<4x16xf32> to vector<3x16xf32>
    %132 = vector.extract_strided_slice %130 {offsets = [1, 0], sizes = [3, 16], strides = [1, 1]} : vector<4x16xf32> to vector<3x16xf32>
    %133 = tpu.concatenate %123, %124, %127, %128, %131, %132 in 1 : vector<3x16xf32>, vector<3x16xf32>, vector<3x16xf32>, vector<3x16xf32>, vector<3x16xf32>, vector<3x16xf32> -> vector<3x96xf32>
    %cst_91 = arith.constant dense<0.000000e+00> : vector<3x32xf32>
    %134 = tpu.matmul %133, %0, %cst_91 {dimension_numbers = #tpu.dot_dimension_numbers<[1], [0], [0], [1], [0, 0, 1, 1], [], []>} : vector<3x96xf32>, vector<96x32xf32>, vector<3x32xf32> -> vector<3x32xf32>
    %c0_92 = arith.constant 0 : index
    %c7_93 = arith.constant 7 : index
    %c0_94 = arith.constant 0 : index
    %c0_95 = arith.constant 0 : index
    %135 = vector.load %arg1[%c0_92, %c7_93, %c0_94, %c0_95] : memref<2x16x4x16xf32, #tpu.memory_space<vmem>>, vector<1x1x4x16xf32>
    %136 = vector.shape_cast %135 : vector<1x1x4x16xf32> to vector<4x16xf32>
    %137 = vector.extract_strided_slice %136 {offsets = [0, 0], sizes = [3, 16], strides = [1, 1]} : vector<4x16xf32> to vector<3x16xf32>
    %138 = vector.extract_strided_slice %136 {offsets = [1, 0], sizes = [3, 16], strides = [1, 1]} : vector<4x16xf32> to vector<3x16xf32>
    %c0_96 = arith.constant 0 : index
    %c8_97 = arith.constant 8 : index
    %c0_98 = arith.constant 0 : index
    %c0_99 = arith.constant 0 : index
    %139 = vector.load %arg1[%c0_96, %c8_97, %c0_98, %c0_99] : memref<2x16x4x16xf32, #tpu.memory_space<vmem>>, vector<1x1x4x16xf32>
    %140 = vector.shape_cast %139 : vector<1x1x4x16xf32> to vector<4x16xf32>
    %141 = vector.extract_strided_slice %140 {offsets = [0, 0], sizes = [3, 16], strides = [1, 1]} : vector<4x16xf32> to vector<3x16xf32>
    %142 = vector.extract_strided_slice %140 {offsets = [1, 0], sizes = [3, 16], strides = [1, 1]} : vector<4x16xf32> to vector<3x16xf32>
    %c0_100 = arith.constant 0 : index
    %c9 = arith.constant 9 : index
    %c0_101 = arith.constant 0 : index
    %c0_102 = arith.constant 0 : index
    %143 = vector.load %arg1[%c0_100, %c9, %c0_101, %c0_102] : memref<2x16x4x16xf32, #tpu.memory_space<vmem>>, vector<1x1x4x16xf32>
    %144 = vector.shape_cast %143 : vector<1x1x4x16xf32> to vector<4x16xf32>
    %145 = vector.extract_strided_slice %144 {offsets = [0, 0], sizes = [3, 16], strides = [1, 1]} : vector<4x16xf32> to vector<3x16xf32>
    %146 = vector.extract_strided_slice %144 {offsets = [1, 0], sizes = [3, 16], strides = [1, 1]} : vector<4x16xf32> to vector<3x16xf32>
    %147 = tpu.concatenate %137, %138, %141, %142, %145, %146 in 1 : vector<3x16xf32>, vector<3x16xf32>, vector<3x16xf32>, vector<3x16xf32>, vector<3x16xf32>, vector<3x16xf32> -> vector<3x96xf32>
    %cst_103 = arith.constant dense<0.000000e+00> : vector<3x32xf32>
    %148 = tpu.matmul %147, %0, %cst_103 {dimension_numbers = #tpu.dot_dimension_numbers<[1], [0], [0], [1], [0, 0, 1, 1], [], []>} : vector<3x96xf32>, vector<96x32xf32>, vector<3x32xf32> -> vector<3x32xf32>
    %149 = vector.extract_strided_slice %134 {offsets = [0, 0], sizes = [3, 16], strides = [1, 1]} : vector<3x32xf32> to vector<3x16xf32>
    %150 = vector.extract_strided_slice %134 {offsets = [0, 16], sizes = [3, 16], strides = [1, 1]} : vector<3x32xf32> to vector<3x16xf32>
    %151 = arith.maximumf %149, %150 : vector<3x16xf32>
    %152 = vector.extract_strided_slice %148 {offsets = [0, 0], sizes = [3, 16], strides = [1, 1]} : vector<3x32xf32> to vector<3x16xf32>
    %153 = vector.extract_strided_slice %148 {offsets = [0, 16], sizes = [3, 16], strides = [1, 1]} : vector<3x32xf32> to vector<3x16xf32>
    %154 = arith.maximumf %152, %153 : vector<3x16xf32>
    %155 = arith.maximumf %151, %154 : vector<3x16xf32>
    %156 = vector.broadcast %2 : vector<1x16xf32> to vector<3x16xf32>
    %157 = arith.addf %155, %156 : vector<3x16xf32>
    %cst_104 = arith.constant 0.000000e+00 : f32
    %158 = vector.broadcast %cst_104 : f32 to vector<3x16xf32>
    %159 = arith.maximumf %157, %158 : vector<3x16xf32>
    %c0_105 = arith.constant 0 : index
    %c8_106 = arith.constant 8 : index
    %c0_107 = arith.constant 0 : index
    %c0_108 = arith.constant 0 : index
    %160 = vector.load %arg1[%c0_105, %c8_106, %c0_107, %c0_108] : memref<2x16x4x16xf32, #tpu.memory_space<vmem>>, vector<1x1x4x16xf32>
    %161 = vector.shape_cast %160 : vector<1x1x4x16xf32> to vector<4x16xf32>
    %162 = vector.extract_strided_slice %161 {offsets = [0, 0], sizes = [3, 16], strides = [1, 1]} : vector<4x16xf32> to vector<3x16xf32>
    %163 = vector.extract_strided_slice %161 {offsets = [1, 0], sizes = [3, 16], strides = [1, 1]} : vector<4x16xf32> to vector<3x16xf32>
    %c0_109 = arith.constant 0 : index
    %c9_110 = arith.constant 9 : index
    %c0_111 = arith.constant 0 : index
    %c0_112 = arith.constant 0 : index
    %164 = vector.load %arg1[%c0_109, %c9_110, %c0_111, %c0_112] : memref<2x16x4x16xf32, #tpu.memory_space<vmem>>, vector<1x1x4x16xf32>
    %165 = vector.shape_cast %164 : vector<1x1x4x16xf32> to vector<4x16xf32>
    %166 = vector.extract_strided_slice %165 {offsets = [0, 0], sizes = [3, 16], strides = [1, 1]} : vector<4x16xf32> to vector<3x16xf32>
    %167 = vector.extract_strided_slice %165 {offsets = [1, 0], sizes = [3, 16], strides = [1, 1]} : vector<4x16xf32> to vector<3x16xf32>
    %c0_113 = arith.constant 0 : index
    %c10 = arith.constant 10 : index
    %c0_114 = arith.constant 0 : index
    %c0_115 = arith.constant 0 : index
    %168 = vector.load %arg1[%c0_113, %c10, %c0_114, %c0_115] : memref<2x16x4x16xf32, #tpu.memory_space<vmem>>, vector<1x1x4x16xf32>
    %169 = vector.shape_cast %168 : vector<1x1x4x16xf32> to vector<4x16xf32>
    %170 = vector.extract_strided_slice %169 {offsets = [0, 0], sizes = [3, 16], strides = [1, 1]} : vector<4x16xf32> to vector<3x16xf32>
    %171 = vector.extract_strided_slice %169 {offsets = [1, 0], sizes = [3, 16], strides = [1, 1]} : vector<4x16xf32> to vector<3x16xf32>
    %172 = tpu.concatenate %162, %163, %166, %167, %170, %171 in 1 : vector<3x16xf32>, vector<3x16xf32>, vector<3x16xf32>, vector<3x16xf32>, vector<3x16xf32>, vector<3x16xf32> -> vector<3x96xf32>
    %cst_116 = arith.constant dense<0.000000e+00> : vector<3x32xf32>
    %173 = tpu.matmul %172, %0, %cst_116 {dimension_numbers = #tpu.dot_dimension_numbers<[1], [0], [0], [1], [0, 0, 1, 1], [], []>} : vector<3x96xf32>, vector<96x32xf32>, vector<3x32xf32> -> vector<3x32xf32>
    %c0_117 = arith.constant 0 : index
    %c9_118 = arith.constant 9 : index
    %c0_119 = arith.constant 0 : index
    %c0_120 = arith.constant 0 : index
    %174 = vector.load %arg1[%c0_117, %c9_118, %c0_119, %c0_120] : memref<2x16x4x16xf32, #tpu.memory_space<vmem>>, vector<1x1x4x16xf32>
    %175 = vector.shape_cast %174 : vector<1x1x4x16xf32> to vector<4x16xf32>
    %176 = vector.extract_strided_slice %175 {offsets = [0, 0], sizes = [3, 16], strides = [1, 1]} : vector<4x16xf32> to vector<3x16xf32>
    %177 = vector.extract_strided_slice %175 {offsets = [1, 0], sizes = [3, 16], strides = [1, 1]} : vector<4x16xf32> to vector<3x16xf32>
    %c0_121 = arith.constant 0 : index
    %c10_122 = arith.constant 10 : index
    %c0_123 = arith.constant 0 : index
    %c0_124 = arith.constant 0 : index
    %178 = vector.load %arg1[%c0_121, %c10_122, %c0_123, %c0_124] : memref<2x16x4x16xf32, #tpu.memory_space<vmem>>, vector<1x1x4x16xf32>
    %179 = vector.shape_cast %178 : vector<1x1x4x16xf32> to vector<4x16xf32>
    %180 = vector.extract_strided_slice %179 {offsets = [0, 0], sizes = [3, 16], strides = [1, 1]} : vector<4x16xf32> to vector<3x16xf32>
    %181 = vector.extract_strided_slice %179 {offsets = [1, 0], sizes = [3, 16], strides = [1, 1]} : vector<4x16xf32> to vector<3x16xf32>
    %c0_125 = arith.constant 0 : index
    %c11 = arith.constant 11 : index
    %c0_126 = arith.constant 0 : index
    %c0_127 = arith.constant 0 : index
    %182 = vector.load %arg1[%c0_125, %c11, %c0_126, %c0_127] : memref<2x16x4x16xf32, #tpu.memory_space<vmem>>, vector<1x1x4x16xf32>
    %183 = vector.shape_cast %182 : vector<1x1x4x16xf32> to vector<4x16xf32>
    %184 = vector.extract_strided_slice %183 {offsets = [0, 0], sizes = [3, 16], strides = [1, 1]} : vector<4x16xf32> to vector<3x16xf32>
    %185 = vector.extract_strided_slice %183 {offsets = [1, 0], sizes = [3, 16], strides = [1, 1]} : vector<4x16xf32> to vector<3x16xf32>
    %186 = tpu.concatenate %176, %177, %180, %181, %184, %185 in 1 : vector<3x16xf32>, vector<3x16xf32>, vector<3x16xf32>, vector<3x16xf32>, vector<3x16xf32>, vector<3x16xf32> -> vector<3x96xf32>
    %cst_128 = arith.constant dense<0.000000e+00> : vector<3x32xf32>
    %187 = tpu.matmul %186, %0, %cst_128 {dimension_numbers = #tpu.dot_dimension_numbers<[1], [0], [0], [1], [0, 0, 1, 1], [], []>} : vector<3x96xf32>, vector<96x32xf32>, vector<3x32xf32> -> vector<3x32xf32>
    %188 = vector.extract_strided_slice %173 {offsets = [0, 0], sizes = [3, 16], strides = [1, 1]} : vector<3x32xf32> to vector<3x16xf32>
    %189 = vector.extract_strided_slice %173 {offsets = [0, 16], sizes = [3, 16], strides = [1, 1]} : vector<3x32xf32> to vector<3x16xf32>
    %190 = arith.maximumf %188, %189 : vector<3x16xf32>
    %191 = vector.extract_strided_slice %187 {offsets = [0, 0], sizes = [3, 16], strides = [1, 1]} : vector<3x32xf32> to vector<3x16xf32>
    %192 = vector.extract_strided_slice %187 {offsets = [0, 16], sizes = [3, 16], strides = [1, 1]} : vector<3x32xf32> to vector<3x16xf32>
    %193 = arith.maximumf %191, %192 : vector<3x16xf32>
    %194 = arith.maximumf %190, %193 : vector<3x16xf32>
    %195 = vector.broadcast %2 : vector<1x16xf32> to vector<3x16xf32>
    %196 = arith.addf %194, %195 : vector<3x16xf32>
    %cst_129 = arith.constant 0.000000e+00 : f32
    %197 = vector.broadcast %cst_129 : f32 to vector<3x16xf32>
    %198 = arith.maximumf %196, %197 : vector<3x16xf32>
    %c0_130 = arith.constant 0 : index
    %c10_131 = arith.constant 10 : index
    %c0_132 = arith.constant 0 : index
    %c0_133 = arith.constant 0 : index
    %199 = vector.load %arg1[%c0_130, %c10_131, %c0_132, %c0_133] : memref<2x16x4x16xf32, #tpu.memory_space<vmem>>, vector<1x1x4x16xf32>
    %200 = vector.shape_cast %199 : vector<1x1x4x16xf32> to vector<4x16xf32>
    %201 = vector.extract_strided_slice %200 {offsets = [0, 0], sizes = [3, 16], strides = [1, 1]} : vector<4x16xf32> to vector<3x16xf32>
    %202 = vector.extract_strided_slice %200 {offsets = [1, 0], sizes = [3, 16], strides = [1, 1]} : vector<4x16xf32> to vector<3x16xf32>
    %c0_134 = arith.constant 0 : index
    %c11_135 = arith.constant 11 : index
    %c0_136 = arith.constant 0 : index
    %c0_137 = arith.constant 0 : index
    %203 = vector.load %arg1[%c0_134, %c11_135, %c0_136, %c0_137] : memref<2x16x4x16xf32, #tpu.memory_space<vmem>>, vector<1x1x4x16xf32>
    %204 = vector.shape_cast %203 : vector<1x1x4x16xf32> to vector<4x16xf32>
    %205 = vector.extract_strided_slice %204 {offsets = [0, 0], sizes = [3, 16], strides = [1, 1]} : vector<4x16xf32> to vector<3x16xf32>
    %206 = vector.extract_strided_slice %204 {offsets = [1, 0], sizes = [3, 16], strides = [1, 1]} : vector<4x16xf32> to vector<3x16xf32>
    %c0_138 = arith.constant 0 : index
    %c12 = arith.constant 12 : index
    %c0_139 = arith.constant 0 : index
    %c0_140 = arith.constant 0 : index
    %207 = vector.load %arg1[%c0_138, %c12, %c0_139, %c0_140] : memref<2x16x4x16xf32, #tpu.memory_space<vmem>>, vector<1x1x4x16xf32>
    %208 = vector.shape_cast %207 : vector<1x1x4x16xf32> to vector<4x16xf32>
    %209 = vector.extract_strided_slice %208 {offsets = [0, 0], sizes = [3, 16], strides = [1, 1]} : vector<4x16xf32> to vector<3x16xf32>
    %210 = vector.extract_strided_slice %208 {offsets = [1, 0], sizes = [3, 16], strides = [1, 1]} : vector<4x16xf32> to vector<3x16xf32>
    %211 = tpu.concatenate %201, %202, %205, %206, %209, %210 in 1 : vector<3x16xf32>, vector<3x16xf32>, vector<3x16xf32>, vector<3x16xf32>, vector<3x16xf32>, vector<3x16xf32> -> vector<3x96xf32>
    %cst_141 = arith.constant dense<0.000000e+00> : vector<3x32xf32>
    %212 = tpu.matmul %211, %0, %cst_141 {dimension_numbers = #tpu.dot_dimension_numbers<[1], [0], [0], [1], [0, 0, 1, 1], [], []>} : vector<3x96xf32>, vector<96x32xf32>, vector<3x32xf32> -> vector<3x32xf32>
    %c0_142 = arith.constant 0 : index
    %c11_143 = arith.constant 11 : index
    %c0_144 = arith.constant 0 : index
    %c0_145 = arith.constant 0 : index
    %213 = vector.load %arg1[%c0_142, %c11_143, %c0_144, %c0_145] : memref<2x16x4x16xf32, #tpu.memory_space<vmem>>, vector<1x1x4x16xf32>
    %214 = vector.shape_cast %213 : vector<1x1x4x16xf32> to vector<4x16xf32>
    %215 = vector.extract_strided_slice %214 {offsets = [0, 0], sizes = [3, 16], strides = [1, 1]} : vector<4x16xf32> to vector<3x16xf32>
    %216 = vector.extract_strided_slice %214 {offsets = [1, 0], sizes = [3, 16], strides = [1, 1]} : vector<4x16xf32> to vector<3x16xf32>
    %c0_146 = arith.constant 0 : index
    %c12_147 = arith.constant 12 : index
    %c0_148 = arith.constant 0 : index
    %c0_149 = arith.constant 0 : index
    %217 = vector.load %arg1[%c0_146, %c12_147, %c0_148, %c0_149] : memref<2x16x4x16xf32, #tpu.memory_space<vmem>>, vector<1x1x4x16xf32>
    %218 = vector.shape_cast %217 : vector<1x1x4x16xf32> to vector<4x16xf32>
    %219 = vector.extract_strided_slice %218 {offsets = [0, 0], sizes = [3, 16], strides = [1, 1]} : vector<4x16xf32> to vector<3x16xf32>
    %220 = vector.extract_strided_slice %218 {offsets = [1, 0], sizes = [3, 16], strides = [1, 1]} : vector<4x16xf32> to vector<3x16xf32>
    %c0_150 = arith.constant 0 : index
    %c13 = arith.constant 13 : index
    %c0_151 = arith.constant 0 : index
    %c0_152 = arith.constant 0 : index
    %221 = vector.load %arg1[%c0_150, %c13, %c0_151, %c0_152] : memref<2x16x4x16xf32, #tpu.memory_space<vmem>>, vector<1x1x4x16xf32>
    %222 = vector.shape_cast %221 : vector<1x1x4x16xf32> to vector<4x16xf32>
    %223 = vector.extract_strided_slice %222 {offsets = [0, 0], sizes = [3, 16], strides = [1, 1]} : vector<4x16xf32> to vector<3x16xf32>
    %224 = vector.extract_strided_slice %222 {offsets = [1, 0], sizes = [3, 16], strides = [1, 1]} : vector<4x16xf32> to vector<3x16xf32>
    %225 = tpu.concatenate %215, %216, %219, %220, %223, %224 in 1 : vector<3x16xf32>, vector<3x16xf32>, vector<3x16xf32>, vector<3x16xf32>, vector<3x16xf32>, vector<3x16xf32> -> vector<3x96xf32>
    %cst_153 = arith.constant dense<0.000000e+00> : vector<3x32xf32>
    %226 = tpu.matmul %225, %0, %cst_153 {dimension_numbers = #tpu.dot_dimension_numbers<[1], [0], [0], [1], [0, 0, 1, 1], [], []>} : vector<3x96xf32>, vector<96x32xf32>, vector<3x32xf32> -> vector<3x32xf32>
    %227 = vector.extract_strided_slice %212 {offsets = [0, 0], sizes = [3, 16], strides = [1, 1]} : vector<3x32xf32> to vector<3x16xf32>
    %228 = vector.extract_strided_slice %212 {offsets = [0, 16], sizes = [3, 16], strides = [1, 1]} : vector<3x32xf32> to vector<3x16xf32>
    %229 = arith.maximumf %227, %228 : vector<3x16xf32>
    %230 = vector.extract_strided_slice %226 {offsets = [0, 0], sizes = [3, 16], strides = [1, 1]} : vector<3x32xf32> to vector<3x16xf32>
    %231 = vector.extract_strided_slice %226 {offsets = [0, 16], sizes = [3, 16], strides = [1, 1]} : vector<3x32xf32> to vector<3x16xf32>
    %232 = arith.maximumf %230, %231 : vector<3x16xf32>
    %233 = arith.maximumf %229, %232 : vector<3x16xf32>
    %234 = vector.broadcast %2 : vector<1x16xf32> to vector<3x16xf32>
    %235 = arith.addf %233, %234 : vector<3x16xf32>
    %cst_154 = arith.constant 0.000000e+00 : f32
    %236 = vector.broadcast %cst_154 : f32 to vector<3x16xf32>
    %237 = arith.maximumf %235, %236 : vector<3x16xf32>
    %238 = vector.extract_strided_slice %42 {offsets = [0, 0], sizes = [2, 16], strides = [1, 1]} : vector<3x16xf32> to vector<2x16xf32>
    %239 = vector.extract_strided_slice %42 {offsets = [1, 0], sizes = [2, 16], strides = [1, 1]} : vector<3x16xf32> to vector<2x16xf32>
    %240 = vector.extract_strided_slice %81 {offsets = [0, 0], sizes = [2, 16], strides = [1, 1]} : vector<3x16xf32> to vector<2x16xf32>
    %241 = vector.extract_strided_slice %81 {offsets = [1, 0], sizes = [2, 16], strides = [1, 1]} : vector<3x16xf32> to vector<2x16xf32>
    %242 = vector.extract_strided_slice %120 {offsets = [0, 0], sizes = [2, 16], strides = [1, 1]} : vector<3x16xf32> to vector<2x16xf32>
    %243 = vector.extract_strided_slice %120 {offsets = [1, 0], sizes = [2, 16], strides = [1, 1]} : vector<3x16xf32> to vector<2x16xf32>
    %244 = tpu.concatenate %238, %239, %240, %241, %242, %243 in 1 : vector<2x16xf32>, vector<2x16xf32>, vector<2x16xf32>, vector<2x16xf32>, vector<2x16xf32>, vector<2x16xf32> -> vector<2x96xf32>
    %cst_155 = arith.constant dense<0.000000e+00> : vector<2x16xf32>
    %245 = tpu.matmul %244, %1, %cst_155 {dimension_numbers = #tpu.dot_dimension_numbers<[1], [0], [0], [1], [0, 0, 1, 1], [], []>} : vector<2x96xf32>, vector<96x16xf32>, vector<2x16xf32> -> vector<2x16xf32>
    %246 = vector.extract_strided_slice %81 {offsets = [0, 0], sizes = [2, 16], strides = [1, 1]} : vector<3x16xf32> to vector<2x16xf32>
    %247 = vector.extract_strided_slice %81 {offsets = [1, 0], sizes = [2, 16], strides = [1, 1]} : vector<3x16xf32> to vector<2x16xf32>
    %248 = vector.extract_strided_slice %120 {offsets = [0, 0], sizes = [2, 16], strides = [1, 1]} : vector<3x16xf32> to vector<2x16xf32>
    %249 = vector.extract_strided_slice %120 {offsets = [1, 0], sizes = [2, 16], strides = [1, 1]} : vector<3x16xf32> to vector<2x16xf32>
    %250 = vector.extract_strided_slice %159 {offsets = [0, 0], sizes = [2, 16], strides = [1, 1]} : vector<3x16xf32> to vector<2x16xf32>
    %251 = vector.extract_strided_slice %159 {offsets = [1, 0], sizes = [2, 16], strides = [1, 1]} : vector<3x16xf32> to vector<2x16xf32>
    %252 = tpu.concatenate %246, %247, %248, %249, %250, %251 in 1 : vector<2x16xf32>, vector<2x16xf32>, vector<2x16xf32>, vector<2x16xf32>, vector<2x16xf32>, vector<2x16xf32> -> vector<2x96xf32>
    %cst_156 = arith.constant dense<0.000000e+00> : vector<2x16xf32>
    %253 = tpu.matmul %252, %1, %cst_156 {dimension_numbers = #tpu.dot_dimension_numbers<[1], [0], [0], [1], [0, 0, 1, 1], [], []>} : vector<2x96xf32>, vector<96x16xf32>, vector<2x16xf32> -> vector<2x16xf32>
    %254 = vector.extract_strided_slice %245 {offsets = [0, 0], sizes = [2, 8], strides = [1, 1]} : vector<2x16xf32> to vector<2x8xf32>
    %255 = vector.extract_strided_slice %245 {offsets = [0, 8], sizes = [2, 8], strides = [1, 1]} : vector<2x16xf32> to vector<2x8xf32>
    %256 = arith.maximumf %254, %255 : vector<2x8xf32>
    %257 = vector.extract_strided_slice %253 {offsets = [0, 0], sizes = [2, 8], strides = [1, 1]} : vector<2x16xf32> to vector<2x8xf32>
    %258 = vector.extract_strided_slice %253 {offsets = [0, 8], sizes = [2, 8], strides = [1, 1]} : vector<2x16xf32> to vector<2x8xf32>
    %259 = arith.maximumf %257, %258 : vector<2x8xf32>
    %260 = arith.maximumf %256, %259 : vector<2x8xf32>
    %261 = vector.broadcast %3 : vector<1x8xf32> to vector<2x8xf32>
    %262 = arith.addf %260, %261 : vector<2x8xf32>
    %cst_157 = arith.constant 0.000000e+00 : f32
    %263 = vector.broadcast %cst_157 : f32 to vector<2x8xf32>
    %264 = arith.maximumf %262, %263 : vector<2x8xf32>
    %265 = vector.extract_strided_slice %120 {offsets = [0, 0], sizes = [2, 16], strides = [1, 1]} : vector<3x16xf32> to vector<2x16xf32>
    %266 = vector.extract_strided_slice %120 {offsets = [1, 0], sizes = [2, 16], strides = [1, 1]} : vector<3x16xf32> to vector<2x16xf32>
    %267 = vector.extract_strided_slice %159 {offsets = [0, 0], sizes = [2, 16], strides = [1, 1]} : vector<3x16xf32> to vector<2x16xf32>
    %268 = vector.extract_strided_slice %159 {offsets = [1, 0], sizes = [2, 16], strides = [1, 1]} : vector<3x16xf32> to vector<2x16xf32>
    %269 = vector.extract_strided_slice %198 {offsets = [0, 0], sizes = [2, 16], strides = [1, 1]} : vector<3x16xf32> to vector<2x16xf32>
    %270 = vector.extract_strided_slice %198 {offsets = [1, 0], sizes = [2, 16], strides = [1, 1]} : vector<3x16xf32> to vector<2x16xf32>
    %271 = tpu.concatenate %265, %266, %267, %268, %269, %270 in 1 : vector<2x16xf32>, vector<2x16xf32>, vector<2x16xf32>, vector<2x16xf32>, vector<2x16xf32>, vector<2x16xf32> -> vector<2x96xf32>
    %cst_158 = arith.constant dense<0.000000e+00> : vector<2x16xf32>
    %272 = tpu.matmul %271, %1, %cst_158 {dimension_numbers = #tpu.dot_dimension_numbers<[1], [0], [0], [1], [0, 0, 1, 1], [], []>} : vector<2x96xf32>, vector<96x16xf32>, vector<2x16xf32> -> vector<2x16xf32>
    %273 = vector.extract_strided_slice %159 {offsets = [0, 0], sizes = [2, 16], strides = [1, 1]} : vector<3x16xf32> to vector<2x16xf32>
    %274 = vector.extract_strided_slice %159 {offsets = [1, 0], sizes = [2, 16], strides = [1, 1]} : vector<3x16xf32> to vector<2x16xf32>
    %275 = vector.extract_strided_slice %198 {offsets = [0, 0], sizes = [2, 16], strides = [1, 1]} : vector<3x16xf32> to vector<2x16xf32>
    %276 = vector.extract_strided_slice %198 {offsets = [1, 0], sizes = [2, 16], strides = [1, 1]} : vector<3x16xf32> to vector<2x16xf32>
    %277 = vector.extract_strided_slice %237 {offsets = [0, 0], sizes = [2, 16], strides = [1, 1]} : vector<3x16xf32> to vector<2x16xf32>
    %278 = vector.extract_strided_slice %237 {offsets = [1, 0], sizes = [2, 16], strides = [1, 1]} : vector<3x16xf32> to vector<2x16xf32>
    %279 = tpu.concatenate %273, %274, %275, %276, %277, %278 in 1 : vector<2x16xf32>, vector<2x16xf32>, vector<2x16xf32>, vector<2x16xf32>, vector<2x16xf32>, vector<2x16xf32> -> vector<2x96xf32>
    %cst_159 = arith.constant dense<0.000000e+00> : vector<2x16xf32>
    %280 = tpu.matmul %279, %1, %cst_159 {dimension_numbers = #tpu.dot_dimension_numbers<[1], [0], [0], [1], [0, 0, 1, 1], [], []>} : vector<2x96xf32>, vector<96x16xf32>, vector<2x16xf32> -> vector<2x16xf32>
    %281 = vector.extract_strided_slice %272 {offsets = [0, 0], sizes = [2, 8], strides = [1, 1]} : vector<2x16xf32> to vector<2x8xf32>
    %282 = vector.extract_strided_slice %272 {offsets = [0, 8], sizes = [2, 8], strides = [1, 1]} : vector<2x16xf32> to vector<2x8xf32>
    %283 = arith.maximumf %281, %282 : vector<2x8xf32>
    %284 = vector.extract_strided_slice %280 {offsets = [0, 0], sizes = [2, 8], strides = [1, 1]} : vector<2x16xf32> to vector<2x8xf32>
    %285 = vector.extract_strided_slice %280 {offsets = [0, 8], sizes = [2, 8], strides = [1, 1]} : vector<2x16xf32> to vector<2x8xf32>
    %286 = arith.maximumf %284, %285 : vector<2x8xf32>
    %287 = arith.maximumf %283, %286 : vector<2x8xf32>
    %288 = vector.broadcast %3 : vector<1x8xf32> to vector<2x8xf32>
    %289 = arith.addf %287, %288 : vector<2x8xf32>
    %cst_160 = arith.constant 0.000000e+00 : f32
    %290 = vector.broadcast %cst_160 : f32 to vector<2x8xf32>
    %291 = arith.maximumf %289, %290 : vector<2x8xf32>
    %292 = vector.shape_cast %264 : vector<2x8xf32> to vector<1x2x8xf32>
    %293 = vector.shape_cast %291 : vector<2x8xf32> to vector<1x2x8xf32>
    %294 = tpu.concatenate %292, %293 in 0 : vector<1x2x8xf32>, vector<1x2x8xf32> -> vector<2x2x8xf32>
    %c1_161 = arith.constant 1 : index
    %c0_162 = arith.constant 0 : index
    %c0_163 = arith.constant 0 : index
    %c0_164 = arith.constant 0 : index
    %295 = vector.load %arg1[%c1_161, %c0_162, %c0_163, %c0_164] : memref<2x16x4x16xf32, #tpu.memory_space<vmem>>, vector<1x1x4x16xf32>
    %296 = vector.shape_cast %295 : vector<1x1x4x16xf32> to vector<4x16xf32>
    %297 = vector.extract_strided_slice %296 {offsets = [0, 0], sizes = [3, 16], strides = [1, 1]} : vector<4x16xf32> to vector<3x16xf32>
    %298 = vector.extract_strided_slice %296 {offsets = [1, 0], sizes = [3, 16], strides = [1, 1]} : vector<4x16xf32> to vector<3x16xf32>
    %c1_165 = arith.constant 1 : index
    %c1_166 = arith.constant 1 : index
    %c0_167 = arith.constant 0 : index
    %c0_168 = arith.constant 0 : index
    %299 = vector.load %arg1[%c1_165, %c1_166, %c0_167, %c0_168] : memref<2x16x4x16xf32, #tpu.memory_space<vmem>>, vector<1x1x4x16xf32>
    %300 = vector.shape_cast %299 : vector<1x1x4x16xf32> to vector<4x16xf32>
    %301 = vector.extract_strided_slice %300 {offsets = [0, 0], sizes = [3, 16], strides = [1, 1]} : vector<4x16xf32> to vector<3x16xf32>
    %302 = vector.extract_strided_slice %300 {offsets = [1, 0], sizes = [3, 16], strides = [1, 1]} : vector<4x16xf32> to vector<3x16xf32>
    %c1_169 = arith.constant 1 : index
    %c2_170 = arith.constant 2 : index
    %c0_171 = arith.constant 0 : index
    %c0_172 = arith.constant 0 : index
    %303 = vector.load %arg1[%c1_169, %c2_170, %c0_171, %c0_172] : memref<2x16x4x16xf32, #tpu.memory_space<vmem>>, vector<1x1x4x16xf32>
    %304 = vector.shape_cast %303 : vector<1x1x4x16xf32> to vector<4x16xf32>
    %305 = vector.extract_strided_slice %304 {offsets = [0, 0], sizes = [3, 16], strides = [1, 1]} : vector<4x16xf32> to vector<3x16xf32>
    %306 = vector.extract_strided_slice %304 {offsets = [1, 0], sizes = [3, 16], strides = [1, 1]} : vector<4x16xf32> to vector<3x16xf32>
    %307 = tpu.concatenate %297, %298, %301, %302, %305, %306 in 1 : vector<3x16xf32>, vector<3x16xf32>, vector<3x16xf32>, vector<3x16xf32>, vector<3x16xf32>, vector<3x16xf32> -> vector<3x96xf32>
    %cst_173 = arith.constant dense<0.000000e+00> : vector<3x32xf32>
    %308 = tpu.matmul %307, %0, %cst_173 {dimension_numbers = #tpu.dot_dimension_numbers<[1], [0], [0], [1], [0, 0, 1, 1], [], []>} : vector<3x96xf32>, vector<96x32xf32>, vector<3x32xf32> -> vector<3x32xf32>
    %c1_174 = arith.constant 1 : index
    %c1_175 = arith.constant 1 : index
    %c0_176 = arith.constant 0 : index
    %c0_177 = arith.constant 0 : index
    %309 = vector.load %arg1[%c1_174, %c1_175, %c0_176, %c0_177] : memref<2x16x4x16xf32, #tpu.memory_space<vmem>>, vector<1x1x4x16xf32>
    %310 = vector.shape_cast %309 : vector<1x1x4x16xf32> to vector<4x16xf32>
    %311 = vector.extract_strided_slice %310 {offsets = [0, 0], sizes = [3, 16], strides = [1, 1]} : vector<4x16xf32> to vector<3x16xf32>
    %312 = vector.extract_strided_slice %310 {offsets = [1, 0], sizes = [3, 16], strides = [1, 1]} : vector<4x16xf32> to vector<3x16xf32>
    %c1_178 = arith.constant 1 : index
    %c2_179 = arith.constant 2 : index
    %c0_180 = arith.constant 0 : index
    %c0_181 = arith.constant 0 : index
    %313 = vector.load %arg1[%c1_178, %c2_179, %c0_180, %c0_181] : memref<2x16x4x16xf32, #tpu.memory_space<vmem>>, vector<1x1x4x16xf32>
    %314 = vector.shape_cast %313 : vector<1x1x4x16xf32> to vector<4x16xf32>
    %315 = vector.extract_strided_slice %314 {offsets = [0, 0], sizes = [3, 16], strides = [1, 1]} : vector<4x16xf32> to vector<3x16xf32>
    %316 = vector.extract_strided_slice %314 {offsets = [1, 0], sizes = [3, 16], strides = [1, 1]} : vector<4x16xf32> to vector<3x16xf32>
    %c1_182 = arith.constant 1 : index
    %c3_183 = arith.constant 3 : index
    %c0_184 = arith.constant 0 : index
    %c0_185 = arith.constant 0 : index
    %317 = vector.load %arg1[%c1_182, %c3_183, %c0_184, %c0_185] : memref<2x16x4x16xf32, #tpu.memory_space<vmem>>, vector<1x1x4x16xf32>
    %318 = vector.shape_cast %317 : vector<1x1x4x16xf32> to vector<4x16xf32>
    %319 = vector.extract_strided_slice %318 {offsets = [0, 0], sizes = [3, 16], strides = [1, 1]} : vector<4x16xf32> to vector<3x16xf32>
    %320 = vector.extract_strided_slice %318 {offsets = [1, 0], sizes = [3, 16], strides = [1, 1]} : vector<4x16xf32> to vector<3x16xf32>
    %321 = tpu.concatenate %311, %312, %315, %316, %319, %320 in 1 : vector<3x16xf32>, vector<3x16xf32>, vector<3x16xf32>, vector<3x16xf32>, vector<3x16xf32>, vector<3x16xf32> -> vector<3x96xf32>
    %cst_186 = arith.constant dense<0.000000e+00> : vector<3x32xf32>
    %322 = tpu.matmul %321, %0, %cst_186 {dimension_numbers = #tpu.dot_dimension_numbers<[1], [0], [0], [1], [0, 0, 1, 1], [], []>} : vector<3x96xf32>, vector<96x32xf32>, vector<3x32xf32> -> vector<3x32xf32>
    %323 = vector.extract_strided_slice %308 {offsets = [0, 0], sizes = [3, 16], strides = [1, 1]} : vector<3x32xf32> to vector<3x16xf32>
    %324 = vector.extract_strided_slice %308 {offsets = [0, 16], sizes = [3, 16], strides = [1, 1]} : vector<3x32xf32> to vector<3x16xf32>
    %325 = arith.maximumf %323, %324 : vector<3x16xf32>
    %326 = vector.extract_strided_slice %322 {offsets = [0, 0], sizes = [3, 16], strides = [1, 1]} : vector<3x32xf32> to vector<3x16xf32>
    %327 = vector.extract_strided_slice %322 {offsets = [0, 16], sizes = [3, 16], strides = [1, 1]} : vector<3x32xf32> to vector<3x16xf32>
    %328 = arith.maximumf %326, %327 : vector<3x16xf32>
    %329 = arith.maximumf %325, %328 : vector<3x16xf32>
    %330 = vector.broadcast %2 : vector<1x16xf32> to vector<3x16xf32>
    %331 = arith.addf %329, %330 : vector<3x16xf32>
    %cst_187 = arith.constant 0.000000e+00 : f32
    %332 = vector.broadcast %cst_187 : f32 to vector<3x16xf32>
    %333 = arith.maximumf %331, %332 : vector<3x16xf32>
    %c1_188 = arith.constant 1 : index
    %c2_189 = arith.constant 2 : index
    %c0_190 = arith.constant 0 : index
    %c0_191 = arith.constant 0 : index
    %334 = vector.load %arg1[%c1_188, %c2_189, %c0_190, %c0_191] : memref<2x16x4x16xf32, #tpu.memory_space<vmem>>, vector<1x1x4x16xf32>
    %335 = vector.shape_cast %334 : vector<1x1x4x16xf32> to vector<4x16xf32>
    %336 = vector.extract_strided_slice %335 {offsets = [0, 0], sizes = [3, 16], strides = [1, 1]} : vector<4x16xf32> to vector<3x16xf32>
    %337 = vector.extract_strided_slice %335 {offsets = [1, 0], sizes = [3, 16], strides = [1, 1]} : vector<4x16xf32> to vector<3x16xf32>
    %c1_192 = arith.constant 1 : index
    %c3_193 = arith.constant 3 : index
    %c0_194 = arith.constant 0 : index
    %c0_195 = arith.constant 0 : index
    %338 = vector.load %arg1[%c1_192, %c3_193, %c0_194, %c0_195] : memref<2x16x4x16xf32, #tpu.memory_space<vmem>>, vector<1x1x4x16xf32>
    %339 = vector.shape_cast %338 : vector<1x1x4x16xf32> to vector<4x16xf32>
    %340 = vector.extract_strided_slice %339 {offsets = [0, 0], sizes = [3, 16], strides = [1, 1]} : vector<4x16xf32> to vector<3x16xf32>
    %341 = vector.extract_strided_slice %339 {offsets = [1, 0], sizes = [3, 16], strides = [1, 1]} : vector<4x16xf32> to vector<3x16xf32>
    %c1_196 = arith.constant 1 : index
    %c4_197 = arith.constant 4 : index
    %c0_198 = arith.constant 0 : index
    %c0_199 = arith.constant 0 : index
    %342 = vector.load %arg1[%c1_196, %c4_197, %c0_198, %c0_199] : memref<2x16x4x16xf32, #tpu.memory_space<vmem>>, vector<1x1x4x16xf32>
    %343 = vector.shape_cast %342 : vector<1x1x4x16xf32> to vector<4x16xf32>
    %344 = vector.extract_strided_slice %343 {offsets = [0, 0], sizes = [3, 16], strides = [1, 1]} : vector<4x16xf32> to vector<3x16xf32>
    %345 = vector.extract_strided_slice %343 {offsets = [1, 0], sizes = [3, 16], strides = [1, 1]} : vector<4x16xf32> to vector<3x16xf32>
    %346 = tpu.concatenate %336, %337, %340, %341, %344, %345 in 1 : vector<3x16xf32>, vector<3x16xf32>, vector<3x16xf32>, vector<3x16xf32>, vector<3x16xf32>, vector<3x16xf32> -> vector<3x96xf32>
    %cst_200 = arith.constant dense<0.000000e+00> : vector<3x32xf32>
    %347 = tpu.matmul %346, %0, %cst_200 {dimension_numbers = #tpu.dot_dimension_numbers<[1], [0], [0], [1], [0, 0, 1, 1], [], []>} : vector<3x96xf32>, vector<96x32xf32>, vector<3x32xf32> -> vector<3x32xf32>
    %c1_201 = arith.constant 1 : index
    %c3_202 = arith.constant 3 : index
    %c0_203 = arith.constant 0 : index
    %c0_204 = arith.constant 0 : index
    %348 = vector.load %arg1[%c1_201, %c3_202, %c0_203, %c0_204] : memref<2x16x4x16xf32, #tpu.memory_space<vmem>>, vector<1x1x4x16xf32>
    %349 = vector.shape_cast %348 : vector<1x1x4x16xf32> to vector<4x16xf32>
    %350 = vector.extract_strided_slice %349 {offsets = [0, 0], sizes = [3, 16], strides = [1, 1]} : vector<4x16xf32> to vector<3x16xf32>
    %351 = vector.extract_strided_slice %349 {offsets = [1, 0], sizes = [3, 16], strides = [1, 1]} : vector<4x16xf32> to vector<3x16xf32>
    %c1_205 = arith.constant 1 : index
    %c4_206 = arith.constant 4 : index
    %c0_207 = arith.constant 0 : index
    %c0_208 = arith.constant 0 : index
    %352 = vector.load %arg1[%c1_205, %c4_206, %c0_207, %c0_208] : memref<2x16x4x16xf32, #tpu.memory_space<vmem>>, vector<1x1x4x16xf32>
    %353 = vector.shape_cast %352 : vector<1x1x4x16xf32> to vector<4x16xf32>
    %354 = vector.extract_strided_slice %353 {offsets = [0, 0], sizes = [3, 16], strides = [1, 1]} : vector<4x16xf32> to vector<3x16xf32>
    %355 = vector.extract_strided_slice %353 {offsets = [1, 0], sizes = [3, 16], strides = [1, 1]} : vector<4x16xf32> to vector<3x16xf32>
    %c1_209 = arith.constant 1 : index
    %c5_210 = arith.constant 5 : index
    %c0_211 = arith.constant 0 : index
    %c0_212 = arith.constant 0 : index
    %356 = vector.load %arg1[%c1_209, %c5_210, %c0_211, %c0_212] : memref<2x16x4x16xf32, #tpu.memory_space<vmem>>, vector<1x1x4x16xf32>
    %357 = vector.shape_cast %356 : vector<1x1x4x16xf32> to vector<4x16xf32>
    %358 = vector.extract_strided_slice %357 {offsets = [0, 0], sizes = [3, 16], strides = [1, 1]} : vector<4x16xf32> to vector<3x16xf32>
    %359 = vector.extract_strided_slice %357 {offsets = [1, 0], sizes = [3, 16], strides = [1, 1]} : vector<4x16xf32> to vector<3x16xf32>
    %360 = tpu.concatenate %350, %351, %354, %355, %358, %359 in 1 : vector<3x16xf32>, vector<3x16xf32>, vector<3x16xf32>, vector<3x16xf32>, vector<3x16xf32>, vector<3x16xf32> -> vector<3x96xf32>
    %cst_213 = arith.constant dense<0.000000e+00> : vector<3x32xf32>
    %361 = tpu.matmul %360, %0, %cst_213 {dimension_numbers = #tpu.dot_dimension_numbers<[1], [0], [0], [1], [0, 0, 1, 1], [], []>} : vector<3x96xf32>, vector<96x32xf32>, vector<3x32xf32> -> vector<3x32xf32>
    %362 = vector.extract_strided_slice %347 {offsets = [0, 0], sizes = [3, 16], strides = [1, 1]} : vector<3x32xf32> to vector<3x16xf32>
    %363 = vector.extract_strided_slice %347 {offsets = [0, 16], sizes = [3, 16], strides = [1, 1]} : vector<3x32xf32> to vector<3x16xf32>
    %364 = arith.maximumf %362, %363 : vector<3x16xf32>
    %365 = vector.extract_strided_slice %361 {offsets = [0, 0], sizes = [3, 16], strides = [1, 1]} : vector<3x32xf32> to vector<3x16xf32>
    %366 = vector.extract_strided_slice %361 {offsets = [0, 16], sizes = [3, 16], strides = [1, 1]} : vector<3x32xf32> to vector<3x16xf32>
    %367 = arith.maximumf %365, %366 : vector<3x16xf32>
    %368 = arith.maximumf %364, %367 : vector<3x16xf32>
    %369 = vector.broadcast %2 : vector<1x16xf32> to vector<3x16xf32>
    %370 = arith.addf %368, %369 : vector<3x16xf32>
    %cst_214 = arith.constant 0.000000e+00 : f32
    %371 = vector.broadcast %cst_214 : f32 to vector<3x16xf32>
    %372 = arith.maximumf %370, %371 : vector<3x16xf32>
    %c1_215 = arith.constant 1 : index
    %c4_216 = arith.constant 4 : index
    %c0_217 = arith.constant 0 : index
    %c0_218 = arith.constant 0 : index
    %373 = vector.load %arg1[%c1_215, %c4_216, %c0_217, %c0_218] : memref<2x16x4x16xf32, #tpu.memory_space<vmem>>, vector<1x1x4x16xf32>
    %374 = vector.shape_cast %373 : vector<1x1x4x16xf32> to vector<4x16xf32>
    %375 = vector.extract_strided_slice %374 {offsets = [0, 0], sizes = [3, 16], strides = [1, 1]} : vector<4x16xf32> to vector<3x16xf32>
    %376 = vector.extract_strided_slice %374 {offsets = [1, 0], sizes = [3, 16], strides = [1, 1]} : vector<4x16xf32> to vector<3x16xf32>
    %c1_219 = arith.constant 1 : index
    %c5_220 = arith.constant 5 : index
    %c0_221 = arith.constant 0 : index
    %c0_222 = arith.constant 0 : index
    %377 = vector.load %arg1[%c1_219, %c5_220, %c0_221, %c0_222] : memref<2x16x4x16xf32, #tpu.memory_space<vmem>>, vector<1x1x4x16xf32>
    %378 = vector.shape_cast %377 : vector<1x1x4x16xf32> to vector<4x16xf32>
    %379 = vector.extract_strided_slice %378 {offsets = [0, 0], sizes = [3, 16], strides = [1, 1]} : vector<4x16xf32> to vector<3x16xf32>
    %380 = vector.extract_strided_slice %378 {offsets = [1, 0], sizes = [3, 16], strides = [1, 1]} : vector<4x16xf32> to vector<3x16xf32>
    %c1_223 = arith.constant 1 : index
    %c6_224 = arith.constant 6 : index
    %c0_225 = arith.constant 0 : index
    %c0_226 = arith.constant 0 : index
    %381 = vector.load %arg1[%c1_223, %c6_224, %c0_225, %c0_226] : memref<2x16x4x16xf32, #tpu.memory_space<vmem>>, vector<1x1x4x16xf32>
    %382 = vector.shape_cast %381 : vector<1x1x4x16xf32> to vector<4x16xf32>
    %383 = vector.extract_strided_slice %382 {offsets = [0, 0], sizes = [3, 16], strides = [1, 1]} : vector<4x16xf32> to vector<3x16xf32>
    %384 = vector.extract_strided_slice %382 {offsets = [1, 0], sizes = [3, 16], strides = [1, 1]} : vector<4x16xf32> to vector<3x16xf32>
    %385 = tpu.concatenate %375, %376, %379, %380, %383, %384 in 1 : vector<3x16xf32>, vector<3x16xf32>, vector<3x16xf32>, vector<3x16xf32>, vector<3x16xf32>, vector<3x16xf32> -> vector<3x96xf32>
    %cst_227 = arith.constant dense<0.000000e+00> : vector<3x32xf32>
    %386 = tpu.matmul %385, %0, %cst_227 {dimension_numbers = #tpu.dot_dimension_numbers<[1], [0], [0], [1], [0, 0, 1, 1], [], []>} : vector<3x96xf32>, vector<96x32xf32>, vector<3x32xf32> -> vector<3x32xf32>
    %c1_228 = arith.constant 1 : index
    %c5_229 = arith.constant 5 : index
    %c0_230 = arith.constant 0 : index
    %c0_231 = arith.constant 0 : index
    %387 = vector.load %arg1[%c1_228, %c5_229, %c0_230, %c0_231] : memref<2x16x4x16xf32, #tpu.memory_space<vmem>>, vector<1x1x4x16xf32>
    %388 = vector.shape_cast %387 : vector<1x1x4x16xf32> to vector<4x16xf32>
    %389 = vector.extract_strided_slice %388 {offsets = [0, 0], sizes = [3, 16], strides = [1, 1]} : vector<4x16xf32> to vector<3x16xf32>
    %390 = vector.extract_strided_slice %388 {offsets = [1, 0], sizes = [3, 16], strides = [1, 1]} : vector<4x16xf32> to vector<3x16xf32>
    %c1_232 = arith.constant 1 : index
    %c6_233 = arith.constant 6 : index
    %c0_234 = arith.constant 0 : index
    %c0_235 = arith.constant 0 : index
    %391 = vector.load %arg1[%c1_232, %c6_233, %c0_234, %c0_235] : memref<2x16x4x16xf32, #tpu.memory_space<vmem>>, vector<1x1x4x16xf32>
    %392 = vector.shape_cast %391 : vector<1x1x4x16xf32> to vector<4x16xf32>
    %393 = vector.extract_strided_slice %392 {offsets = [0, 0], sizes = [3, 16], strides = [1, 1]} : vector<4x16xf32> to vector<3x16xf32>
    %394 = vector.extract_strided_slice %392 {offsets = [1, 0], sizes = [3, 16], strides = [1, 1]} : vector<4x16xf32> to vector<3x16xf32>
    %c1_236 = arith.constant 1 : index
    %c7_237 = arith.constant 7 : index
    %c0_238 = arith.constant 0 : index
    %c0_239 = arith.constant 0 : index
    %395 = vector.load %arg1[%c1_236, %c7_237, %c0_238, %c0_239] : memref<2x16x4x16xf32, #tpu.memory_space<vmem>>, vector<1x1x4x16xf32>
    %396 = vector.shape_cast %395 : vector<1x1x4x16xf32> to vector<4x16xf32>
    %397 = vector.extract_strided_slice %396 {offsets = [0, 0], sizes = [3, 16], strides = [1, 1]} : vector<4x16xf32> to vector<3x16xf32>
    %398 = vector.extract_strided_slice %396 {offsets = [1, 0], sizes = [3, 16], strides = [1, 1]} : vector<4x16xf32> to vector<3x16xf32>
    %399 = tpu.concatenate %389, %390, %393, %394, %397, %398 in 1 : vector<3x16xf32>, vector<3x16xf32>, vector<3x16xf32>, vector<3x16xf32>, vector<3x16xf32>, vector<3x16xf32> -> vector<3x96xf32>
    %cst_240 = arith.constant dense<0.000000e+00> : vector<3x32xf32>
    %400 = tpu.matmul %399, %0, %cst_240 {dimension_numbers = #tpu.dot_dimension_numbers<[1], [0], [0], [1], [0, 0, 1, 1], [], []>} : vector<3x96xf32>, vector<96x32xf32>, vector<3x32xf32> -> vector<3x32xf32>
    %401 = vector.extract_strided_slice %386 {offsets = [0, 0], sizes = [3, 16], strides = [1, 1]} : vector<3x32xf32> to vector<3x16xf32>
    %402 = vector.extract_strided_slice %386 {offsets = [0, 16], sizes = [3, 16], strides = [1, 1]} : vector<3x32xf32> to vector<3x16xf32>
    %403 = arith.maximumf %401, %402 : vector<3x16xf32>
    %404 = vector.extract_strided_slice %400 {offsets = [0, 0], sizes = [3, 16], strides = [1, 1]} : vector<3x32xf32> to vector<3x16xf32>
    %405 = vector.extract_strided_slice %400 {offsets = [0, 16], sizes = [3, 16], strides = [1, 1]} : vector<3x32xf32> to vector<3x16xf32>
    %406 = arith.maximumf %404, %405 : vector<3x16xf32>
    %407 = arith.maximumf %403, %406 : vector<3x16xf32>
    %408 = vector.broadcast %2 : vector<1x16xf32> to vector<3x16xf32>
    %409 = arith.addf %407, %408 : vector<3x16xf32>
    %cst_241 = arith.constant 0.000000e+00 : f32
    %410 = vector.broadcast %cst_241 : f32 to vector<3x16xf32>
    %411 = arith.maximumf %409, %410 : vector<3x16xf32>
    %c1_242 = arith.constant 1 : index
    %c6_243 = arith.constant 6 : index
    %c0_244 = arith.constant 0 : index
    %c0_245 = arith.constant 0 : index
    %412 = vector.load %arg1[%c1_242, %c6_243, %c0_244, %c0_245] : memref<2x16x4x16xf32, #tpu.memory_space<vmem>>, vector<1x1x4x16xf32>
    %413 = vector.shape_cast %412 : vector<1x1x4x16xf32> to vector<4x16xf32>
    %414 = vector.extract_strided_slice %413 {offsets = [0, 0], sizes = [3, 16], strides = [1, 1]} : vector<4x16xf32> to vector<3x16xf32>
    %415 = vector.extract_strided_slice %413 {offsets = [1, 0], sizes = [3, 16], strides = [1, 1]} : vector<4x16xf32> to vector<3x16xf32>
    %c1_246 = arith.constant 1 : index
    %c7_247 = arith.constant 7 : index
    %c0_248 = arith.constant 0 : index
    %c0_249 = arith.constant 0 : index
    %416 = vector.load %arg1[%c1_246, %c7_247, %c0_248, %c0_249] : memref<2x16x4x16xf32, #tpu.memory_space<vmem>>, vector<1x1x4x16xf32>
    %417 = vector.shape_cast %416 : vector<1x1x4x16xf32> to vector<4x16xf32>
    %418 = vector.extract_strided_slice %417 {offsets = [0, 0], sizes = [3, 16], strides = [1, 1]} : vector<4x16xf32> to vector<3x16xf32>
    %419 = vector.extract_strided_slice %417 {offsets = [1, 0], sizes = [3, 16], strides = [1, 1]} : vector<4x16xf32> to vector<3x16xf32>
    %c1_250 = arith.constant 1 : index
    %c8_251 = arith.constant 8 : index
    %c0_252 = arith.constant 0 : index
    %c0_253 = arith.constant 0 : index
    %420 = vector.load %arg1[%c1_250, %c8_251, %c0_252, %c0_253] : memref<2x16x4x16xf32, #tpu.memory_space<vmem>>, vector<1x1x4x16xf32>
    %421 = vector.shape_cast %420 : vector<1x1x4x16xf32> to vector<4x16xf32>
    %422 = vector.extract_strided_slice %421 {offsets = [0, 0], sizes = [3, 16], strides = [1, 1]} : vector<4x16xf32> to vector<3x16xf32>
    %423 = vector.extract_strided_slice %421 {offsets = [1, 0], sizes = [3, 16], strides = [1, 1]} : vector<4x16xf32> to vector<3x16xf32>
    %424 = tpu.concatenate %414, %415, %418, %419, %422, %423 in 1 : vector<3x16xf32>, vector<3x16xf32>, vector<3x16xf32>, vector<3x16xf32>, vector<3x16xf32>, vector<3x16xf32> -> vector<3x96xf32>
    %cst_254 = arith.constant dense<0.000000e+00> : vector<3x32xf32>
    %425 = tpu.matmul %424, %0, %cst_254 {dimension_numbers = #tpu.dot_dimension_numbers<[1], [0], [0], [1], [0, 0, 1, 1], [], []>} : vector<3x96xf32>, vector<96x32xf32>, vector<3x32xf32> -> vector<3x32xf32>
    %c1_255 = arith.constant 1 : index
    %c7_256 = arith.constant 7 : index
    %c0_257 = arith.constant 0 : index
    %c0_258 = arith.constant 0 : index
    %426 = vector.load %arg1[%c1_255, %c7_256, %c0_257, %c0_258] : memref<2x16x4x16xf32, #tpu.memory_space<vmem>>, vector<1x1x4x16xf32>
    %427 = vector.shape_cast %426 : vector<1x1x4x16xf32> to vector<4x16xf32>
    %428 = vector.extract_strided_slice %427 {offsets = [0, 0], sizes = [3, 16], strides = [1, 1]} : vector<4x16xf32> to vector<3x16xf32>
    %429 = vector.extract_strided_slice %427 {offsets = [1, 0], sizes = [3, 16], strides = [1, 1]} : vector<4x16xf32> to vector<3x16xf32>
    %c1_259 = arith.constant 1 : index
    %c8_260 = arith.constant 8 : index
    %c0_261 = arith.constant 0 : index
    %c0_262 = arith.constant 0 : index
    %430 = vector.load %arg1[%c1_259, %c8_260, %c0_261, %c0_262] : memref<2x16x4x16xf32, #tpu.memory_space<vmem>>, vector<1x1x4x16xf32>
    %431 = vector.shape_cast %430 : vector<1x1x4x16xf32> to vector<4x16xf32>
    %432 = vector.extract_strided_slice %431 {offsets = [0, 0], sizes = [3, 16], strides = [1, 1]} : vector<4x16xf32> to vector<3x16xf32>
    %433 = vector.extract_strided_slice %431 {offsets = [1, 0], sizes = [3, 16], strides = [1, 1]} : vector<4x16xf32> to vector<3x16xf32>
    %c1_263 = arith.constant 1 : index
    %c9_264 = arith.constant 9 : index
    %c0_265 = arith.constant 0 : index
    %c0_266 = arith.constant 0 : index
    %434 = vector.load %arg1[%c1_263, %c9_264, %c0_265, %c0_266] : memref<2x16x4x16xf32, #tpu.memory_space<vmem>>, vector<1x1x4x16xf32>
    %435 = vector.shape_cast %434 : vector<1x1x4x16xf32> to vector<4x16xf32>
    %436 = vector.extract_strided_slice %435 {offsets = [0, 0], sizes = [3, 16], strides = [1, 1]} : vector<4x16xf32> to vector<3x16xf32>
    %437 = vector.extract_strided_slice %435 {offsets = [1, 0], sizes = [3, 16], strides = [1, 1]} : vector<4x16xf32> to vector<3x16xf32>
    %438 = tpu.concatenate %428, %429, %432, %433, %436, %437 in 1 : vector<3x16xf32>, vector<3x16xf32>, vector<3x16xf32>, vector<3x16xf32>, vector<3x16xf32>, vector<3x16xf32> -> vector<3x96xf32>
    %cst_267 = arith.constant dense<0.000000e+00> : vector<3x32xf32>
    %439 = tpu.matmul %438, %0, %cst_267 {dimension_numbers = #tpu.dot_dimension_numbers<[1], [0], [0], [1], [0, 0, 1, 1], [], []>} : vector<3x96xf32>, vector<96x32xf32>, vector<3x32xf32> -> vector<3x32xf32>
    %440 = vector.extract_strided_slice %425 {offsets = [0, 0], sizes = [3, 16], strides = [1, 1]} : vector<3x32xf32> to vector<3x16xf32>
    %441 = vector.extract_strided_slice %425 {offsets = [0, 16], sizes = [3, 16], strides = [1, 1]} : vector<3x32xf32> to vector<3x16xf32>
    %442 = arith.maximumf %440, %441 : vector<3x16xf32>
    %443 = vector.extract_strided_slice %439 {offsets = [0, 0], sizes = [3, 16], strides = [1, 1]} : vector<3x32xf32> to vector<3x16xf32>
    %444 = vector.extract_strided_slice %439 {offsets = [0, 16], sizes = [3, 16], strides = [1, 1]} : vector<3x32xf32> to vector<3x16xf32>
    %445 = arith.maximumf %443, %444 : vector<3x16xf32>
    %446 = arith.maximumf %442, %445 : vector<3x16xf32>
    %447 = vector.broadcast %2 : vector<1x16xf32> to vector<3x16xf32>
    %448 = arith.addf %446, %447 : vector<3x16xf32>
    %cst_268 = arith.constant 0.000000e+00 : f32
    %449 = vector.broadcast %cst_268 : f32 to vector<3x16xf32>
    %450 = arith.maximumf %448, %449 : vector<3x16xf32>
    %c1_269 = arith.constant 1 : index
    %c8_270 = arith.constant 8 : index
    %c0_271 = arith.constant 0 : index
    %c0_272 = arith.constant 0 : index
    %451 = vector.load %arg1[%c1_269, %c8_270, %c0_271, %c0_272] : memref<2x16x4x16xf32, #tpu.memory_space<vmem>>, vector<1x1x4x16xf32>
    %452 = vector.shape_cast %451 : vector<1x1x4x16xf32> to vector<4x16xf32>
    %453 = vector.extract_strided_slice %452 {offsets = [0, 0], sizes = [3, 16], strides = [1, 1]} : vector<4x16xf32> to vector<3x16xf32>
    %454 = vector.extract_strided_slice %452 {offsets = [1, 0], sizes = [3, 16], strides = [1, 1]} : vector<4x16xf32> to vector<3x16xf32>
    %c1_273 = arith.constant 1 : index
    %c9_274 = arith.constant 9 : index
    %c0_275 = arith.constant 0 : index
    %c0_276 = arith.constant 0 : index
    %455 = vector.load %arg1[%c1_273, %c9_274, %c0_275, %c0_276] : memref<2x16x4x16xf32, #tpu.memory_space<vmem>>, vector<1x1x4x16xf32>
    %456 = vector.shape_cast %455 : vector<1x1x4x16xf32> to vector<4x16xf32>
    %457 = vector.extract_strided_slice %456 {offsets = [0, 0], sizes = [3, 16], strides = [1, 1]} : vector<4x16xf32> to vector<3x16xf32>
    %458 = vector.extract_strided_slice %456 {offsets = [1, 0], sizes = [3, 16], strides = [1, 1]} : vector<4x16xf32> to vector<3x16xf32>
    %c1_277 = arith.constant 1 : index
    %c10_278 = arith.constant 10 : index
    %c0_279 = arith.constant 0 : index
    %c0_280 = arith.constant 0 : index
    %459 = vector.load %arg1[%c1_277, %c10_278, %c0_279, %c0_280] : memref<2x16x4x16xf32, #tpu.memory_space<vmem>>, vector<1x1x4x16xf32>
    %460 = vector.shape_cast %459 : vector<1x1x4x16xf32> to vector<4x16xf32>
    %461 = vector.extract_strided_slice %460 {offsets = [0, 0], sizes = [3, 16], strides = [1, 1]} : vector<4x16xf32> to vector<3x16xf32>
    %462 = vector.extract_strided_slice %460 {offsets = [1, 0], sizes = [3, 16], strides = [1, 1]} : vector<4x16xf32> to vector<3x16xf32>
    %463 = tpu.concatenate %453, %454, %457, %458, %461, %462 in 1 : vector<3x16xf32>, vector<3x16xf32>, vector<3x16xf32>, vector<3x16xf32>, vector<3x16xf32>, vector<3x16xf32> -> vector<3x96xf32>
    %cst_281 = arith.constant dense<0.000000e+00> : vector<3x32xf32>
    %464 = tpu.matmul %463, %0, %cst_281 {dimension_numbers = #tpu.dot_dimension_numbers<[1], [0], [0], [1], [0, 0, 1, 1], [], []>} : vector<3x96xf32>, vector<96x32xf32>, vector<3x32xf32> -> vector<3x32xf32>
    %c1_282 = arith.constant 1 : index
    %c9_283 = arith.constant 9 : index
    %c0_284 = arith.constant 0 : index
    %c0_285 = arith.constant 0 : index
    %465 = vector.load %arg1[%c1_282, %c9_283, %c0_284, %c0_285] : memref<2x16x4x16xf32, #tpu.memory_space<vmem>>, vector<1x1x4x16xf32>
    %466 = vector.shape_cast %465 : vector<1x1x4x16xf32> to vector<4x16xf32>
    %467 = vector.extract_strided_slice %466 {offsets = [0, 0], sizes = [3, 16], strides = [1, 1]} : vector<4x16xf32> to vector<3x16xf32>
    %468 = vector.extract_strided_slice %466 {offsets = [1, 0], sizes = [3, 16], strides = [1, 1]} : vector<4x16xf32> to vector<3x16xf32>
    %c1_286 = arith.constant 1 : index
    %c10_287 = arith.constant 10 : index
    %c0_288 = arith.constant 0 : index
    %c0_289 = arith.constant 0 : index
    %469 = vector.load %arg1[%c1_286, %c10_287, %c0_288, %c0_289] : memref<2x16x4x16xf32, #tpu.memory_space<vmem>>, vector<1x1x4x16xf32>
    %470 = vector.shape_cast %469 : vector<1x1x4x16xf32> to vector<4x16xf32>
    %471 = vector.extract_strided_slice %470 {offsets = [0, 0], sizes = [3, 16], strides = [1, 1]} : vector<4x16xf32> to vector<3x16xf32>
    %472 = vector.extract_strided_slice %470 {offsets = [1, 0], sizes = [3, 16], strides = [1, 1]} : vector<4x16xf32> to vector<3x16xf32>
    %c1_290 = arith.constant 1 : index
    %c11_291 = arith.constant 11 : index
    %c0_292 = arith.constant 0 : index
    %c0_293 = arith.constant 0 : index
    %473 = vector.load %arg1[%c1_290, %c11_291, %c0_292, %c0_293] : memref<2x16x4x16xf32, #tpu.memory_space<vmem>>, vector<1x1x4x16xf32>
    %474 = vector.shape_cast %473 : vector<1x1x4x16xf32> to vector<4x16xf32>
    %475 = vector.extract_strided_slice %474 {offsets = [0, 0], sizes = [3, 16], strides = [1, 1]} : vector<4x16xf32> to vector<3x16xf32>
    %476 = vector.extract_strided_slice %474 {offsets = [1, 0], sizes = [3, 16], strides = [1, 1]} : vector<4x16xf32> to vector<3x16xf32>
    %477 = tpu.concatenate %467, %468, %471, %472, %475, %476 in 1 : vector<3x16xf32>, vector<3x16xf32>, vector<3x16xf32>, vector<3x16xf32>, vector<3x16xf32>, vector<3x16xf32> -> vector<3x96xf32>
    %cst_294 = arith.constant dense<0.000000e+00> : vector<3x32xf32>
    %478 = tpu.matmul %477, %0, %cst_294 {dimension_numbers = #tpu.dot_dimension_numbers<[1], [0], [0], [1], [0, 0, 1, 1], [], []>} : vector<3x96xf32>, vector<96x32xf32>, vector<3x32xf32> -> vector<3x32xf32>
    %479 = vector.extract_strided_slice %464 {offsets = [0, 0], sizes = [3, 16], strides = [1, 1]} : vector<3x32xf32> to vector<3x16xf32>
    %480 = vector.extract_strided_slice %464 {offsets = [0, 16], sizes = [3, 16], strides = [1, 1]} : vector<3x32xf32> to vector<3x16xf32>
    %481 = arith.maximumf %479, %480 : vector<3x16xf32>
    %482 = vector.extract_strided_slice %478 {offsets = [0, 0], sizes = [3, 16], strides = [1, 1]} : vector<3x32xf32> to vector<3x16xf32>
    %483 = vector.extract_strided_slice %478 {offsets = [0, 16], sizes = [3, 16], strides = [1, 1]} : vector<3x32xf32> to vector<3x16xf32>
    %484 = arith.maximumf %482, %483 : vector<3x16xf32>
    %485 = arith.maximumf %481, %484 : vector<3x16xf32>
    %486 = vector.broadcast %2 : vector<1x16xf32> to vector<3x16xf32>
    %487 = arith.addf %485, %486 : vector<3x16xf32>
    %cst_295 = arith.constant 0.000000e+00 : f32
    %488 = vector.broadcast %cst_295 : f32 to vector<3x16xf32>
    %489 = arith.maximumf %487, %488 : vector<3x16xf32>
    %c1_296 = arith.constant 1 : index
    %c10_297 = arith.constant 10 : index
    %c0_298 = arith.constant 0 : index
    %c0_299 = arith.constant 0 : index
    %490 = vector.load %arg1[%c1_296, %c10_297, %c0_298, %c0_299] : memref<2x16x4x16xf32, #tpu.memory_space<vmem>>, vector<1x1x4x16xf32>
    %491 = vector.shape_cast %490 : vector<1x1x4x16xf32> to vector<4x16xf32>
    %492 = vector.extract_strided_slice %491 {offsets = [0, 0], sizes = [3, 16], strides = [1, 1]} : vector<4x16xf32> to vector<3x16xf32>
    %493 = vector.extract_strided_slice %491 {offsets = [1, 0], sizes = [3, 16], strides = [1, 1]} : vector<4x16xf32> to vector<3x16xf32>
    %c1_300 = arith.constant 1 : index
    %c11_301 = arith.constant 11 : index
    %c0_302 = arith.constant 0 : index
    %c0_303 = arith.constant 0 : index
    %494 = vector.load %arg1[%c1_300, %c11_301, %c0_302, %c0_303] : memref<2x16x4x16xf32, #tpu.memory_space<vmem>>, vector<1x1x4x16xf32>
    %495 = vector.shape_cast %494 : vector<1x1x4x16xf32> to vector<4x16xf32>
    %496 = vector.extract_strided_slice %495 {offsets = [0, 0], sizes = [3, 16], strides = [1, 1]} : vector<4x16xf32> to vector<3x16xf32>
    %497 = vector.extract_strided_slice %495 {offsets = [1, 0], sizes = [3, 16], strides = [1, 1]} : vector<4x16xf32> to vector<3x16xf32>
    %c1_304 = arith.constant 1 : index
    %c12_305 = arith.constant 12 : index
    %c0_306 = arith.constant 0 : index
    %c0_307 = arith.constant 0 : index
    %498 = vector.load %arg1[%c1_304, %c12_305, %c0_306, %c0_307] : memref<2x16x4x16xf32, #tpu.memory_space<vmem>>, vector<1x1x4x16xf32>
    %499 = vector.shape_cast %498 : vector<1x1x4x16xf32> to vector<4x16xf32>
    %500 = vector.extract_strided_slice %499 {offsets = [0, 0], sizes = [3, 16], strides = [1, 1]} : vector<4x16xf32> to vector<3x16xf32>
    %501 = vector.extract_strided_slice %499 {offsets = [1, 0], sizes = [3, 16], strides = [1, 1]} : vector<4x16xf32> to vector<3x16xf32>
    %502 = tpu.concatenate %492, %493, %496, %497, %500, %501 in 1 : vector<3x16xf32>, vector<3x16xf32>, vector<3x16xf32>, vector<3x16xf32>, vector<3x16xf32>, vector<3x16xf32> -> vector<3x96xf32>
    %cst_308 = arith.constant dense<0.000000e+00> : vector<3x32xf32>
    %503 = tpu.matmul %502, %0, %cst_308 {dimension_numbers = #tpu.dot_dimension_numbers<[1], [0], [0], [1], [0, 0, 1, 1], [], []>} : vector<3x96xf32>, vector<96x32xf32>, vector<3x32xf32> -> vector<3x32xf32>
    %c1_309 = arith.constant 1 : index
    %c11_310 = arith.constant 11 : index
    %c0_311 = arith.constant 0 : index
    %c0_312 = arith.constant 0 : index
    %504 = vector.load %arg1[%c1_309, %c11_310, %c0_311, %c0_312] : memref<2x16x4x16xf32, #tpu.memory_space<vmem>>, vector<1x1x4x16xf32>
    %505 = vector.shape_cast %504 : vector<1x1x4x16xf32> to vector<4x16xf32>
    %506 = vector.extract_strided_slice %505 {offsets = [0, 0], sizes = [3, 16], strides = [1, 1]} : vector<4x16xf32> to vector<3x16xf32>
    %507 = vector.extract_strided_slice %505 {offsets = [1, 0], sizes = [3, 16], strides = [1, 1]} : vector<4x16xf32> to vector<3x16xf32>
    %c1_313 = arith.constant 1 : index
    %c12_314 = arith.constant 12 : index
    %c0_315 = arith.constant 0 : index
    %c0_316 = arith.constant 0 : index
    %508 = vector.load %arg1[%c1_313, %c12_314, %c0_315, %c0_316] : memref<2x16x4x16xf32, #tpu.memory_space<vmem>>, vector<1x1x4x16xf32>
    %509 = vector.shape_cast %508 : vector<1x1x4x16xf32> to vector<4x16xf32>
    %510 = vector.extract_strided_slice %509 {offsets = [0, 0], sizes = [3, 16], strides = [1, 1]} : vector<4x16xf32> to vector<3x16xf32>
    %511 = vector.extract_strided_slice %509 {offsets = [1, 0], sizes = [3, 16], strides = [1, 1]} : vector<4x16xf32> to vector<3x16xf32>
    %c1_317 = arith.constant 1 : index
    %c13_318 = arith.constant 13 : index
    %c0_319 = arith.constant 0 : index
    %c0_320 = arith.constant 0 : index
    %512 = vector.load %arg1[%c1_317, %c13_318, %c0_319, %c0_320] : memref<2x16x4x16xf32, #tpu.memory_space<vmem>>, vector<1x1x4x16xf32>
    %513 = vector.shape_cast %512 : vector<1x1x4x16xf32> to vector<4x16xf32>
    %514 = vector.extract_strided_slice %513 {offsets = [0, 0], sizes = [3, 16], strides = [1, 1]} : vector<4x16xf32> to vector<3x16xf32>
    %515 = vector.extract_strided_slice %513 {offsets = [1, 0], sizes = [3, 16], strides = [1, 1]} : vector<4x16xf32> to vector<3x16xf32>
    %516 = tpu.concatenate %506, %507, %510, %511, %514, %515 in 1 : vector<3x16xf32>, vector<3x16xf32>, vector<3x16xf32>, vector<3x16xf32>, vector<3x16xf32>, vector<3x16xf32> -> vector<3x96xf32>
    %cst_321 = arith.constant dense<0.000000e+00> : vector<3x32xf32>
    %517 = tpu.matmul %516, %0, %cst_321 {dimension_numbers = #tpu.dot_dimension_numbers<[1], [0], [0], [1], [0, 0, 1, 1], [], []>} : vector<3x96xf32>, vector<96x32xf32>, vector<3x32xf32> -> vector<3x32xf32>
    %518 = vector.extract_strided_slice %503 {offsets = [0, 0], sizes = [3, 16], strides = [1, 1]} : vector<3x32xf32> to vector<3x16xf32>
    %519 = vector.extract_strided_slice %503 {offsets = [0, 16], sizes = [3, 16], strides = [1, 1]} : vector<3x32xf32> to vector<3x16xf32>
    %520 = arith.maximumf %518, %519 : vector<3x16xf32>
    %521 = vector.extract_strided_slice %517 {offsets = [0, 0], sizes = [3, 16], strides = [1, 1]} : vector<3x32xf32> to vector<3x16xf32>
    %522 = vector.extract_strided_slice %517 {offsets = [0, 16], sizes = [3, 16], strides = [1, 1]} : vector<3x32xf32> to vector<3x16xf32>
    %523 = arith.maximumf %521, %522 : vector<3x16xf32>
    %524 = arith.maximumf %520, %523 : vector<3x16xf32>
    %525 = vector.broadcast %2 : vector<1x16xf32> to vector<3x16xf32>
    %526 = arith.addf %524, %525 : vector<3x16xf32>
    %cst_322 = arith.constant 0.000000e+00 : f32
    %527 = vector.broadcast %cst_322 : f32 to vector<3x16xf32>
    %528 = arith.maximumf %526, %527 : vector<3x16xf32>
    %529 = vector.extract_strided_slice %333 {offsets = [0, 0], sizes = [2, 16], strides = [1, 1]} : vector<3x16xf32> to vector<2x16xf32>
    %530 = vector.extract_strided_slice %333 {offsets = [1, 0], sizes = [2, 16], strides = [1, 1]} : vector<3x16xf32> to vector<2x16xf32>
    %531 = vector.extract_strided_slice %372 {offsets = [0, 0], sizes = [2, 16], strides = [1, 1]} : vector<3x16xf32> to vector<2x16xf32>
    %532 = vector.extract_strided_slice %372 {offsets = [1, 0], sizes = [2, 16], strides = [1, 1]} : vector<3x16xf32> to vector<2x16xf32>
    %533 = vector.extract_strided_slice %411 {offsets = [0, 0], sizes = [2, 16], strides = [1, 1]} : vector<3x16xf32> to vector<2x16xf32>
    %534 = vector.extract_strided_slice %411 {offsets = [1, 0], sizes = [2, 16], strides = [1, 1]} : vector<3x16xf32> to vector<2x16xf32>
    %535 = tpu.concatenate %529, %530, %531, %532, %533, %534 in 1 : vector<2x16xf32>, vector<2x16xf32>, vector<2x16xf32>, vector<2x16xf32>, vector<2x16xf32>, vector<2x16xf32> -> vector<2x96xf32>
    %cst_323 = arith.constant dense<0.000000e+00> : vector<2x16xf32>
    %536 = tpu.matmul %535, %1, %cst_323 {dimension_numbers = #tpu.dot_dimension_numbers<[1], [0], [0], [1], [0, 0, 1, 1], [], []>} : vector<2x96xf32>, vector<96x16xf32>, vector<2x16xf32> -> vector<2x16xf32>
    %537 = vector.extract_strided_slice %372 {offsets = [0, 0], sizes = [2, 16], strides = [1, 1]} : vector<3x16xf32> to vector<2x16xf32>
    %538 = vector.extract_strided_slice %372 {offsets = [1, 0], sizes = [2, 16], strides = [1, 1]} : vector<3x16xf32> to vector<2x16xf32>
    %539 = vector.extract_strided_slice %411 {offsets = [0, 0], sizes = [2, 16], strides = [1, 1]} : vector<3x16xf32> to vector<2x16xf32>
    %540 = vector.extract_strided_slice %411 {offsets = [1, 0], sizes = [2, 16], strides = [1, 1]} : vector<3x16xf32> to vector<2x16xf32>
    %541 = vector.extract_strided_slice %450 {offsets = [0, 0], sizes = [2, 16], strides = [1, 1]} : vector<3x16xf32> to vector<2x16xf32>
    %542 = vector.extract_strided_slice %450 {offsets = [1, 0], sizes = [2, 16], strides = [1, 1]} : vector<3x16xf32> to vector<2x16xf32>
    %543 = tpu.concatenate %537, %538, %539, %540, %541, %542 in 1 : vector<2x16xf32>, vector<2x16xf32>, vector<2x16xf32>, vector<2x16xf32>, vector<2x16xf32>, vector<2x16xf32> -> vector<2x96xf32>
    %cst_324 = arith.constant dense<0.000000e+00> : vector<2x16xf32>
    %544 = tpu.matmul %543, %1, %cst_324 {dimension_numbers = #tpu.dot_dimension_numbers<[1], [0], [0], [1], [0, 0, 1, 1], [], []>} : vector<2x96xf32>, vector<96x16xf32>, vector<2x16xf32> -> vector<2x16xf32>
    %545 = vector.extract_strided_slice %536 {offsets = [0, 0], sizes = [2, 8], strides = [1, 1]} : vector<2x16xf32> to vector<2x8xf32>
    %546 = vector.extract_strided_slice %536 {offsets = [0, 8], sizes = [2, 8], strides = [1, 1]} : vector<2x16xf32> to vector<2x8xf32>
    %547 = arith.maximumf %545, %546 : vector<2x8xf32>
    %548 = vector.extract_strided_slice %544 {offsets = [0, 0], sizes = [2, 8], strides = [1, 1]} : vector<2x16xf32> to vector<2x8xf32>
    %549 = vector.extract_strided_slice %544 {offsets = [0, 8], sizes = [2, 8], strides = [1, 1]} : vector<2x16xf32> to vector<2x8xf32>
    %550 = arith.maximumf %548, %549 : vector<2x8xf32>
    %551 = arith.maximumf %547, %550 : vector<2x8xf32>
    %552 = vector.broadcast %3 : vector<1x8xf32> to vector<2x8xf32>
    %553 = arith.addf %551, %552 : vector<2x8xf32>
    %cst_325 = arith.constant 0.000000e+00 : f32
    %554 = vector.broadcast %cst_325 : f32 to vector<2x8xf32>
    %555 = arith.maximumf %553, %554 : vector<2x8xf32>
    %556 = vector.extract_strided_slice %411 {offsets = [0, 0], sizes = [2, 16], strides = [1, 1]} : vector<3x16xf32> to vector<2x16xf32>
    %557 = vector.extract_strided_slice %411 {offsets = [1, 0], sizes = [2, 16], strides = [1, 1]} : vector<3x16xf32> to vector<2x16xf32>
    %558 = vector.extract_strided_slice %450 {offsets = [0, 0], sizes = [2, 16], strides = [1, 1]} : vector<3x16xf32> to vector<2x16xf32>
    %559 = vector.extract_strided_slice %450 {offsets = [1, 0], sizes = [2, 16], strides = [1, 1]} : vector<3x16xf32> to vector<2x16xf32>
    %560 = vector.extract_strided_slice %489 {offsets = [0, 0], sizes = [2, 16], strides = [1, 1]} : vector<3x16xf32> to vector<2x16xf32>
    %561 = vector.extract_strided_slice %489 {offsets = [1, 0], sizes = [2, 16], strides = [1, 1]} : vector<3x16xf32> to vector<2x16xf32>
    %562 = tpu.concatenate %556, %557, %558, %559, %560, %561 in 1 : vector<2x16xf32>, vector<2x16xf32>, vector<2x16xf32>, vector<2x16xf32>, vector<2x16xf32>, vector<2x16xf32> -> vector<2x96xf32>
    %cst_326 = arith.constant dense<0.000000e+00> : vector<2x16xf32>
    %563 = tpu.matmul %562, %1, %cst_326 {dimension_numbers = #tpu.dot_dimension_numbers<[1], [0], [0], [1], [0, 0, 1, 1], [], []>} : vector<2x96xf32>, vector<96x16xf32>, vector<2x16xf32> -> vector<2x16xf32>
    %564 = vector.extract_strided_slice %450 {offsets = [0, 0], sizes = [2, 16], strides = [1, 1]} : vector<3x16xf32> to vector<2x16xf32>
    %565 = vector.extract_strided_slice %450 {offsets = [1, 0], sizes = [2, 16], strides = [1, 1]} : vector<3x16xf32> to vector<2x16xf32>
    %566 = vector.extract_strided_slice %489 {offsets = [0, 0], sizes = [2, 16], strides = [1, 1]} : vector<3x16xf32> to vector<2x16xf32>
    %567 = vector.extract_strided_slice %489 {offsets = [1, 0], sizes = [2, 16], strides = [1, 1]} : vector<3x16xf32> to vector<2x16xf32>
    %568 = vector.extract_strided_slice %528 {offsets = [0, 0], sizes = [2, 16], strides = [1, 1]} : vector<3x16xf32> to vector<2x16xf32>
    %569 = vector.extract_strided_slice %528 {offsets = [1, 0], sizes = [2, 16], strides = [1, 1]} : vector<3x16xf32> to vector<2x16xf32>
    %570 = tpu.concatenate %564, %565, %566, %567, %568, %569 in 1 : vector<2x16xf32>, vector<2x16xf32>, vector<2x16xf32>, vector<2x16xf32>, vector<2x16xf32>, vector<2x16xf32> -> vector<2x96xf32>
    %cst_327 = arith.constant dense<0.000000e+00> : vector<2x16xf32>
    %571 = tpu.matmul %570, %1, %cst_327 {dimension_numbers = #tpu.dot_dimension_numbers<[1], [0], [0], [1], [0, 0, 1, 1], [], []>} : vector<2x96xf32>, vector<96x16xf32>, vector<2x16xf32> -> vector<2x16xf32>
    %572 = vector.extract_strided_slice %563 {offsets = [0, 0], sizes = [2, 8], strides = [1, 1]} : vector<2x16xf32> to vector<2x8xf32>
    %573 = vector.extract_strided_slice %563 {offsets = [0, 8], sizes = [2, 8], strides = [1, 1]} : vector<2x16xf32> to vector<2x8xf32>
    %574 = arith.maximumf %572, %573 : vector<2x8xf32>
    %575 = vector.extract_strided_slice %571 {offsets = [0, 0], sizes = [2, 8], strides = [1, 1]} : vector<2x16xf32> to vector<2x8xf32>
    %576 = vector.extract_strided_slice %571 {offsets = [0, 8], sizes = [2, 8], strides = [1, 1]} : vector<2x16xf32> to vector<2x8xf32>
    %577 = arith.maximumf %575, %576 : vector<2x8xf32>
    %578 = arith.maximumf %574, %577 : vector<2x8xf32>
    %579 = vector.broadcast %3 : vector<1x8xf32> to vector<2x8xf32>
    %580 = arith.addf %578, %579 : vector<2x8xf32>
    %cst_328 = arith.constant 0.000000e+00 : f32
    %581 = vector.broadcast %cst_328 : f32 to vector<2x8xf32>
    %582 = arith.maximumf %580, %581 : vector<2x8xf32>
    %583 = vector.shape_cast %555 : vector<2x8xf32> to vector<1x2x8xf32>
    %584 = vector.shape_cast %582 : vector<2x8xf32> to vector<1x2x8xf32>
    %585 = tpu.concatenate %583, %584 in 0 : vector<1x2x8xf32>, vector<1x2x8xf32> -> vector<2x2x8xf32>
    %586 = vector.shape_cast %294 : vector<2x2x8xf32> to vector<1x2x2x8xf32>
    %587 = vector.shape_cast %585 : vector<2x2x8xf32> to vector<1x2x2x8xf32>
    %588 = tpu.concatenate %586, %587 in 0 : vector<1x2x2x8xf32>, vector<1x2x2x8xf32> -> vector<2x2x2x8xf32>
    %c0_329 = arith.constant 0 : index
    %c0_330 = arith.constant 0 : index
    %c0_331 = arith.constant 0 : index
    %c0_332 = arith.constant 0 : index
    %589 = vector.load %arg6[%c0_329, %c0_330, %c0_331, %c0_332] : memref<2x2x2x8xf32, #tpu.memory_space<vmem>>, vector<2x2x2x8xf32>
    tpu.vector_store %arg6[%c0_329, %c0_330, %c0_331, %c0_332], %588 {strides = array<i32>} : memref<2x2x2x8xf32, #tpu.memory_space<vmem>>, vector<2x2x2x8xf32>,
    return
  }
  func.func @transform_0(%arg0: i32) -> (i32, i32, i32, i32) {
    %c0_i32 = arith.constant 0 : i32
    %c0_i32_0 = arith.constant 0 : i32
    %c0_i32_1 = arith.constant 0 : i32
    %c0_i32_2 = arith.constant 0 : i32
    %c0_i32_3 = arith.constant 0 : i32
    return %c0_i32, %c0_i32_0, %c0_i32_1, %c0_i32_2 : i32, i32, i32, i32
  }
  func.func @transform_1(%arg0: i32) -> (i32, i32) {
    %c0_i32 = arith.constant 0 : i32
    %c0_i32_0 = arith.constant 0 : i32
    %c0_i32_1 = arith.constant 0 : i32
    return %c0_i32, %c0_i32_0 : i32, i32
  }
  func.func @transform_2(%arg0: i32) -> (i32, i32) {
    %c0_i32 = arith.constant 0 : i32
    %c0_i32_0 = arith.constant 0 : i32
    %c0_i32_1 = arith.constant 0 : i32
    return %c0_i32, %c0_i32_0 : i32, i32
  }
  func.func @transform_3(%arg0: i32) -> (i32, i32) {
    %c0_i32 = arith.constant 0 : i32
    %c0_i32_0 = arith.constant 0 : i32
    %c0_i32_1 = arith.constant 0 : i32
    return %c0_i32, %c0_i32_0 : i32, i32
  }
  func.func @transform_4(%arg0: i32) -> (i32, i32) {
    %c0_i32 = arith.constant 0 : i32
    %c0_i32_0 = arith.constant 0 : i32
    %c0_i32_1 = arith.constant 0 : i32
    return %c0_i32, %c0_i32_0 : i32, i32
  }
  func.func @transform_5(%arg0: i32) -> (i32, i32, i32, i32) {
    %c0_i32 = arith.constant 0 : i32
    %c0_i32_0 = arith.constant 0 : i32
    %c0_i32_1 = arith.constant 0 : i32
    %c0_i32_2 = arith.constant 0 : i32
    %c0_i32_3 = arith.constant 0 : i32
    return %c0_i32, %c0_i32_0, %c0_i32_1, %c0_i32_2 : i32, i32, i32, i32
  }
}

</mosaic_0001>

<llo_original>
// kernel: tpu_custom_call.1
$region0: #{tpu_custom_call.1}
  #allocation0 [shape = 'u32[]', space=smem, size = 0x4, offset = 0x4, fixed_abs, tag = 'smem constant byte address 0x4 - core index']
  #allocation1 [shape = 'u32[144,128]{1,0:T(1,128)}', space=vmem, size = 0x12000, scoped, tag = 'internal scratch']
  %s0 = inlined_call_operand.vmem [shape: f32[2,16,4,16], index: 0, kind: input, shape index: {}]
  %s1 = inlined_call_operand.vmem [shape: f32[96,32], index: 1, kind: input, shape index: {}]
  %s2 = inlined_call_operand.vmem [shape: f32[1,16], index: 2, kind: input, shape index: {}]
  %s3 = inlined_call_operand.vmem [shape: f32[96,16], index: 3, kind: input, shape index: {}]
  %s4 = inlined_call_operand.vmem [shape: f32[1,8], index: 4, kind: input, shape index: {}]
  %s5 = inlined_call_operand.hbm [shape: f32[2,2,2,8], index: 5, kind: output, shape index: {}]
  %s6 = sld [smem:[#allocation0]]
  $region30: #{tpu_custom_call.1} parent=0
    _
  %s8 = ssub.s32 1, %s6
  %s9 = scalar_select 0, %s8, %s6
  $region1: #{tpu_custom_call.1} parent=0
    #allocation2 [shape = 'u8[4096]{0}', space=vmem, size = 0x1000, scoped, tag = 'output window, operand 0, single buffered']
    #allocation3 [shape = 's32[1]{0}', space=sflag, size = 0x4, scoped, tag = 'scoped memory for tpu_custom_call.1']
    %10 = vsyncpa [#allocation3], 0
    // Predicated region
    $region2: #{tpu_custom_call.1} parent=1 // pred_check
      _
    $region3: #{tpu_custom_call.1} parent=1 // pred_check_branch
      %12 = sbr.rel (0) target = $region5
    $region4: #{tpu_custom_call.1} parent=1 // pred_region
      _
    $region5: #{tpu_custom_call.1} parent=1 // pred_fallthru
      _
    // Predicated region
    $region6: #{tpu_custom_call.1} parent=1 // pred_check
      _
    $region7: #{tpu_custom_call.1} parent=1 // pred_check_branch
      %14 = sbr.rel (0) target = $region9
    $region8: #{tpu_custom_call.1} parent=1 // pred_region
      _
    $region9: #{tpu_custom_call.1} parent=1 // pred_fallthru
      _
    // Predicated region
    $region10: #{tpu_custom_call.1} parent=1 // pred_check
      _
    $region11: #{tpu_custom_call.1} parent=1 // pred_check_branch
      %16 = sbr.rel (0) target = $region13
    $region12: #{tpu_custom_call.1} parent=1 // pred_region
      _
    $region13: #{tpu_custom_call.1} parent=1 // pred_fallthru
      _
    // Predicated region
    $region14: #{tpu_custom_call.1} parent=1 // pred_check
      _
    $region15: #{tpu_custom_call.1} parent=1 // pred_check_branch
      %18 = sbr.rel (0) target = $region17
    $region16: #{tpu_custom_call.1} parent=1 // pred_region
      _
    $region17: #{tpu_custom_call.1} parent=1 // pred_fallthru
      _
    // Predicated region
    $region18: #{tpu_custom_call.1} parent=1 // pred_check
      _
    $region19: #{tpu_custom_call.1} parent=1 // pred_check_branch
      %20 = sbr.rel (0) target = $region21
    $region20: #{tpu_custom_call.1} parent=1 // pred_region
      _
    $region21: #{tpu_custom_call.1} parent=1 // pred_fallthru
      _
    %v21 = vld [vmem:[%s1] sm:$0xff]
    %v22 = vld [vmem:[%s1 + $0x8] sm:$0xff]
    %v23 = vld [vmem:[%s1 + $0x10] sm:$0xff]
    %v24 = vld [vmem:[%s1 + $0x18] sm:$0xff]
    %v25 = vld [vmem:[%s1 + $0x20] sm:$0xff]
    %v26 = vld [vmem:[%s1 + $0x28] sm:$0xff]
    %v27 = vld [vmem:[%s1 + $0x30] sm:$0xff]
    %v28 = vld [vmem:[%s1 + $0x38] sm:$0xff]
    %v29 = vld [vmem:[%s1 + $0x40] sm:$0xff]
    %v30 = vld [vmem:[%s1 + $0x48] sm:$0xff]
    %v31 = vld [vmem:[%s1 + $0x50] sm:$0xff]
    %v32 = vld [vmem:[%s1 + $0x58] sm:$0xff]
    %v33 = vld [vmem:[%s3] sm:$0xff]
    %v34 = vld [vmem:[%s3 + $0x8] sm:$0xff]
    %v35 = vld [vmem:[%s3 + $0x10] sm:$0xff]
    %v36 = vld [vmem:[%s3 + $0x18] sm:$0xff]
    %v37 = vld [vmem:[%s3 + $0x20] sm:$0xff]
    %v38 = vld [vmem:[%s3 + $0x28] sm:$0xff]
    %v39 = vld [vmem:[%s3 + $0x30] sm:$0xff]
    %v40 = vld [vmem:[%s3 + $0x38] sm:$0xff]
    %v41 = vld [vmem:[%s3 + $0x40] sm:$0xff]
    %v42 = vld [vmem:[%s3 + $0x48] sm:$0xff]
    %v43 = vld [vmem:[%s3 + $0x50] sm:$0xff]
    %v44 = vld [vmem:[%s3 + $0x58] sm:$0xff]
    %v45 = vld [vmem:[%s2] sm:$0x1]
    %v46 = vld [vmem:[%s4] sm:$0x1]
    %v47 = vld [vmem:[%s0] sm:$0xf]
    %s48 = scalar_lea.vmem %s0, 4
    %v49 = vld [vmem:[%s48] sm:$0xf]
    %s50 = scalar_lea.vmem %s0, 8
    %v51 = vld [vmem:[%s50] sm:$0xf]
    %v53 = vrot.slane %v47, 1
    %54 = vrot.lane.b32.xlu0 %v53, 16
    %v55 = vpop.permute.xlu0 %54
    %58 = vrot.lane.b32.xlu0 %v49, 32
    %v59 = vpop.permute.xlu0 %58
    %v61 = vrot.slane %v49, 1
    %62 = vrot.lane.b32.xlu0 %v61, 48
    %v63 = vpop.permute.xlu0 %62
    %66 = vrot.lane.b32.xlu0 %v51, 64
    %v67 = vpop.permute.xlu0 %66
    %v69 = vrot.slane %v51, 1
    %70 = vrot.lane.b32.xlu0 %v69, 80
    %v71 = vpop.permute.xlu0 %70
    %vm73 = vcmask 130048
    %v74 = vsel %vm73, %v47, %v55
    %vm75 = vcmask 261120
    %v76 = vsel %vm75, %v74, %v59
    %vm77 = vcmask 392192
    %v78 = vsel %vm77, %v76, %v63
    %vm79 = vcmask 523264
    %v80 = vsel %vm79, %v78, %v67
    %vm81 = vcmask 654336
    %v82 = vsel %vm81, %v80, %v71
    %vm83 = vcmask 785408
    %v85 = vsel %vm83, %v82, 0
    %87 = vmatprep.subr.mxu0 0.0
    %88 = vmatpush1.msra.mxu0 0.0
    %89 = vmatprep.subr.mxu0 0.0
    %90 = vmatpush1.msra.mxu0 0.0
    %91 = vmatprep.subr.mxu0 0.0
    %92 = vmatpush1.msra.mxu0 0.0
    %93 = vmatprep.subr.mxu0 0.0
    %94 = vmatpush1.msra.mxu0 0.0
    %95 = vmatprep.subr.mxu0 0.0
    %96 = vmatpush1.msra.mxu0 %v32
    %97 = vmatprep.subr.mxu0 0.0
    %98 = vmatpush1.msra.mxu0 %v31
    %99 = vmatprep.subr.mxu0 0.0
    %100 = vmatpush1.msra.mxu0 %v30
    %101 = vmatprep.subr.mxu0 0.0
    %102 = vmatpush1.msra.mxu0 %v29
    %103 = vmatprep.subr.mxu0 0.0
    %104 = vmatpush1.msra.mxu0 %v28
    %105 = vmatprep.subr.mxu0 0.0
    %106 = vmatpush1.msra.mxu0 %v27
    %107 = vmatprep.subr.mxu0 0.0
    %108 = vmatpush1.msra.mxu0 %v26
    %109 = vmatprep.subr.mxu0 0.0
    %110 = vmatpush1.msra.mxu0 %v25
    %111 = vmatprep.subr.mxu0 0.0
    %112 = vmatpush1.msra.mxu0 %v24
    %113 = vmatprep.subr.mxu0 0.0
    %114 = vmatpush1.msra.mxu0 %v23
    %115 = vmatprep.subr.mxu0 0.0
    %116 = vmatpush1.msra.mxu0 %v22
    %117 = vmatprep.subr.mxu0 0.0
    %118 = vmatpush1.msra.mxu0 %v21
    %119 = vmatprep.subr.mxu0 0.0
    %120 = vmatpush2.msra.mxu0 0.0
    %121 = vmatprep.subr.mxu0 0.0
    %122 = vmatpush2.msra.mxu0 0.0
    %123 = vmatprep.subr.mxu0 0.0
    %124 = vmatpush2.msra.mxu0 0.0
    %125 = vmatprep.subr.mxu0 0.0
    %126 = vmatpush2.msra.mxu0 0.0
    %127 = vmatprep.subr.mxu0 0.0
    %128 = vmatpush2.msra.mxu0 0.0
    %129 = vmatprep.subr.mxu0 0.0
    %130 = vmatpush2.msra.mxu0 0.0
    %131 = vmatprep.subr.mxu0 0.0
    %132 = vmatpush2.msra.mxu0 0.0
    %133 = vmatprep.subr.mxu0 0.0
    %134 = vmatpush2.msra.mxu0 0.0
    %135 = vmatprep.subr.mxu0 0.0
    %136 = vmatpush2.msra.mxu0 0.0
    %137 = vmatprep.subr.mxu0 0.0
    %138 = vmatpush2.msra.mxu0 0.0
    %139 = vmatprep.subr.mxu0 0.0
    %140 = vmatpush2.msra.mxu0 0.0
    %141 = vmatprep.subr.mxu0 0.0
    %142 = vmatpush2.msra.mxu0 0.0
    %143 = vmatprep.subr.mxu0 0.0
    %144 = vmatpush2.msra.mxu0 0.0
    %145 = vmatprep.subr.mxu0 0.0
    %146 = vmatpush2.msra.mxu0 0.0
    %147 = vmatprep.subr.mxu0 0.0
    %148 = vmatpush2.msra.mxu0 0.0
    %149 = vmatprep.subr.mxu0 0.0
    %150 = vmatpush2.msra.mxu0 0.0
    %151 = vmatprep.mubr.f32.mxu0 0.0
    %152 = vmatmul.mubr.f32.gmra.mxu0 %v85
    %v153 = vpop.f32.mrf.mxu0
    %v154 = vadd.f32 0.0, %v153
    %v155 = vpop.f32.mrf.mxu0
    %156 = vdwg.mxu0
    %s157 = scalar_lea.vmem %s0, 12
    %v158 = vld [vmem:[%s157] sm:$0xf]
    %159 = vrot.lane.b32.xlu0 %v61, 16
    %v160 = vpop.permute.xlu0 %159
    %162 = vrot.lane.b32.xlu0 %v51, 32
    %v163 = vpop.permute.xlu0 %162
    %165 = vrot.lane.b32.xlu0 %v69, 48
    %v166 = vpop.permute.xlu0 %165
    %169 = vrot.lane.b32.xlu0 %v158, 64
    %v170 = vpop.permute.xlu0 %169
    %v172 = vrot.slane %v158, 1
    %173 = vrot.lane.b32.xlu0 %v172, 80
    %v174 = vpop.permute.xlu0 %173
    %v176 = vsel %vm73, %v49, %v160
    %v177 = vsel %vm75, %v176, %v163
    %v178 = vsel %vm77, %v177, %v166
    %v179 = vsel %vm79, %v178, %v170
    %v180 = vsel %vm81, %v179, %v174
    %v182 = vsel %vm83, %v180, 0
    %184 = vmatprep.subr.mxu0 0.0
    %185 = vmatpush1.msra.mxu0 0.0
    %186 = vmatprep.subr.mxu0 0.0
    %187 = vmatpush1.msra.mxu0 0.0
    %188 = vmatprep.subr.mxu0 0.0
    %189 = vmatpush1.msra.mxu0 0.0
    %190 = vmatprep.subr.mxu0 0.0
    %191 = vmatpush1.msra.mxu0 0.0
    %192 = vmatprep.subr.mxu0 0.0
    %193 = vmatpush1.msra.mxu0 %v32
    %194 = vmatprep.subr.mxu0 0.0
    %195 = vmatpush1.msra.mxu0 %v31
    %196 = vmatprep.subr.mxu0 0.0
    %197 = vmatpush1.msra.mxu0 %v30
    %198 = vmatprep.subr.mxu0 0.0
    %199 = vmatpush1.msra.mxu0 %v29
    %200 = vmatprep.subr.mxu0 0.0
    %201 = vmatpush1.msra.mxu0 %v28
    %202 = vmatprep.subr.mxu0 0.0
    %203 = vmatpush1.msra.mxu0 %v27
    %204 = vmatprep.subr.mxu0 0.0
    %205 = vmatpush1.msra.mxu0 %v26
    %206 = vmatprep.subr.mxu0 0.0
    %207 = vmatpush1.msra.mxu0 %v25
    %208 = vmatprep.subr.mxu0 0.0
    %209 = vmatpush1.msra.mxu0 %v24
    %210 = vmatprep.subr.mxu0 0.0
    %211 = vmatpush1.msra.mxu0 %v23
    %212 = vmatprep.subr.mxu0 0.0
    %213 = vmatpush1.msra.mxu0 %v22
    %214 = vmatprep.subr.mxu0 0.0
    %215 = vmatpush1.msra.mxu0 %v21
    %216 = vmatprep.subr.mxu0 0.0
    %217 = vmatpush2.msra.mxu0 0.0
    %218 = vmatprep.subr.mxu0 0.0
    %219 = vmatpush2.msra.mxu0 0.0
    %220 = vmatprep.subr.mxu0 0.0
    %221 = vmatpush2.msra.mxu0 0.0
    %222 = vmatprep.subr.mxu0 0.0
    %223 = vmatpush2.msra.mxu0 0.0
    %224 = vmatprep.subr.mxu0 0.0
    %225 = vmatpush2.msra.mxu0 0.0
    %226 = vmatprep.subr.mxu0 0.0
    %227 = vmatpush2.msra.mxu0 0.0
    %228 = vmatprep.subr.mxu0 0.0
    %229 = vmatpush2.msra.mxu0 0.0
    %230 = vmatprep.subr.mxu0 0.0
    %231 = vmatpush2.msra.mxu0 0.0
    %232 = vmatprep.subr.mxu0 0.0
    %233 = vmatpush2.msra.mxu0 0.0
    %234 = vmatprep.subr.mxu0 0.0
    %235 = vmatpush2.msra.mxu0 0.0
    %236 = vmatprep.subr.mxu0 0.0
    %237 = vmatpush2.msra.mxu0 0.0
    %238 = vmatprep.subr.mxu0 0.0
    %239 = vmatpush2.msra.mxu0 0.0
    %240 = vmatprep.subr.mxu0 0.0
    %241 = vmatpush2.msra.mxu0 0.0
    %242 = vmatprep.subr.mxu0 0.0
    %243 = vmatpush2.msra.mxu0 0.0
    %244 = vmatprep.subr.mxu0 0.0
    %245 = vmatpush2.msra.mxu0 0.0
    %246 = vmatprep.subr.mxu0 0.0
    %247 = vmatpush2.msra.mxu0 0.0
    %248 = vmatprep.mubr.f32.mxu0 0.0
    %249 = vmatmul.mubr.f32.gmra.mxu0 %v182
    %v250 = vpop.f32.mrf.mxu0
    %v251 = vadd.f32 0.0, %v250
    %v252 = vpop.f32.mrf.mxu0
    %253 = vdwg.mxu0
    %255 = vrot.lane.b32.xlu0 %v154, 112
    %v256 = vpop.permute.xlu0 %255
    %v258 = vmax.f32 %v154, %v256
    %260 = vrot.lane.b32.xlu0 %v251, 112
    %v261 = vpop.permute.xlu0 %260
    %v263 = vmax.f32 %v251, %v261
    %v264 = vmax.f32 %v258, %v263
    %v266 = vlaneseq
    %v267 = vshrl.u32 %v266, 7
    %v268 = vsub.s32 0, %v267
    %v269 = vrot.slane %v45, %v268
    %v271 = vadd.f32 %v264, %v269
    %v272 = vmax.f32 %v271, 0.0
    %s273 = scalar_lea.vmem %s0, 16
    %v274 = vld [vmem:[%s273] sm:$0xf]
    %275 = vrot.lane.b32.xlu0 %v69, 16
    %v276 = vpop.permute.xlu0 %275
    %278 = vrot.lane.b32.xlu0 %v158, 32
    %v279 = vpop.permute.xlu0 %278
    %281 = vrot.lane.b32.xlu0 %v172, 48
    %v282 = vpop.permute.xlu0 %281
    %285 = vrot.lane.b32.xlu0 %v274, 64
    %v286 = vpop.permute.xlu0 %285
    %v288 = vrot.slane %v274, 1
    %289 = vrot.lane.b32.xlu0 %v288, 80
    %v290 = vpop.permute.xlu0 %289
    %v292 = vsel %vm73, %v51, %v276
    %v293 = vsel %vm75, %v292, %v279
    %v294 = vsel %vm77, %v293, %v282
    %v295 = vsel %vm79, %v294, %v286
    %v296 = vsel %vm81, %v295, %v290
    %v298 = vsel %vm83, %v296, 0
    %300 = vmatprep.subr.mxu0 0.0
    %301 = vmatpush1.msra.mxu0 0.0
    %302 = vmatprep.subr.mxu0 0.0
    %303 = vmatpush1.msra.mxu0 0.0
    %304 = vmatprep.subr.mxu0 0.0
    %305 = vmatpush1.msra.mxu0 0.0
    %306 = vmatprep.subr.mxu0 0.0
    %307 = vmatpush1.msra.mxu0 0.0
    %308 = vmatprep.subr.mxu0 0.0
    %309 = vmatpush1.msra.mxu0 %v32
    %310 = vmatprep.subr.mxu0 0.0
    %311 = vmatpush1.msra.mxu0 %v31
    %312 = vmatprep.subr.mxu0 0.0
    %313 = vmatpush1.msra.mxu0 %v30
    %314 = vmatprep.subr.mxu0 0.0
    %315 = vmatpush1.msra.mxu0 %v29
    %316 = vmatprep.subr.mxu0 0.0
    %317 = vmatpush1.msra.mxu0 %v28
    %318 = vmatprep.subr.mxu0 0.0
    %319 = vmatpush1.msra.mxu0 %v27
    %320 = vmatprep.subr.mxu0 0.0
    %321 = vmatpush1.msra.mxu0 %v26
    %322 = vmatprep.subr.mxu0 0.0
    %323 = vmatpush1.msra.mxu0 %v25
    %324 = vmatprep.subr.mxu0 0.0
    %325 = vmatpush1.msra.mxu0 %v24
    %326 = vmatprep.subr.mxu0 0.0
    %327 = vmatpush1.msra.mxu0 %v23
    %328 = vmatprep.subr.mxu0 0.0
    %329 = vmatpush1.msra.mxu0 %v22
    %330 = vmatprep.subr.mxu0 0.0
    %331 = vmatpush1.msra.mxu0 %v21
    %332 = vmatprep.subr.mxu0 0.0
    %333 = vmatpush2.msra.mxu0 0.0
    %334 = vmatprep.subr.mxu0 0.0
    %335 = vmatpush2.msra.mxu0 0.0
    %336 = vmatprep.subr.mxu0 0.0
    %337 = vmatpush2.msra.mxu0 0.0
    %338 = vmatprep.subr.mxu0 0.0
    %339 = vmatpush2.msra.mxu0 0.0
    %340 = vmatprep.subr.mxu0 0.0
    %341 = vmatpush2.msra.mxu0 0.0
    %342 = vmatprep.subr.mxu0 0.0
    %343 = vmatpush2.msra.mxu0 0.0
    %344 = vmatprep.subr.mxu0 0.0
    %345 = vmatpush2.msra.mxu0 0.0
    %346 = vmatprep.subr.mxu0 0.0
    %347 = vmatpush2.msra.mxu0 0.0
    %348 = vmatprep.subr.mxu0 0.0
    %349 = vmatpush2.msra.mxu0 0.0
    %350 = vmatprep.subr.mxu0 0.0
    %351 = vmatpush2.msra.mxu0 0.0
    %352 = vmatprep.subr.mxu0 0.0
    %353 = vmatpush2.msra.mxu0 0.0
    %354 = vmatprep.subr.mxu0 0.0
    %355 = vmatpush2.msra.mxu0 0.0
    %356 = vmatprep.subr.mxu0 0.0
    %357 = vmatpush2.msra.mxu0 0.0
    %358 = vmatprep.subr.mxu0 0.0
    %359 = vmatpush2.msra.mxu0 0.0
    %360 = vmatprep.subr.mxu0 0.0
    %361 = vmatpush2.msra.mxu0 0.0
    %362 = vmatprep.subr.mxu0 0.0
    %363 = vmatpush2.msra.mxu0 0.0
    %364 = vmatprep.mubr.f32.mxu0 0.0
    %365 = vmatmul.mubr.f32.gmra.mxu0 %v298
    %v366 = vpop.f32.mrf.mxu0
    %v367 = vadd.f32 0.0, %v366
    %v368 = vpop.f32.mrf.mxu0
    %369 = vdwg.mxu0
    %s370 = scalar_lea.vmem %s0, 20
    %v371 = vld [vmem:[%s370] sm:$0xf]
    %372 = vrot.lane.b32.xlu0 %v172, 16
    %v373 = vpop.permute.xlu0 %372
    %375 = vrot.lane.b32.xlu0 %v274, 32
    %v376 = vpop.permute.xlu0 %375
    %378 = vrot.lane.b32.xlu0 %v288, 48
    %v379 = vpop.permute.xlu0 %378
    %382 = vrot.lane.b32.xlu0 %v371, 64
    %v383 = vpop.permute.xlu0 %382
    %v385 = vrot.slane %v371, 1
    %386 = vrot.lane.b32.xlu0 %v385, 80
    %v387 = vpop.permute.xlu0 %386
    %v389 = vsel %vm73, %v158, %v373
    %v390 = vsel %vm75, %v389, %v376
    %v391 = vsel %vm77, %v390, %v379
    %v392 = vsel %vm79, %v391, %v383
    %v393 = vsel %vm81, %v392, %v387
    %v395 = vsel %vm83, %v393, 0
    %397 = vmatprep.subr.mxu0 0.0
    %398 = vmatpush1.msra.mxu0 0.0
    %399 = vmatprep.subr.mxu0 0.0
    %400 = vmatpush1.msra.mxu0 0.0
    %401 = vmatprep.subr.mxu0 0.0
    %402 = vmatpush1.msra.mxu0 0.0
    %403 = vmatprep.subr.mxu0 0.0
    %404 = vmatpush1.msra.mxu0 0.0
    %405 = vmatprep.subr.mxu0 0.0
    %406 = vmatpush1.msra.mxu0 %v32
    %407 = vmatprep.subr.mxu0 0.0
    %408 = vmatpush1.msra.mxu0 %v31
    %409 = vmatprep.subr.mxu0 0.0
    %410 = vmatpush1.msra.mxu0 %v30
    %411 = vmatprep.subr.mxu0 0.0
    %412 = vmatpush1.msra.mxu0 %v29
    %413 = vmatprep.subr.mxu0 0.0
    %414 = vmatpush1.msra.mxu0 %v28
    %415 = vmatprep.subr.mxu0 0.0
    %416 = vmatpush1.msra.mxu0 %v27
    %417 = vmatprep.subr.mxu0 0.0
    %418 = vmatpush1.msra.mxu0 %v26
    %419 = vmatprep.subr.mxu0 0.0
    %420 = vmatpush1.msra.mxu0 %v25
    %421 = vmatprep.subr.mxu0 0.0
    %422 = vmatpush1.msra.mxu0 %v24
    %423 = vmatprep.subr.mxu0 0.0
    %424 = vmatpush1.msra.mxu0 %v23
    %425 = vmatprep.subr.mxu0 0.0
    %426 = vmatpush1.msra.mxu0 %v22
    %427 = vmatprep.subr.mxu0 0.0
    %428 = vmatpush1.msra.mxu0 %v21
    %429 = vmatprep.subr.mxu0 0.0
    %430 = vmatpush2.msra.mxu0 0.0
    %431 = vmatprep.subr.mxu0 0.0
    %432 = vmatpush2.msra.mxu0 0.0
    %433 = vmatprep.subr.mxu0 0.0
    %434 = vmatpush2.msra.mxu0 0.0
    %435 = vmatprep.subr.mxu0 0.0
    %436 = vmatpush2.msra.mxu0 0.0
    %437 = vmatprep.subr.mxu0 0.0
    %438 = vmatpush2.msra.mxu0 0.0
    %439 = vmatprep.subr.mxu0 0.0
    %440 = vmatpush2.msra.mxu0 0.0
    %441 = vmatprep.subr.mxu0 0.0
    %442 = vmatpush2.msra.mxu0 0.0
    %443 = vmatprep.subr.mxu0 0.0
    %444 = vmatpush2.msra.mxu0 0.0
    %445 = vmatprep.subr.mxu0 0.0
    %446 = vmatpush2.msra.mxu0 0.0
    %447 = vmatprep.subr.mxu0 0.0
    %448 = vmatpush2.msra.mxu0 0.0
    %449 = vmatprep.subr.mxu0 0.0
    %450 = vmatpush2.msra.mxu0 0.0
    %451 = vmatprep.subr.mxu0 0.0
    %452 = vmatpush2.msra.mxu0 0.0
    %453 = vmatprep.subr.mxu0 0.0
    %454 = vmatpush2.msra.mxu0 0.0
    %455 = vmatprep.subr.mxu0 0.0
    %456 = vmatpush2.msra.mxu0 0.0
    %457 = vmatprep.subr.mxu0 0.0
    %458 = vmatpush2.msra.mxu0 0.0
    %459 = vmatprep.subr.mxu0 0.0
    %460 = vmatpush2.msra.mxu0 0.0
    %461 = vmatprep.mubr.f32.mxu0 0.0
    %462 = vmatmul.mubr.f32.gmra.mxu0 %v395
    %v463 = vpop.f32.mrf.mxu0
    %v464 = vadd.f32 0.0, %v463
    %v465 = vpop.f32.mrf.mxu0
    %466 = vdwg.mxu0
    %468 = vrot.lane.b32.xlu0 %v367, 112
    %v469 = vpop.permute.xlu0 %468
    %v471 = vmax.f32 %v367, %v469
    %473 = vrot.lane.b32.xlu0 %v464, 112
    %v474 = vpop.permute.xlu0 %473
    %v476 = vmax.f32 %v464, %v474
    %v477 = vmax.f32 %v471, %v476
    %v478 = vadd.f32 %v477, %v269
    %v479 = vmax.f32 %v478, 0.0
    %s480 = scalar_lea.vmem %s0, 24
    %v481 = vld [vmem:[%s480] sm:$0xf]
    %482 = vrot.lane.b32.xlu0 %v288, 16
    %v483 = vpop.permute.xlu0 %482
    %485 = vrot.lane.b32.xlu0 %v371, 32
    %v486 = vpop.permute.xlu0 %485
    %488 = vrot.lane.b32.xlu0 %v385, 48
    %v489 = vpop.permute.xlu0 %488
    %492 = vrot.lane.b32.xlu0 %v481, 64
    %v493 = vpop.permute.xlu0 %492
    %v495 = vrot.slane %v481, 1
    %496 = vrot.lane.b32.xlu0 %v495, 80
    %v497 = vpop.permute.xlu0 %496
    %v499 = vsel %vm73, %v274, %v483
    %v500 = vsel %vm75, %v499, %v486
    %v501 = vsel %vm77, %v500, %v489
    %v502 = vsel %vm79, %v501, %v493
    %v503 = vsel %vm81, %v502, %v497
    %v505 = vsel %vm83, %v503, 0
    %507 = vmatprep.subr.mxu0 0.0
    %508 = vmatpush1.msra.mxu0 0.0
    %509 = vmatprep.subr.mxu0 0.0
    %510 = vmatpush1.msra.mxu0 0.0
    %511 = vmatprep.subr.mxu0 0.0
    %512 = vmatpush1.msra.mxu0 0.0
    %513 = vmatprep.subr.mxu0 0.0
    %514 = vmatpush1.msra.mxu0 0.0
    %515 = vmatprep.subr.mxu0 0.0
    %516 = vmatpush1.msra.mxu0 %v32
    %517 = vmatprep.subr.mxu0 0.0
    %518 = vmatpush1.msra.mxu0 %v31
    %519 = vmatprep.subr.mxu0 0.0
    %520 = vmatpush1.msra.mxu0 %v30
    %521 = vmatprep.subr.mxu0 0.0
    %522 = vmatpush1.msra.mxu0 %v29
    %523 = vmatprep.subr.mxu0 0.0
    %524 = vmatpush1.msra.mxu0 %v28
    %525 = vmatprep.subr.mxu0 0.0
    %526 = vmatpush1.msra.mxu0 %v27
    %527 = vmatprep.subr.mxu0 0.0
    %528 = vmatpush1.msra.mxu0 %v26
    %529 = vmatprep.subr.mxu0 0.0
    %530 = vmatpush1.msra.mxu0 %v25
    %531 = vmatprep.subr.mxu0 0.0
    %532 = vmatpush1.msra.mxu0 %v24
    %533 = vmatprep.subr.mxu0 0.0
    %534 = vmatpush1.msra.mxu0 %v23
    %535 = vmatprep.subr.mxu0 0.0
    %536 = vmatpush1.msra.mxu0 %v22
    %537 = vmatprep.subr.mxu0 0.0
    %538 = vmatpush1.msra.mxu0 %v21
    %539 = vmatprep.subr.mxu0 0.0
    %540 = vmatpush2.msra.mxu0 0.0
    %541 = vmatprep.subr.mxu0 0.0
    %542 = vmatpush2.msra.mxu0 0.0
    %543 = vmatprep.subr.mxu0 0.0
    %544 = vmatpush2.msra.mxu0 0.0
    %545 = vmatprep.subr.mxu0 0.0
    %546 = vmatpush2.msra.mxu0 0.0
    %547 = vmatprep.subr.mxu0 0.0
    %548 = vmatpush2.msra.mxu0 0.0
    %549 = vmatprep.subr.mxu0 0.0
    %550 = vmatpush2.msra.mxu0 0.0
    %551 = vmatprep.subr.mxu0 0.0
    %552 = vmatpush2.msra.mxu0 0.0
    %553 = vmatprep.subr.mxu0 0.0
    %554 = vmatpush2.msra.mxu0 0.0
    %555 = vmatprep.subr.mxu0 0.0
    %556 = vmatpush2.msra.mxu0 0.0
    %557 = vmatprep.subr.mxu0 0.0
    %558 = vmatpush2.msra.mxu0 0.0
    %559 = vmatprep.subr.mxu0 0.0
    %560 = vmatpush2.msra.mxu0 0.0
    %561 = vmatprep.subr.mxu0 0.0
    %562 = vmatpush2.msra.mxu0 0.0
    %563 = vmatprep.subr.mxu0 0.0
    %564 = vmatpush2.msra.mxu0 0.0
    %565 = vmatprep.subr.mxu0 0.0
    %566 = vmatpush2.msra.mxu0 0.0
    %567 = vmatprep.subr.mxu0 0.0
    %568 = vmatpush2.msra.mxu0 0.0
    %569 = vmatprep.subr.mxu0 0.0
    %570 = vmatpush2.msra.mxu0 0.0
    %571 = vmatprep.mubr.f32.mxu0 0.0
    %572 = vmatmul.mubr.f32.gmra.mxu0 %v505
    %v573 = vpop.f32.mrf.mxu0
    %v574 = vadd.f32 0.0, %v573
    %v575 = vpop.f32.mrf.mxu0
    %576 = vdwg.mxu0
    %s577 = scalar_lea.vmem %s0, 28
    %v578 = vld [vmem:[%s577] sm:$0xf]
    %579 = vrot.lane.b32.xlu0 %v385, 16
    %v580 = vpop.permute.xlu0 %579
    %582 = vrot.lane.b32.xlu0 %v481, 32
    %v583 = vpop.permute.xlu0 %582
    %585 = vrot.lane.b32.xlu0 %v495, 48
    %v586 = vpop.permute.xlu0 %585
    %589 = vrot.lane.b32.xlu0 %v578, 64
    %v590 = vpop.permute.xlu0 %589
    %v592 = vrot.slane %v578, 1
    %593 = vrot.lane.b32.xlu0 %v592, 80
    %v594 = vpop.permute.xlu0 %593
    %v596 = vsel %vm73, %v371, %v580
    %v597 = vsel %vm75, %v596, %v583
    %v598 = vsel %vm77, %v597, %v586
    %v599 = vsel %vm79, %v598, %v590
    %v600 = vsel %vm81, %v599, %v594
    %v602 = vsel %vm83, %v600, 0
    %604 = vmatprep.subr.mxu0 0.0
    %605 = vmatpush1.msra.mxu0 0.0
    %606 = vmatprep.subr.mxu0 0.0
    %607 = vmatpush1.msra.mxu0 0.0
    %608 = vmatprep.subr.mxu0 0.0
    %609 = vmatpush1.msra.mxu0 0.0
    %610 = vmatprep.subr.mxu0 0.0
    %611 = vmatpush1.msra.mxu0 0.0
    %612 = vmatprep.subr.mxu0 0.0
    %613 = vmatpush1.msra.mxu0 %v32
    %614 = vmatprep.subr.mxu0 0.0
    %615 = vmatpush1.msra.mxu0 %v31
    %616 = vmatprep.subr.mxu0 0.0
    %617 = vmatpush1.msra.mxu0 %v30
    %618 = vmatprep.subr.mxu0 0.0
    %619 = vmatpush1.msra.mxu0 %v29
    %620 = vmatprep.subr.mxu0 0.0
    %621 = vmatpush1.msra.mxu0 %v28
    %622 = vmatprep.subr.mxu0 0.0
    %623 = vmatpush1.msra.mxu0 %v27
    %624 = vmatprep.subr.mxu0 0.0
    %625 = vmatpush1.msra.mxu0 %v26
    %626 = vmatprep.subr.mxu0 0.0
    %627 = vmatpush1.msra.mxu0 %v25
    %628 = vmatprep.subr.mxu0 0.0
    %629 = vmatpush1.msra.mxu0 %v24
    %630 = vmatprep.subr.mxu0 0.0
    %631 = vmatpush1.msra.mxu0 %v23
    %632 = vmatprep.subr.mxu0 0.0
    %633 = vmatpush1.msra.mxu0 %v22
    %634 = vmatprep.subr.mxu0 0.0
    %635 = vmatpush1.msra.mxu0 %v21
    %636 = vmatprep.subr.mxu0 0.0
    %637 = vmatpush2.msra.mxu0 0.0
    %638 = vmatprep.subr.mxu0 0.0
    %639 = vmatpush2.msra.mxu0 0.0
    %640 = vmatprep.subr.mxu0 0.0
    %641 = vmatpush2.msra.mxu0 0.0
    %642 = vmatprep.subr.mxu0 0.0
    %643 = vmatpush2.msra.mxu0 0.0
    %644 = vmatprep.subr.mxu0 0.0
    %645 = vmatpush2.msra.mxu0 0.0
    %646 = vmatprep.subr.mxu0 0.0
    %647 = vmatpush2.msra.mxu0 0.0
    %648 = vmatprep.subr.mxu0 0.0
    %649 = vmatpush2.msra.mxu0 0.0
    %650 = vmatprep.subr.mxu0 0.0
    %651 = vmatpush2.msra.mxu0 0.0
    %652 = vmatprep.subr.mxu0 0.0
    %653 = vmatpush2.msra.mxu0 0.0
    %654 = vmatprep.subr.mxu0 0.0
    %655 = vmatpush2.msra.mxu0 0.0
    %656 = vmatprep.subr.mxu0 0.0
    %657 = vmatpush2.msra.mxu0 0.0
    %658 = vmatprep.subr.mxu0 0.0
    %659 = vmatpush2.msra.mxu0 0.0
    %660 = vmatprep.subr.mxu0 0.0
    %661 = vmatpush2.msra.mxu0 0.0
    %662 = vmatprep.subr.mxu0 0.0
    %663 = vmatpush2.msra.mxu0 0.0
    %664 = vmatprep.subr.mxu0 0.0
    %665 = vmatpush2.msra.mxu0 0.0
    %666 = vmatprep.subr.mxu0 0.0
    %667 = vmatpush2.msra.mxu0 0.0
    %668 = vmatprep.mubr.f32.mxu0 0.0
    %669 = vmatmul.mubr.f32.gmra.mxu0 %v602
    %v670 = vpop.f32.mrf.mxu0
    %v671 = vadd.f32 0.0, %v670
    %v672 = vpop.f32.mrf.mxu0
    %673 = vdwg.mxu0
    %675 = vrot.lane.b32.xlu0 %v574, 112
    %v676 = vpop.permute.xlu0 %675
    %v678 = vmax.f32 %v574, %v676
    %680 = vrot.lane.b32.xlu0 %v671, 112
    %v681 = vpop.permute.xlu0 %680
    %v683 = vmax.f32 %v671, %v681
    %v684 = vmax.f32 %v678, %v683
    %v685 = vadd.f32 %v684, %v269
    %v686 = vmax.f32 %v685, 0.0
    %s687 = scalar_lea.vmem %s0, 32
    %v688 = vld [vmem:[%s687] sm:$0xf]
    %689 = vrot.lane.b32.xlu0 %v495, 16
    %v690 = vpop.permute.xlu0 %689
    %692 = vrot.lane.b32.xlu0 %v578, 32
    %v693 = vpop.permute.xlu0 %692
    %695 = vrot.lane.b32.xlu0 %v592, 48
    %v696 = vpop.permute.xlu0 %695
    %699 = vrot.lane.b32.xlu0 %v688, 64
    %v700 = vpop.permute.xlu0 %699
    %v702 = vrot.slane %v688, 1
    %703 = vrot.lane.b32.xlu0 %v702, 80
    %v704 = vpop.permute.xlu0 %703
    %v706 = vsel %vm73, %v481, %v690
    %v707 = vsel %vm75, %v706, %v693
    %v708 = vsel %vm77, %v707, %v696
    %v709 = vsel %vm79, %v708, %v700
    %v710 = vsel %vm81, %v709, %v704
    %v712 = vsel %vm83, %v710, 0
    %714 = vmatprep.subr.mxu0 0.0
    %715 = vmatpush1.msra.mxu0 0.0
    %716 = vmatprep.subr.mxu0 0.0
    %717 = vmatpush1.msra.mxu0 0.0
    %718 = vmatprep.subr.mxu0 0.0
    %719 = vmatpush1.msra.mxu0 0.0
    %720 = vmatprep.subr.mxu0 0.0
    %721 = vmatpush1.msra.mxu0 0.0
    %722 = vmatprep.subr.mxu0 0.0
    %723 = vmatpush1.msra.mxu0 %v32
    %724 = vmatprep.subr.mxu0 0.0
    %725 = vmatpush1.msra.mxu0 %v31
    %726 = vmatprep.subr.mxu0 0.0
    %727 = vmatpush1.msra.mxu0 %v30
    %728 = vmatprep.subr.mxu0 0.0
    %729 = vmatpush1.msra.mxu0 %v29
    %730 = vmatprep.subr.mxu0 0.0
    %731 = vmatpush1.msra.mxu0 %v28
    %732 = vmatprep.subr.mxu0 0.0
    %733 = vmatpush1.msra.mxu0 %v27
    %734 = vmatprep.subr.mxu0 0.0
    %735 = vmatpush1.msra.mxu0 %v26
    %736 = vmatprep.subr.mxu0 0.0
    %737 = vmatpush1.msra.mxu0 %v25
    %738 = vmatprep.subr.mxu0 0.0
    %739 = vmatpush1.msra.mxu0 %v24
    %740 = vmatprep.subr.mxu0 0.0
    %741 = vmatpush1.msra.mxu0 %v23
    %742 = vmatprep.subr.mxu0 0.0
    %743 = vmatpush1.msra.mxu0 %v22
    %744 = vmatprep.subr.mxu0 0.0
    %745 = vmatpush1.msra.mxu0 %v21
    %746 = vmatprep.subr.mxu0 0.0
    %747 = vmatpush2.msra.mxu0 0.0
    %748 = vmatprep.subr.mxu0 0.0
    %749 = vmatpush2.msra.mxu0 0.0
    %750 = vmatprep.subr.mxu0 0.0
    %751 = vmatpush2.msra.mxu0 0.0
    %752 = vmatprep.subr.mxu0 0.0
    %753 = vmatpush2.msra.mxu0 0.0
    %754 = vmatprep.subr.mxu0 0.0
    %755 = vmatpush2.msra.mxu0 0.0
    %756 = vmatprep.subr.mxu0 0.0
    %757 = vmatpush2.msra.mxu0 0.0
    %758 = vmatprep.subr.mxu0 0.0
    %759 = vmatpush2.msra.mxu0 0.0
    %760 = vmatprep.subr.mxu0 0.0
    %761 = vmatpush2.msra.mxu0 0.0
    %762 = vmatprep.subr.mxu0 0.0
    %763 = vmatpush2.msra.mxu0 0.0
    %764 = vmatprep.subr.mxu0 0.0
    %765 = vmatpush2.msra.mxu0 0.0
    %766 = vmatprep.subr.mxu0 0.0
    %767 = vmatpush2.msra.mxu0 0.0
    %768 = vmatprep.subr.mxu0 0.0
    %769 = vmatpush2.msra.mxu0 0.0
    %770 = vmatprep.subr.mxu0 0.0
    %771 = vmatpush2.msra.mxu0 0.0
    %772 = vmatprep.subr.mxu0 0.0
    %773 = vmatpush2.msra.mxu0 0.0
    %774 = vmatprep.subr.mxu0 0.0
    %775 = vmatpush2.msra.mxu0 0.0
    %776 = vmatprep.subr.mxu0 0.0
    %777 = vmatpush2.msra.mxu0 0.0
    %778 = vmatprep.mubr.f32.mxu0 0.0
    %779 = vmatmul.mubr.f32.gmra.mxu0 %v712
    %v780 = vpop.f32.mrf.mxu0
    %v781 = vadd.f32 0.0, %v780
    %v782 = vpop.f32.mrf.mxu0
    %783 = vdwg.mxu0
    %s784 = scalar_lea.vmem %s0, 36
    %v785 = vld [vmem:[%s784] sm:$0xf]
    %786 = vrot.lane.b32.xlu0 %v592, 16
    %v787 = vpop.permute.xlu0 %786
    %789 = vrot.lane.b32.xlu0 %v688, 32
    %v790 = vpop.permute.xlu0 %789
    %792 = vrot.lane.b32.xlu0 %v702, 48
    %v793 = vpop.permute.xlu0 %792
    %796 = vrot.lane.b32.xlu0 %v785, 64
    %v797 = vpop.permute.xlu0 %796
    %v799 = vrot.slane %v785, 1
    %800 = vrot.lane.b32.xlu0 %v799, 80
    %v801 = vpop.permute.xlu0 %800
    %v803 = vsel %vm73, %v578, %v787
    %v804 = vsel %vm75, %v803, %v790
    %v805 = vsel %vm77, %v804, %v793
    %v806 = vsel %vm79, %v805, %v797
    %v807 = vsel %vm81, %v806, %v801
    %v809 = vsel %vm83, %v807, 0
    %811 = vmatprep.subr.mxu0 0.0
    %812 = vmatpush1.msra.mxu0 0.0
    %813 = vmatprep.subr.mxu0 0.0
    %814 = vmatpush1.msra.mxu0 0.0
    %815 = vmatprep.subr.mxu0 0.0
    %816 = vmatpush1.msra.mxu0 0.0
    %817 = vmatprep.subr.mxu0 0.0
    %818 = vmatpush1.msra.mxu0 0.0
    %819 = vmatprep.subr.mxu0 0.0
    %820 = vmatpush1.msra.mxu0 %v32
    %821 = vmatprep.subr.mxu0 0.0
    %822 = vmatpush1.msra.mxu0 %v31
    %823 = vmatprep.subr.mxu0 0.0
    %824 = vmatpush1.msra.mxu0 %v30
    %825 = vmatprep.subr.mxu0 0.0
    %826 = vmatpush1.msra.mxu0 %v29
    %827 = vmatprep.subr.mxu0 0.0
    %828 = vmatpush1.msra.mxu0 %v28
    %829 = vmatprep.subr.mxu0 0.0
    %830 = vmatpush1.msra.mxu0 %v27
    %831 = vmatprep.subr.mxu0 0.0
    %832 = vmatpush1.msra.mxu0 %v26
    %833 = vmatprep.subr.mxu0 0.0
    %834 = vmatpush1.msra.mxu0 %v25
    %835 = vmatprep.subr.mxu0 0.0
    %836 = vmatpush1.msra.mxu0 %v24
    %837 = vmatprep.subr.mxu0 0.0
    %838 = vmatpush1.msra.mxu0 %v23
    %839 = vmatprep.subr.mxu0 0.0
    %840 = vmatpush1.msra.mxu0 %v22
    %841 = vmatprep.subr.mxu0 0.0
    %842 = vmatpush1.msra.mxu0 %v21
    %843 = vmatprep.subr.mxu0 0.0
    %844 = vmatpush2.msra.mxu0 0.0
    %845 = vmatprep.subr.mxu0 0.0
    %846 = vmatpush2.msra.mxu0 0.0
    %847 = vmatprep.subr.mxu0 0.0
    %848 = vmatpush2.msra.mxu0 0.0
    %849 = vmatprep.subr.mxu0 0.0
    %850 = vmatpush2.msra.mxu0 0.0
    %851 = vmatprep.subr.mxu0 0.0
    %852 = vmatpush2.msra.mxu0 0.0
    %853 = vmatprep.subr.mxu0 0.0
    %854 = vmatpush2.msra.mxu0 0.0
    %855 = vmatprep.subr.mxu0 0.0
    %856 = vmatpush2.msra.mxu0 0.0
    %857 = vmatprep.subr.mxu0 0.0
    %858 = vmatpush2.msra.mxu0 0.0
    %859 = vmatprep.subr.mxu0 0.0
    %860 = vmatpush2.msra.mxu0 0.0
    %861 = vmatprep.subr.mxu0 0.0
    %862 = vmatpush2.msra.mxu0 0.0
    %863 = vmatprep.subr.mxu0 0.0
    %864 = vmatpush2.msra.mxu0 0.0
    %865 = vmatprep.subr.mxu0 0.0
    %866 = vmatpush2.msra.mxu0 0.0
    %867 = vmatprep.subr.mxu0 0.0
    %868 = vmatpush2.msra.mxu0 0.0
    %869 = vmatprep.subr.mxu0 0.0
    %870 = vmatpush2.msra.mxu0 0.0
    %871 = vmatprep.subr.mxu0 0.0
    %872 = vmatpush2.msra.mxu0 0.0
    %873 = vmatprep.subr.mxu0 0.0
    %874 = vmatpush2.msra.mxu0 0.0
    %875 = vmatprep.mubr.f32.mxu0 0.0
    %876 = vmatmul.mubr.f32.gmra.mxu0 %v809
    %v877 = vpop.f32.mrf.mxu0
    %v878 = vadd.f32 0.0, %v877
    %v879 = vpop.f32.mrf.mxu0
    %880 = vdwg.mxu0
    %882 = vrot.lane.b32.xlu0 %v781, 112
    %v883 = vpop.permute.xlu0 %882
    %v885 = vmax.f32 %v781, %v883
    %887 = vrot.lane.b32.xlu0 %v878, 112
    %v888 = vpop.permute.xlu0 %887
    %v890 = vmax.f32 %v878, %v888
    %v891 = vmax.f32 %v885, %v890
    %v892 = vadd.f32 %v891, %v269
    %v893 = vmax.f32 %v892, 0.0
    %s894 = scalar_lea.vmem %s0, 40
    %v895 = vld [vmem:[%s894] sm:$0xf]
    %896 = vrot.lane.b32.xlu0 %v702, 16
    %v897 = vpop.permute.xlu0 %896
    %899 = vrot.lane.b32.xlu0 %v785, 32
    %v900 = vpop.permute.xlu0 %899
    %902 = vrot.lane.b32.xlu0 %v799, 48
    %v903 = vpop.permute.xlu0 %902
    %906 = vrot.lane.b32.xlu0 %v895, 64
    %v907 = vpop.permute.xlu0 %906
    %v909 = vrot.slane %v895, 1
    %910 = vrot.lane.b32.xlu0 %v909, 80
    %v911 = vpop.permute.xlu0 %910
    %v913 = vsel %vm73, %v688, %v897
    %v914 = vsel %vm75, %v913, %v900
    %v915 = vsel %vm77, %v914, %v903
    %v916 = vsel %vm79, %v915, %v907
    %v917 = vsel %vm81, %v916, %v911
    %v919 = vsel %vm83, %v917, 0
    %921 = vmatprep.subr.mxu0 0.0
    %922 = vmatpush1.msra.mxu0 0.0
    %923 = vmatprep.subr.mxu0 0.0
    %924 = vmatpush1.msra.mxu0 0.0
    %925 = vmatprep.subr.mxu0 0.0
    %926 = vmatpush1.msra.mxu0 0.0
    %927 = vmatprep.subr.mxu0 0.0
    %928 = vmatpush1.msra.mxu0 0.0
    %929 = vmatprep.subr.mxu0 0.0
    %930 = vmatpush1.msra.mxu0 %v32
    %931 = vmatprep.subr.mxu0 0.0
    %932 = vmatpush1.msra.mxu0 %v31
    %933 = vmatprep.subr.mxu0 0.0
    %934 = vmatpush1.msra.mxu0 %v30
    %935 = vmatprep.subr.mxu0 0.0
    %936 = vmatpush1.msra.mxu0 %v29
    %937 = vmatprep.subr.mxu0 0.0
    %938 = vmatpush1.msra.mxu0 %v28
    %939 = vmatprep.subr.mxu0 0.0
    %940 = vmatpush1.msra.mxu0 %v27
    %941 = vmatprep.subr.mxu0 0.0
    %942 = vmatpush1.msra.mxu0 %v26
    %943 = vmatprep.subr.mxu0 0.0
    %944 = vmatpush1.msra.mxu0 %v25
    %945 = vmatprep.subr.mxu0 0.0
    %946 = vmatpush1.msra.mxu0 %v24
    %947 = vmatprep.subr.mxu0 0.0
    %948 = vmatpush1.msra.mxu0 %v23
    %949 = vmatprep.subr.mxu0 0.0
    %950 = vmatpush1.msra.mxu0 %v22
    %951 = vmatprep.subr.mxu0 0.0
    %952 = vmatpush1.msra.mxu0 %v21
    %953 = vmatprep.subr.mxu0 0.0
    %954 = vmatpush2.msra.mxu0 0.0
    %955 = vmatprep.subr.mxu0 0.0
    %956 = vmatpush2.msra.mxu0 0.0
    %957 = vmatprep.subr.mxu0 0.0
    %958 = vmatpush2.msra.mxu0 0.0
    %959 = vmatprep.subr.mxu0 0.0
    %960 = vmatpush2.msra.mxu0 0.0
    %961 = vmatprep.subr.mxu0 0.0
    %962 = vmatpush2.msra.mxu0 0.0
    %963 = vmatprep.subr.mxu0 0.0
    %964 = vmatpush2.msra.mxu0 0.0
    %965 = vmatprep.subr.mxu0 0.0
    %966 = vmatpush2.msra.mxu0 0.0
    %967 = vmatprep.subr.mxu0 0.0
    %968 = vmatpush2.msra.mxu0 0.0
    %969 = vmatprep.subr.mxu0 0.0
    %970 = vmatpush2.msra.mxu0 0.0
    %971 = vmatprep.subr.mxu0 0.0
    %972 = vmatpush2.msra.mxu0 0.0
    %973 = vmatprep.subr.mxu0 0.0
    %974 = vmatpush2.msra.mxu0 0.0
    %975 = vmatprep.subr.mxu0 0.0
    %976 = vmatpush2.msra.mxu0 0.0
    %977 = vmatprep.subr.mxu0 0.0
    %978 = vmatpush2.msra.mxu0 0.0
    %979 = vmatprep.subr.mxu0 0.0
    %980 = vmatpush2.msra.mxu0 0.0
    %981 = vmatprep.subr.mxu0 0.0
    %982 = vmatpush2.msra.mxu0 0.0
    %983 = vmatprep.subr.mxu0 0.0
    %984 = vmatpush2.msra.mxu0 0.0
    %985 = vmatprep.mubr.f32.mxu0 0.0
    %986 = vmatmul.mubr.f32.gmra.mxu0 %v919
    %v987 = vpop.f32.mrf.mxu0
    %v988 = vadd.f32 0.0, %v987
    %v989 = vpop.f32.mrf.mxu0
    %990 = vdwg.mxu0
    %s991 = scalar_lea.vmem %s0, 44
    %v992 = vld [vmem:[%s991] sm:$0xf]
    %993 = vrot.lane.b32.xlu0 %v799, 16
    %v994 = vpop.permute.xlu0 %993
    %996 = vrot.lane.b32.xlu0 %v895, 32
    %v997 = vpop.permute.xlu0 %996
    %999 = vrot.lane.b32.xlu0 %v909, 48
    %v1000 = vpop.permute.xlu0 %999
    %1003 = vrot.lane.b32.xlu0 %v992, 64
    %v1004 = vpop.permute.xlu0 %1003
    %v1006 = vrot.slane %v992, 1
    %1007 = vrot.lane.b32.xlu0 %v1006, 80
    %v1008 = vpop.permute.xlu0 %1007
    %v1010 = vsel %vm73, %v785, %v994
    %v1011 = vsel %vm75, %v1010, %v997
    %v1012 = vsel %vm77, %v1011, %v1000
    %v1013 = vsel %vm79, %v1012, %v1004
    %v1014 = vsel %vm81, %v1013, %v1008
    %v1016 = vsel %vm83, %v1014, 0
    %1018 = vmatprep.subr.mxu0 0.0
    %1019 = vmatpush1.msra.mxu0 0.0
    %1020 = vmatprep.subr.mxu0 0.0
    %1021 = vmatpush1.msra.mxu0 0.0
    %1022 = vmatprep.subr.mxu0 0.0
    %1023 = vmatpush1.msra.mxu0 0.0
    %1024 = vmatprep.subr.mxu0 0.0
    %1025 = vmatpush1.msra.mxu0 0.0
    %1026 = vmatprep.subr.mxu0 0.0
    %1027 = vmatpush1.msra.mxu0 %v32
    %1028 = vmatprep.subr.mxu0 0.0
    %1029 = vmatpush1.msra.mxu0 %v31
    %1030 = vmatprep.subr.mxu0 0.0
    %1031 = vmatpush1.msra.mxu0 %v30
    %1032 = vmatprep.subr.mxu0 0.0
    %1033 = vmatpush1.msra.mxu0 %v29
    %1034 = vmatprep.subr.mxu0 0.0
    %1035 = vmatpush1.msra.mxu0 %v28
    %1036 = vmatprep.subr.mxu0 0.0
    %1037 = vmatpush1.msra.mxu0 %v27
    %1038 = vmatprep.subr.mxu0 0.0
    %1039 = vmatpush1.msra.mxu0 %v26
    %1040 = vmatprep.subr.mxu0 0.0
    %1041 = vmatpush1.msra.mxu0 %v25
    %1042 = vmatprep.subr.mxu0 0.0
    %1043 = vmatpush1.msra.mxu0 %v24
    %1044 = vmatprep.subr.mxu0 0.0
    %1045 = vmatpush1.msra.mxu0 %v23
    %1046 = vmatprep.subr.mxu0 0.0
    %1047 = vmatpush1.msra.mxu0 %v22
    %1048 = vmatprep.subr.mxu0 0.0
    %1049 = vmatpush1.msra.mxu0 %v21
    %1050 = vmatprep.subr.mxu0 0.0
    %1051 = vmatpush2.msra.mxu0 0.0
    %1052 = vmatprep.subr.mxu0 0.0
    %1053 = vmatpush2.msra.mxu0 0.0
    %1054 = vmatprep.subr.mxu0 0.0
    %1055 = vmatpush2.msra.mxu0 0.0
    %1056 = vmatprep.subr.mxu0 0.0
    %1057 = vmatpush2.msra.mxu0 0.0
    %1058 = vmatprep.subr.mxu0 0.0
    %1059 = vmatpush2.msra.mxu0 0.0
    %1060 = vmatprep.subr.mxu0 0.0
    %1061 = vmatpush2.msra.mxu0 0.0
    %1062 = vmatprep.subr.mxu0 0.0
    %1063 = vmatpush2.msra.mxu0 0.0
    %1064 = vmatprep.subr.mxu0 0.0
    %1065 = vmatpush2.msra.mxu0 0.0
    %1066 = vmatprep.subr.mxu0 0.0
    %1067 = vmatpush2.msra.mxu0 0.0
    %1068 = vmatprep.subr.mxu0 0.0
    %1069 = vmatpush2.msra.mxu0 0.0
    %1070 = vmatprep.subr.mxu0 0.0
    %1071 = vmatpush2.msra.mxu0 0.0
    %1072 = vmatprep.subr.mxu0 0.0
    %1073 = vmatpush2.msra.mxu0 0.0
    %1074 = vmatprep.subr.mxu0 0.0
    %1075 = vmatpush2.msra.mxu0 0.0
    %1076 = vmatprep.subr.mxu0 0.0
    %1077 = vmatpush2.msra.mxu0 0.0
    %1078 = vmatprep.subr.mxu0 0.0
    %1079 = vmatpush2.msra.mxu0 0.0
    %1080 = vmatprep.subr.mxu0 0.0
    %1081 = vmatpush2.msra.mxu0 0.0
    %1082 = vmatprep.mubr.f32.mxu0 0.0
    %1083 = vmatmul.mubr.f32.gmra.mxu0 %v1016
    %v1084 = vpop.f32.mrf.mxu0
    %v1085 = vadd.f32 0.0, %v1084
    %v1086 = vpop.f32.mrf.mxu0
    %1087 = vdwg.mxu0
    %1089 = vrot.lane.b32.xlu0 %v988, 112
    %v1090 = vpop.permute.xlu0 %1089
    %v1092 = vmax.f32 %v988, %v1090
    %1094 = vrot.lane.b32.xlu0 %v1085, 112
    %v1095 = vpop.permute.xlu0 %1094
    %v1097 = vmax.f32 %v1085, %v1095
    %v1098 = vmax.f32 %v1092, %v1097
    %v1099 = vadd.f32 %v1098, %v269
    %v1100 = vmax.f32 %v1099, 0.0
    %s1101 = scalar_lea.vmem %s0, 48
    %v1102 = vld [vmem:[%s1101] sm:$0xf]
    %1103 = vrot.lane.b32.xlu0 %v909, 16
    %v1104 = vpop.permute.xlu0 %1103
    %1106 = vrot.lane.b32.xlu0 %v992, 32
    %v1107 = vpop.permute.xlu0 %1106
    %1109 = vrot.lane.b32.xlu0 %v1006, 48
    %v1110 = vpop.permute.xlu0 %1109
    %1113 = vrot.lane.b32.xlu0 %v1102, 64
    %v1114 = vpop.permute.xlu0 %1113
    %v1116 = vrot.slane %v1102, 1
    %1117 = vrot.lane.b32.xlu0 %v1116, 80
    %v1118 = vpop.permute.xlu0 %1117
    %v1120 = vsel %vm73, %v895, %v1104
    %v1121 = vsel %vm75, %v1120, %v1107
    %v1122 = vsel %vm77, %v1121, %v1110
    %v1123 = vsel %vm79, %v1122, %v1114
    %v1124 = vsel %vm81, %v1123, %v1118
    %v1126 = vsel %vm83, %v1124, 0
    %1128 = vmatprep.subr.mxu0 0.0
    %1129 = vmatpush1.msra.mxu0 0.0
    %1130 = vmatprep.subr.mxu0 0.0
    %1131 = vmatpush1.msra.mxu0 0.0
    %1132 = vmatprep.subr.mxu0 0.0
    %1133 = vmatpush1.msra.mxu0 0.0
    %1134 = vmatprep.subr.mxu0 0.0
    %1135 = vmatpush1.msra.mxu0 0.0
    %1136 = vmatprep.subr.mxu0 0.0
    %1137 = vmatpush1.msra.mxu0 %v32
    %1138 = vmatprep.subr.mxu0 0.0
    %1139 = vmatpush1.msra.mxu0 %v31
    %1140 = vmatprep.subr.mxu0 0.0
    %1141 = vmatpush1.msra.mxu0 %v30
    %1142 = vmatprep.subr.mxu0 0.0
    %1143 = vmatpush1.msra.mxu0 %v29
    %1144 = vmatprep.subr.mxu0 0.0
    %1145 = vmatpush1.msra.mxu0 %v28
    %1146 = vmatprep.subr.mxu0 0.0
    %1147 = vmatpush1.msra.mxu0 %v27
    %1148 = vmatprep.subr.mxu0 0.0
    %1149 = vmatpush1.msra.mxu0 %v26
    %1150 = vmatprep.subr.mxu0 0.0
    %1151 = vmatpush1.msra.mxu0 %v25
    %1152 = vmatprep.subr.mxu0 0.0
    %1153 = vmatpush1.msra.mxu0 %v24
    %1154 = vmatprep.subr.mxu0 0.0
    %1155 = vmatpush1.msra.mxu0 %v23
    %1156 = vmatprep.subr.mxu0 0.0
    %1157 = vmatpush1.msra.mxu0 %v22
    %1158 = vmatprep.subr.mxu0 0.0
    %1159 = vmatpush1.msra.mxu0 %v21
    %1160 = vmatprep.subr.mxu0 0.0
    %1161 = vmatpush2.msra.mxu0 0.0
    %1162 = vmatprep.subr.mxu0 0.0
    %1163 = vmatpush2.msra.mxu0 0.0
    %1164 = vmatprep.subr.mxu0 0.0
    %1165 = vmatpush2.msra.mxu0 0.0
    %1166 = vmatprep.subr.mxu0 0.0
    %1167 = vmatpush2.msra.mxu0 0.0
    %1168 = vmatprep.subr.mxu0 0.0
    %1169 = vmatpush2.msra.mxu0 0.0
    %1170 = vmatprep.subr.mxu0 0.0
    %1171 = vmatpush2.msra.mxu0 0.0
    %1172 = vmatprep.subr.mxu0 0.0
    %1173 = vmatpush2.msra.mxu0 0.0
    %1174 = vmatprep.subr.mxu0 0.0
    %1175 = vmatpush2.msra.mxu0 0.0
    %1176 = vmatprep.subr.mxu0 0.0
    %1177 = vmatpush2.msra.mxu0 0.0
    %1178 = vmatprep.subr.mxu0 0.0
    %1179 = vmatpush2.msra.mxu0 0.0
    %1180 = vmatprep.subr.mxu0 0.0
    %1181 = vmatpush2.msra.mxu0 0.0
    %1182 = vmatprep.subr.mxu0 0.0
    %1183 = vmatpush2.msra.mxu0 0.0
    %1184 = vmatprep.subr.mxu0 0.0
    %1185 = vmatpush2.msra.mxu0 0.0
    %1186 = vmatprep.subr.mxu0 0.0
    %1187 = vmatpush2.msra.mxu0 0.0
    %1188 = vmatprep.subr.mxu0 0.0
    %1189 = vmatpush2.msra.mxu0 0.0
    %1190 = vmatprep.subr.mxu0 0.0
    %1191 = vmatpush2.msra.mxu0 0.0
    %1192 = vmatprep.mubr.f32.mxu0 0.0
    %1193 = vmatmul.mubr.f32.gmra.mxu0 %v1126
    %v1194 = vpop.f32.mrf.mxu0
    %v1195 = vadd.f32 0.0, %v1194
    %v1196 = vpop.f32.mrf.mxu0
    %1197 = vdwg.mxu0
    %s1198 = scalar_lea.vmem %s0, 52
    %v1199 = vld [vmem:[%s1198] sm:$0xf]
    %1200 = vrot.lane.b32.xlu0 %v1006, 16
    %v1201 = vpop.permute.xlu0 %1200
    %1203 = vrot.lane.b32.xlu0 %v1102, 32
    %v1204 = vpop.permute.xlu0 %1203
    %1206 = vrot.lane.b32.xlu0 %v1116, 48
    %v1207 = vpop.permute.xlu0 %1206
    %1210 = vrot.lane.b32.xlu0 %v1199, 64
    %v1211 = vpop.permute.xlu0 %1210
    %v1213 = vrot.slane %v1199, 1
    %1214 = vrot.lane.b32.xlu0 %v1213, 80
    %v1215 = vpop.permute.xlu0 %1214
    %v1217 = vsel %vm73, %v992, %v1201
    %v1218 = vsel %vm75, %v1217, %v1204
    %v1219 = vsel %vm77, %v1218, %v1207
    %v1220 = vsel %vm79, %v1219, %v1211
    %v1221 = vsel %vm81, %v1220, %v1215
    %v1223 = vsel %vm83, %v1221, 0
    %1225 = vmatprep.subr.mxu0 0.0
    %1226 = vmatpush1.msra.mxu0 0.0
    %1227 = vmatprep.subr.mxu0 0.0
    %1228 = vmatpush1.msra.mxu0 0.0
    %1229 = vmatprep.subr.mxu0 0.0
    %1230 = vmatpush1.msra.mxu0 0.0
    %1231 = vmatprep.subr.mxu0 0.0
    %1232 = vmatpush1.msra.mxu0 0.0
    %1233 = vmatprep.subr.mxu0 0.0
    %1234 = vmatpush1.msra.mxu0 %v32
    %1235 = vmatprep.subr.mxu0 0.0
    %1236 = vmatpush1.msra.mxu0 %v31
    %1237 = vmatprep.subr.mxu0 0.0
    %1238 = vmatpush1.msra.mxu0 %v30
    %1239 = vmatprep.subr.mxu0 0.0
    %1240 = vmatpush1.msra.mxu0 %v29
    %1241 = vmatprep.subr.mxu0 0.0
    %1242 = vmatpush1.msra.mxu0 %v28
    %1243 = vmatprep.subr.mxu0 0.0
    %1244 = vmatpush1.msra.mxu0 %v27
    %1245 = vmatprep.subr.mxu0 0.0
    %1246 = vmatpush1.msra.mxu0 %v26
    %1247 = vmatprep.subr.mxu0 0.0
    %1248 = vmatpush1.msra.mxu0 %v25
    %1249 = vmatprep.subr.mxu0 0.0
    %1250 = vmatpush1.msra.mxu0 %v24
    %1251 = vmatprep.subr.mxu0 0.0
    %1252 = vmatpush1.msra.mxu0 %v23
    %1253 = vmatprep.subr.mxu0 0.0
    %1254 = vmatpush1.msra.mxu0 %v22
    %1255 = vmatprep.subr.mxu0 0.0
    %1256 = vmatpush1.msra.mxu0 %v21
    %1257 = vmatprep.subr.mxu0 0.0
    %1258 = vmatpush2.msra.mxu0 0.0
    %1259 = vmatprep.subr.mxu0 0.0
    %1260 = vmatpush2.msra.mxu0 0.0
    %1261 = vmatprep.subr.mxu0 0.0
    %1262 = vmatpush2.msra.mxu0 0.0
    %1263 = vmatprep.subr.mxu0 0.0
    %1264 = vmatpush2.msra.mxu0 0.0
    %1265 = vmatprep.subr.mxu0 0.0
    %1266 = vmatpush2.msra.mxu0 0.0
    %1267 = vmatprep.subr.mxu0 0.0
    %1268 = vmatpush2.msra.mxu0 0.0
    %1269 = vmatprep.subr.mxu0 0.0
    %1270 = vmatpush2.msra.mxu0 0.0
    %1271 = vmatprep.subr.mxu0 0.0
    %1272 = vmatpush2.msra.mxu0 0.0
    %1273 = vmatprep.subr.mxu0 0.0
    %1274 = vmatpush2.msra.mxu0 0.0
    %1275 = vmatprep.subr.mxu0 0.0
    %1276 = vmatpush2.msra.mxu0 0.0
    %1277 = vmatprep.subr.mxu0 0.0
    %1278 = vmatpush2.msra.mxu0 0.0
    %1279 = vmatprep.subr.mxu0 0.0
    %1280 = vmatpush2.msra.mxu0 0.0
    %1281 = vmatprep.subr.mxu0 0.0
    %1282 = vmatpush2.msra.mxu0 0.0
    %1283 = vmatprep.subr.mxu0 0.0
    %1284 = vmatpush2.msra.mxu0 0.0
    %1285 = vmatprep.subr.mxu0 0.0
    %1286 = vmatpush2.msra.mxu0 0.0
    %1287 = vmatprep.subr.mxu0 0.0
    %1288 = vmatpush2.msra.mxu0 0.0
    %1289 = vmatprep.mubr.f32.mxu0 0.0
    %1290 = vmatmul.mubr.f32.gmra.mxu0 %v1223
    %v1291 = vpop.f32.mrf.mxu0
    %v1292 = vadd.f32 0.0, %v1291
    %v1293 = vpop.f32.mrf.mxu0
    %1294 = vdwg.mxu0
    %1296 = vrot.lane.b32.xlu0 %v1195, 112
    %v1297 = vpop.permute.xlu0 %1296
    %v1299 = vmax.f32 %v1195, %v1297
    %1301 = vrot.lane.b32.xlu0 %v1292, 112
    %v1302 = vpop.permute.xlu0 %1301
    %v1304 = vmax.f32 %v1292, %v1302
    %v1305 = vmax.f32 %v1299, %v1304
    %v1306 = vadd.f32 %v1305, %v269
    %v1307 = vmax.f32 %v1306, 0.0
    %v1309 = vrot.slane %v272, 1
    %1310 = vrot.lane.b32.xlu0 %v1309, 16
    %v1311 = vpop.permute.xlu0 %1310
    %1314 = vrot.lane.b32.xlu0 %v479, 32
    %v1315 = vpop.permute.xlu0 %1314
    %v1317 = vrot.slane %v479, 1
    %1318 = vrot.lane.b32.xlu0 %v1317, 48
    %v1319 = vpop.permute.xlu0 %1318
    %1322 = vrot.lane.b32.xlu0 %v686, 64
    %v1323 = vpop.permute.xlu0 %1322
    %v1325 = vrot.slane %v686, 1
    %1326 = vrot.lane.b32.xlu0 %v1325, 80
    %v1327 = vpop.permute.xlu0 %1326
    %v1329 = vsel %vm73, %v272, %v1311
    %v1330 = vsel %vm75, %v1329, %v1315
    %v1331 = vsel %vm77, %v1330, %v1319
    %v1332 = vsel %vm79, %v1331, %v1323
    %v1333 = vsel %vm81, %v1332, %v1327
    %v1335 = vsel %vm83, %v1333, 0
    %1337 = vmatprep.subr.mxu0 0.0
    %1338 = vmatpush1.msra.mxu0 0.0
    %1339 = vmatprep.subr.mxu0 0.0
    %1340 = vmatpush1.msra.mxu0 0.0
    %1341 = vmatprep.subr.mxu0 0.0
    %1342 = vmatpush1.msra.mxu0 0.0
    %1343 = vmatprep.subr.mxu0 0.0
    %1344 = vmatpush1.msra.mxu0 0.0
    %1345 = vmatprep.subr.mxu0 0.0
    %1346 = vmatpush1.msra.mxu0 %v44
    %1347 = vmatprep.subr.mxu0 0.0
    %1348 = vmatpush1.msra.mxu0 %v43
    %1349 = vmatprep.subr.mxu0 0.0
    %1350 = vmatpush1.msra.mxu0 %v42
    %1351 = vmatprep.subr.mxu0 0.0
    %1352 = vmatpush1.msra.mxu0 %v41
    %1353 = vmatprep.subr.mxu0 0.0
    %1354 = vmatpush1.msra.mxu0 %v40
    %1355 = vmatprep.subr.mxu0 0.0
    %1356 = vmatpush1.msra.mxu0 %v39
    %1357 = vmatprep.subr.mxu0 0.0
    %1358 = vmatpush1.msra.mxu0 %v38
    %1359 = vmatprep.subr.mxu0 0.0
    %1360 = vmatpush1.msra.mxu0 %v37
    %1361 = vmatprep.subr.mxu0 0.0
    %1362 = vmatpush1.msra.mxu0 %v36
    %1363 = vmatprep.subr.mxu0 0.0
    %1364 = vmatpush1.msra.mxu0 %v35
    %1365 = vmatprep.subr.mxu0 0.0
    %1366 = vmatpush1.msra.mxu0 %v34
    %1367 = vmatprep.subr.mxu0 0.0
    %1368 = vmatpush1.msra.mxu0 %v33
    %1369 = vmatprep.subr.mxu0 0.0
    %1370 = vmatpush2.msra.mxu0 0.0
    %1371 = vmatprep.subr.mxu0 0.0
    %1372 = vmatpush2.msra.mxu0 0.0
    %1373 = vmatprep.subr.mxu0 0.0
    %1374 = vmatpush2.msra.mxu0 0.0
    %1375 = vmatprep.subr.mxu0 0.0
    %1376 = vmatpush2.msra.mxu0 0.0
    %1377 = vmatprep.subr.mxu0 0.0
    %1378 = vmatpush2.msra.mxu0 0.0
    %1379 = vmatprep.subr.mxu0 0.0
    %1380 = vmatpush2.msra.mxu0 0.0
    %1381 = vmatprep.subr.mxu0 0.0
    %1382 = vmatpush2.msra.mxu0 0.0
    %1383 = vmatprep.subr.mxu0 0.0
    %1384 = vmatpush2.msra.mxu0 0.0
    %1385 = vmatprep.subr.mxu0 0.0
    %1386 = vmatpush2.msra.mxu0 0.0
    %1387 = vmatprep.subr.mxu0 0.0
    %1388 = vmatpush2.msra.mxu0 0.0
    %1389 = vmatprep.subr.mxu0 0.0
    %1390 = vmatpush2.msra.mxu0 0.0
    %1391 = vmatprep.subr.mxu0 0.0
    %1392 = vmatpush2.msra.mxu0 0.0
    %1393 = vmatprep.subr.mxu0 0.0
    %1394 = vmatpush2.msra.mxu0 0.0
    %1395 = vmatprep.subr.mxu0 0.0
    %1396 = vmatpush2.msra.mxu0 0.0
    %1397 = vmatprep.subr.mxu0 0.0
    %1398 = vmatpush2.msra.mxu0 0.0
    %1399 = vmatprep.subr.mxu0 0.0
    %1400 = vmatpush2.msra.mxu0 0.0
    %1401 = vmatprep.mubr.f32.mxu0 0.0
    %1402 = vmatmul.mubr.f32.gmra.mxu0 %v1335
    %v1403 = vpop.f32.mrf.mxu0
    %v1404 = vadd.f32 0.0, %v1403
    %v1405 = vpop.f32.mrf.mxu0
    %1406 = vdwg.mxu0
    %1407 = vrot.lane.b32.xlu0 %v1317, 16
    %v1408 = vpop.permute.xlu0 %1407
    %1410 = vrot.lane.b32.xlu0 %v686, 32
    %v1411 = vpop.permute.xlu0 %1410
    %1413 = vrot.lane.b32.xlu0 %v1325, 48
    %v1414 = vpop.permute.xlu0 %1413
    %1417 = vrot.lane.b32.xlu0 %v893, 64
    %v1418 = vpop.permute.xlu0 %1417
    %v1420 = vrot.slane %v893, 1
    %1421 = vrot.lane.b32.xlu0 %v1420, 80
    %v1422 = vpop.permute.xlu0 %1421
    %v1424 = vsel %vm73, %v479, %v1408
    %v1425 = vsel %vm75, %v1424, %v1411
    %v1426 = vsel %vm77, %v1425, %v1414
    %v1427 = vsel %vm79, %v1426, %v1418
    %v1428 = vsel %vm81, %v1427, %v1422
    %v1430 = vsel %vm83, %v1428, 0
    %1432 = vmatprep.subr.mxu0 0.0
    %1433 = vmatpush1.msra.mxu0 0.0
    %1434 = vmatprep.subr.mxu0 0.0
    %1435 = vmatpush1.msra.mxu0 0.0
    %1436 = vmatprep.subr.mxu0 0.0
    %1437 = vmatpush1.msra.mxu0 0.0
    %1438 = vmatprep.subr.mxu0 0.0
    %1439 = vmatpush1.msra.mxu0 0.0
    %1440 = vmatprep.subr.mxu0 0.0
    %1441 = vmatpush1.msra.mxu0 %v44
    %1442 = vmatprep.subr.mxu0 0.0
    %1443 = vmatpush1.msra.mxu0 %v43
    %1444 = vmatprep.subr.mxu0 0.0
    %1445 = vmatpush1.msra.mxu0 %v42
    %1446 = vmatprep.subr.mxu0 0.0
    %1447 = vmatpush1.msra.mxu0 %v41
    %1448 = vmatprep.subr.mxu0 0.0
    %1449 = vmatpush1.msra.mxu0 %v40
    %1450 = vmatprep.subr.mxu0 0.0
    %1451 = vmatpush1.msra.mxu0 %v39
    %1452 = vmatprep.subr.mxu0 0.0
    %1453 = vmatpush1.msra.mxu0 %v38
    %1454 = vmatprep.subr.mxu0 0.0
    %1455 = vmatpush1.msra.mxu0 %v37
    %1456 = vmatprep.subr.mxu0 0.0
    %1457 = vmatpush1.msra.mxu0 %v36
    %1458 = vmatprep.subr.mxu0 0.0
    %1459 = vmatpush1.msra.mxu0 %v35
    %1460 = vmatprep.subr.mxu0 0.0
    %1461 = vmatpush1.msra.mxu0 %v34
    %1462 = vmatprep.subr.mxu0 0.0
    %1463 = vmatpush1.msra.mxu0 %v33
    %1464 = vmatprep.subr.mxu0 0.0
    %1465 = vmatpush2.msra.mxu0 0.0
    %1466 = vmatprep.subr.mxu0 0.0
    %1467 = vmatpush2.msra.mxu0 0.0
    %1468 = vmatprep.subr.mxu0 0.0
    %1469 = vmatpush2.msra.mxu0 0.0
    %1470 = vmatprep.subr.mxu0 0.0
    %1471 = vmatpush2.msra.mxu0 0.0
    %1472 = vmatprep.subr.mxu0 0.0
    %1473 = vmatpush2.msra.mxu0 0.0
    %1474 = vmatprep.subr.mxu0 0.0
    %1475 = vmatpush2.msra.mxu0 0.0
    %1476 = vmatprep.subr.mxu0 0.0
    %1477 = vmatpush2.msra.mxu0 0.0
    %1478 = vmatprep.subr.mxu0 0.0
    %1479 = vmatpush2.msra.mxu0 0.0
    %1480 = vmatprep.subr.mxu0 0.0
    %1481 = vmatpush2.msra.mxu0 0.0
    %1482 = vmatprep.subr.mxu0 0.0
    %1483 = vmatpush2.msra.mxu0 0.0
    %1484 = vmatprep.subr.mxu0 0.0
    %1485 = vmatpush2.msra.mxu0 0.0
    %1486 = vmatprep.subr.mxu0 0.0
    %1487 = vmatpush2.msra.mxu0 0.0
    %1488 = vmatprep.subr.mxu0 0.0
    %1489 = vmatpush2.msra.mxu0 0.0
    %1490 = vmatprep.subr.mxu0 0.0
    %1491 = vmatpush2.msra.mxu0 0.0
    %1492 = vmatprep.subr.mxu0 0.0
    %1493 = vmatpush2.msra.mxu0 0.0
    %1494 = vmatprep.subr.mxu0 0.0
    %1495 = vmatpush2.msra.mxu0 0.0
    %1496 = vmatprep.mubr.f32.mxu0 0.0
    %1497 = vmatmul.mubr.f32.gmra.mxu0 %v1430
    %v1498 = vpop.f32.mrf.mxu0
    %v1499 = vadd.f32 0.0, %v1498
    %v1500 = vpop.f32.mrf.mxu0
    %1501 = vdwg.mxu0
    %1503 = vrot.lane.b32.xlu0 %v1404, 120
    %v1504 = vpop.permute.xlu0 %1503
    %v1506 = vmax.f32 %v1404, %v1504
    %1508 = vrot.lane.b32.xlu0 %v1499, 120
    %v1509 = vpop.permute.xlu0 %1508
    %v1511 = vmax.f32 %v1499, %v1509
    %v1512 = vmax.f32 %v1506, %v1511
    %v1514 = vlaneseq
    %v1515 = vshrl.u32 %v1514, 7
    %v1516 = vsub.s32 0, %v1515
    %v1517 = vrot.slane %v46, %v1516
    %v1519 = vadd.f32 %v1512, %v1517
    %v1520 = vmax.f32 %v1519, 0.0
    %1521 = vrot.lane.b32.xlu0 %v1325, 16
    %v1522 = vpop.permute.xlu0 %1521
    %1524 = vrot.lane.b32.xlu0 %v893, 32
    %v1525 = vpop.permute.xlu0 %1524
    %1527 = vrot.lane.b32.xlu0 %v1420, 48
    %v1528 = vpop.permute.xlu0 %1527
    %1531 = vrot.lane.b32.xlu0 %v1100, 64
    %v1532 = vpop.permute.xlu0 %1531
    %v1534 = vrot.slane %v1100, 1
    %1535 = vrot.lane.b32.xlu0 %v1534, 80
    %v1536 = vpop.permute.xlu0 %1535
    %v1538 = vsel %vm73, %v686, %v1522
    %v1539 = vsel %vm75, %v1538, %v1525
    %v1540 = vsel %vm77, %v1539, %v1528
    %v1541 = vsel %vm79, %v1540, %v1532
    %v1542 = vsel %vm81, %v1541, %v1536
    %v1544 = vsel %vm83, %v1542, 0
    %1546 = vmatprep.subr.mxu0 0.0
    %1547 = vmatpush1.msra.mxu0 0.0
    %1548 = vmatprep.subr.mxu0 0.0
    %1549 = vmatpush1.msra.mxu0 0.0
    %1550 = vmatprep.subr.mxu0 0.0
    %1551 = vmatpush1.msra.mxu0 0.0
    %1552 = vmatprep.subr.mxu0 0.0
    %1553 = vmatpush1.msra.mxu0 0.0
    %1554 = vmatprep.subr.mxu0 0.0
    %1555 = vmatpush1.msra.mxu0 %v44
    %1556 = vmatprep.subr.mxu0 0.0
    %1557 = vmatpush1.msra.mxu0 %v43
    %1558 = vmatprep.subr.mxu0 0.0
    %1559 = vmatpush1.msra.mxu0 %v42
    %1560 = vmatprep.subr.mxu0 0.0
    %1561 = vmatpush1.msra.mxu0 %v41
    %1562 = vmatprep.subr.mxu0 0.0
    %1563 = vmatpush1.msra.mxu0 %v40
    %1564 = vmatprep.subr.mxu0 0.0
    %1565 = vmatpush1.msra.mxu0 %v39
    %1566 = vmatprep.subr.mxu0 0.0
    %1567 = vmatpush1.msra.mxu0 %v38
    %1568 = vmatprep.subr.mxu0 0.0
    %1569 = vmatpush1.msra.mxu0 %v37
    %1570 = vmatprep.subr.mxu0 0.0
    %1571 = vmatpush1.msra.mxu0 %v36
    %1572 = vmatprep.subr.mxu0 0.0
    %1573 = vmatpush1.msra.mxu0 %v35
    %1574 = vmatprep.subr.mxu0 0.0
    %1575 = vmatpush1.msra.mxu0 %v34
    %1576 = vmatprep.subr.mxu0 0.0
    %1577 = vmatpush1.msra.mxu0 %v33
    %1578 = vmatprep.subr.mxu0 0.0
    %1579 = vmatpush2.msra.mxu0 0.0
    %1580 = vmatprep.subr.mxu0 0.0
    %1581 = vmatpush2.msra.mxu0 0.0
    %1582 = vmatprep.subr.mxu0 0.0
    %1583 = vmatpush2.msra.mxu0 0.0
    %1584 = vmatprep.subr.mxu0 0.0
    %1585 = vmatpush2.msra.mxu0 0.0
    %1586 = vmatprep.subr.mxu0 0.0
    %1587 = vmatpush2.msra.mxu0 0.0
    %1588 = vmatprep.subr.mxu0 0.0
    %1589 = vmatpush2.msra.mxu0 0.0
    %1590 = vmatprep.subr.mxu0 0.0
    %1591 = vmatpush2.msra.mxu0 0.0
    %1592 = vmatprep.subr.mxu0 0.0
    %1593 = vmatpush2.msra.mxu0 0.0
    %1594 = vmatprep.subr.mxu0 0.0
    %1595 = vmatpush2.msra.mxu0 0.0
    %1596 = vmatprep.subr.mxu0 0.0
    %1597 = vmatpush2.msra.mxu0 0.0
    %1598 = vmatprep.subr.mxu0 0.0
    %1599 = vmatpush2.msra.mxu0 0.0
    %1600 = vmatprep.subr.mxu0 0.0
    %1601 = vmatpush2.msra.mxu0 0.0
    %1602 = vmatprep.subr.mxu0 0.0
    %1603 = vmatpush2.msra.mxu0 0.0
    %1604 = vmatprep.subr.mxu0 0.0
    %1605 = vmatpush2.msra.mxu0 0.0
    %1606 = vmatprep.subr.mxu0 0.0
    %1607 = vmatpush2.msra.mxu0 0.0
    %1608 = vmatprep.subr.mxu0 0.0
    %1609 = vmatpush2.msra.mxu0 0.0
    %1610 = vmatprep.mubr.f32.mxu0 0.0
    %1611 = vmatmul.mubr.f32.gmra.mxu0 %v1544
    %v1612 = vpop.f32.mrf.mxu0
    %v1613 = vadd.f32 0.0, %v1612
    %v1614 = vpop.f32.mrf.mxu0
    %1615 = vdwg.mxu0
    %1616 = vrot.lane.b32.xlu0 %v1420, 16
    %v1617 = vpop.permute.xlu0 %1616
    %1619 = vrot.lane.b32.xlu0 %v1100, 32
    %v1620 = vpop.permute.xlu0 %1619
    %1622 = vrot.lane.b32.xlu0 %v1534, 48
    %v1623 = vpop.permute.xlu0 %1622
    %1626 = vrot.lane.b32.xlu0 %v1307, 64
    %v1627 = vpop.permute.xlu0 %1626
    %v1629 = vrot.slane %v1307, 1
    %1630 = vrot.lane.b32.xlu0 %v1629, 80
    %v1631 = vpop.permute.xlu0 %1630
    %v1633 = vsel %vm73, %v893, %v1617
    %v1634 = vsel %vm75, %v1633, %v1620
    %v1635 = vsel %vm77, %v1634, %v1623
    %v1636 = vsel %vm79, %v1635, %v1627
    %v1637 = vsel %vm81, %v1636, %v1631
    %v1639 = vsel %vm83, %v1637, 0
    %1641 = vmatprep.subr.mxu0 0.0
    %1642 = vmatpush1.msra.mxu0 0.0
    %1643 = vmatprep.subr.mxu0 0.0
    %1644 = vmatpush1.msra.mxu0 0.0
    %1645 = vmatprep.subr.mxu0 0.0
    %1646 = vmatpush1.msra.mxu0 0.0
    %1647 = vmatprep.subr.mxu0 0.0
    %1648 = vmatpush1.msra.mxu0 0.0
    %1649 = vmatprep.subr.mxu0 0.0
    %1650 = vmatpush1.msra.mxu0 %v44
    %1651 = vmatprep.subr.mxu0 0.0
    %1652 = vmatpush1.msra.mxu0 %v43
    %1653 = vmatprep.subr.mxu0 0.0
    %1654 = vmatpush1.msra.mxu0 %v42
    %1655 = vmatprep.subr.mxu0 0.0
    %1656 = vmatpush1.msra.mxu0 %v41
    %1657 = vmatprep.subr.mxu0 0.0
    %1658 = vmatpush1.msra.mxu0 %v40
    %1659 = vmatprep.subr.mxu0 0.0
    %1660 = vmatpush1.msra.mxu0 %v39
    %1661 = vmatprep.subr.mxu0 0.0
    %1662 = vmatpush1.msra.mxu0 %v38
    %1663 = vmatprep.subr.mxu0 0.0
    %1664 = vmatpush1.msra.mxu0 %v37
    %1665 = vmatprep.subr.mxu0 0.0
    %1666 = vmatpush1.msra.mxu0 %v36
    %1667 = vmatprep.subr.mxu0 0.0
    %1668 = vmatpush1.msra.mxu0 %v35
    %1669 = vmatprep.subr.mxu0 0.0
    %1670 = vmatpush1.msra.mxu0 %v34
    %1671 = vmatprep.subr.mxu0 0.0
    %1672 = vmatpush1.msra.mxu0 %v33
    %1673 = vmatprep.subr.mxu0 0.0
    %1674 = vmatpush2.msra.mxu0 0.0
    %1675 = vmatprep.subr.mxu0 0.0
    %1676 = vmatpush2.msra.mxu0 0.0
    %1677 = vmatprep.subr.mxu0 0.0
    %1678 = vmatpush2.msra.mxu0 0.0
    %1679 = vmatprep.subr.mxu0 0.0
    %1680 = vmatpush2.msra.mxu0 0.0
    %1681 = vmatprep.subr.mxu0 0.0
    %1682 = vmatpush2.msra.mxu0 0.0
    %1683 = vmatprep.subr.mxu0 0.0
    %1684 = vmatpush2.msra.mxu0 0.0
    %1685 = vmatprep.subr.mxu0 0.0
    %1686 = vmatpush2.msra.mxu0 0.0
    %1687 = vmatprep.subr.mxu0 0.0
    %1688 = vmatpush2.msra.mxu0 0.0
    %1689 = vmatprep.subr.mxu0 0.0
    %1690 = vmatpush2.msra.mxu0 0.0
    %1691 = vmatprep.subr.mxu0 0.0
    %1692 = vmatpush2.msra.mxu0 0.0
    %1693 = vmatprep.subr.mxu0 0.0
    %1694 = vmatpush2.msra.mxu0 0.0
    %1695 = vmatprep.subr.mxu0 0.0
    %1696 = vmatpush2.msra.mxu0 0.0
    %1697 = vmatprep.subr.mxu0 0.0
    %1698 = vmatpush2.msra.mxu0 0.0
    %1699 = vmatprep.subr.mxu0 0.0
    %1700 = vmatpush2.msra.mxu0 0.0
    %1701 = vmatprep.subr.mxu0 0.0
    %1702 = vmatpush2.msra.mxu0 0.0
    %1703 = vmatprep.subr.mxu0 0.0
    %1704 = vmatpush2.msra.mxu0 0.0
    %1705 = vmatprep.mubr.f32.mxu0 0.0
    %1706 = vmatmul.mubr.f32.gmra.mxu0 %v1639
    %v1707 = vpop.f32.mrf.mxu0
    %v1708 = vadd.f32 0.0, %v1707
    %v1709 = vpop.f32.mrf.mxu0
    %1710 = vdwg.mxu0
    %1712 = vrot.lane.b32.xlu0 %v1613, 120
    %v1713 = vpop.permute.xlu0 %1712
    %v1715 = vmax.f32 %v1613, %v1713
    %1717 = vrot.lane.b32.xlu0 %v1708, 120
    %v1718 = vpop.permute.xlu0 %1717
    %v1720 = vmax.f32 %v1708, %v1718
    %v1721 = vmax.f32 %v1715, %v1720
    %v1722 = vadd.f32 %v1721, %v1517
    %v1723 = vmax.f32 %v1722, 0.0
    %s1724 = scalar_lea.vmem %s0, 64
    %v1725 = vld [vmem:[%s1724] sm:$0xf]
    %s1726 = scalar_lea.vmem %s0, 68
    %v1727 = vld [vmem:[%s1726] sm:$0xf]
    %s1728 = scalar_lea.vmem %s0, 72
    %v1729 = vld [vmem:[%s1728] sm:$0xf]
    %v1731 = vrot.slane %v1725, 1
    %1732 = vrot.lane.b32.xlu0 %v1731, 16
    %v1733 = vpop.permute.xlu0 %1732
    %1736 = vrot.lane.b32.xlu0 %v1727, 32
    %v1737 = vpop.permute.xlu0 %1736
    %v1739 = vrot.slane %v1727, 1
    %1740 = vrot.lane.b32.xlu0 %v1739, 48
    %v1741 = vpop.permute.xlu0 %1740
    %1744 = vrot.lane.b32.xlu0 %v1729, 64
    %v1745 = vpop.permute.xlu0 %1744
    %v1747 = vrot.slane %v1729, 1
    %1748 = vrot.lane.b32.xlu0 %v1747, 80
    %v1749 = vpop.permute.xlu0 %1748
    %v1751 = vsel %vm73, %v1725, %v1733
    %v1752 = vsel %vm75, %v1751, %v1737
    %v1753 = vsel %vm77, %v1752, %v1741
    %v1754 = vsel %vm79, %v1753, %v1745
    %v1755 = vsel %vm81, %v1754, %v1749
    %v1757 = vsel %vm83, %v1755, 0
    %1759 = vmatprep.subr.mxu0 0.0
    %1760 = vmatpush1.msra.mxu0 0.0
    %1761 = vmatprep.subr.mxu0 0.0
    %1762 = vmatpush1.msra.mxu0 0.0
    %1763 = vmatprep.subr.mxu0 0.0
    %1764 = vmatpush1.msra.mxu0 0.0
    %1765 = vmatprep.subr.mxu0 0.0
    %1766 = vmatpush1.msra.mxu0 0.0
    %1767 = vmatprep.subr.mxu0 0.0
    %1768 = vmatpush1.msra.mxu0 %v32
    %1769 = vmatprep.subr.mxu0 0.0
    %1770 = vmatpush1.msra.mxu0 %v31
    %1771 = vmatprep.subr.mxu0 0.0
    %1772 = vmatpush1.msra.mxu0 %v30
    %1773 = vmatprep.subr.mxu0 0.0
    %1774 = vmatpush1.msra.mxu0 %v29
    %1775 = vmatprep.subr.mxu0 0.0
    %1776 = vmatpush1.msra.mxu0 %v28
    %1777 = vmatprep.subr.mxu0 0.0
    %1778 = vmatpush1.msra.mxu0 %v27
    %1779 = vmatprep.subr.mxu0 0.0
    %1780 = vmatpush1.msra.mxu0 %v26
    %1781 = vmatprep.subr.mxu0 0.0
    %1782 = vmatpush1.msra.mxu0 %v25
    %1783 = vmatprep.subr.mxu0 0.0
    %1784 = vmatpush1.msra.mxu0 %v24
    %1785 = vmatprep.subr.mxu0 0.0
    %1786 = vmatpush1.msra.mxu0 %v23
    %1787 = vmatprep.subr.mxu0 0.0
    %1788 = vmatpush1.msra.mxu0 %v22
    %1789 = vmatprep.subr.mxu0 0.0
    %1790 = vmatpush1.msra.mxu0 %v21
    %1791 = vmatprep.subr.mxu0 0.0
    %1792 = vmatpush2.msra.mxu0 0.0
    %1793 = vmatprep.subr.mxu0 0.0
    %1794 = vmatpush2.msra.mxu0 0.0
    %1795 = vmatprep.subr.mxu0 0.0
    %1796 = vmatpush2.msra.mxu0 0.0
    %1797 = vmatprep.subr.mxu0 0.0
    %1798 = vmatpush2.msra.mxu0 0.0
    %1799 = vmatprep.subr.mxu0 0.0
    %1800 = vmatpush2.msra.mxu0 0.0
    %1801 = vmatprep.subr.mxu0 0.0
    %1802 = vmatpush2.msra.mxu0 0.0
    %1803 = vmatprep.subr.mxu0 0.0
    %1804 = vmatpush2.msra.mxu0 0.0
    %1805 = vmatprep.subr.mxu0 0.0
    %1806 = vmatpush2.msra.mxu0 0.0
    %1807 = vmatprep.subr.mxu0 0.0
    %1808 = vmatpush2.msra.mxu0 0.0
    %1809 = vmatprep.subr.mxu0 0.0
    %1810 = vmatpush2.msra.mxu0 0.0
    %1811 = vmatprep.subr.mxu0 0.0
    %1812 = vmatpush2.msra.mxu0 0.0
    %1813 = vmatprep.subr.mxu0 0.0
    %1814 = vmatpush2.msra.mxu0 0.0
    %1815 = vmatprep.subr.mxu0 0.0
    %1816 = vmatpush2.msra.mxu0 0.0
    %1817 = vmatprep.subr.mxu0 0.0
    %1818 = vmatpush2.msra.mxu0 0.0
    %1819 = vmatprep.subr.mxu0 0.0
    %1820 = vmatpush2.msra.mxu0 0.0
    %1821 = vmatprep.subr.mxu0 0.0
    %1822 = vmatpush2.msra.mxu0 0.0
    %1823 = vmatprep.mubr.f32.mxu0 0.0
    %1824 = vmatmul.mubr.f32.gmra.mxu0 %v1757
    %v1825 = vpop.f32.mrf.mxu0
    %v1826 = vadd.f32 0.0, %v1825
    %v1827 = vpop.f32.mrf.mxu0
    %1828 = vdwg.mxu0
    %s1829 = scalar_lea.vmem %s0, 76
    %v1830 = vld [vmem:[%s1829] sm:$0xf]
    %1831 = vrot.lane.b32.xlu0 %v1739, 16
    %v1832 = vpop.permute.xlu0 %1831
    %1834 = vrot.lane.b32.xlu0 %v1729, 32
    %v1835 = vpop.permute.xlu0 %1834
    %1837 = vrot.lane.b32.xlu0 %v1747, 48
    %v1838 = vpop.permute.xlu0 %1837
    %1841 = vrot.lane.b32.xlu0 %v1830, 64
    %v1842 = vpop.permute.xlu0 %1841
    %v1844 = vrot.slane %v1830, 1
    %1845 = vrot.lane.b32.xlu0 %v1844, 80
    %v1846 = vpop.permute.xlu0 %1845
    %v1848 = vsel %vm73, %v1727, %v1832
    %v1849 = vsel %vm75, %v1848, %v1835
    %v1850 = vsel %vm77, %v1849, %v1838
    %v1851 = vsel %vm79, %v1850, %v1842
    %v1852 = vsel %vm81, %v1851, %v1846
    %v1854 = vsel %vm83, %v1852, 0
    %1856 = vmatprep.subr.mxu0 0.0
    %1857 = vmatpush1.msra.mxu0 0.0
    %1858 = vmatprep.subr.mxu0 0.0
    %1859 = vmatpush1.msra.mxu0 0.0
    %1860 = vmatprep.subr.mxu0 0.0
    %1861 = vmatpush1.msra.mxu0 0.0
    %1862 = vmatprep.subr.mxu0 0.0
    %1863 = vmatpush1.msra.mxu0 0.0
    %1864 = vmatprep.subr.mxu0 0.0
    %1865 = vmatpush1.msra.mxu0 %v32
    %1866 = vmatprep.subr.mxu0 0.0
    %1867 = vmatpush1.msra.mxu0 %v31
    %1868 = vmatprep.subr.mxu0 0.0
    %1869 = vmatpush1.msra.mxu0 %v30
    %1870 = vmatprep.subr.mxu0 0.0
    %1871 = vmatpush1.msra.mxu0 %v29
    %1872 = vmatprep.subr.mxu0 0.0
    %1873 = vmatpush1.msra.mxu0 %v28
    %1874 = vmatprep.subr.mxu0 0.0
    %1875 = vmatpush1.msra.mxu0 %v27
    %1876 = vmatprep.subr.mxu0 0.0
    %1877 = vmatpush1.msra.mxu0 %v26
    %1878 = vmatprep.subr.mxu0 0.0
    %1879 = vmatpush1.msra.mxu0 %v25
    %1880 = vmatprep.subr.mxu0 0.0
    %1881 = vmatpush1.msra.mxu0 %v24
    %1882 = vmatprep.subr.mxu0 0.0
    %1883 = vmatpush1.msra.mxu0 %v23
    %1884 = vmatprep.subr.mxu0 0.0
    %1885 = vmatpush1.msra.mxu0 %v22
    %1886 = vmatprep.subr.mxu0 0.0
    %1887 = vmatpush1.msra.mxu0 %v21
    %1888 = vmatprep.subr.mxu0 0.0
    %1889 = vmatpush2.msra.mxu0 0.0
    %1890 = vmatprep.subr.mxu0 0.0
    %1891 = vmatpush2.msra.mxu0 0.0
    %1892 = vmatprep.subr.mxu0 0.0
    %1893 = vmatpush2.msra.mxu0 0.0
    %1894 = vmatprep.subr.mxu0 0.0
    %1895 = vmatpush2.msra.mxu0 0.0
    %1896 = vmatprep.subr.mxu0 0.0
    %1897 = vmatpush2.msra.mxu0 0.0
    %1898 = vmatprep.subr.mxu0 0.0
    %1899 = vmatpush2.msra.mxu0 0.0
    %1900 = vmatprep.subr.mxu0 0.0
    %1901 = vmatpush2.msra.mxu0 0.0
    %1902 = vmatprep.subr.mxu0 0.0
    %1903 = vmatpush2.msra.mxu0 0.0
    %1904 = vmatprep.subr.mxu0 0.0
    %1905 = vmatpush2.msra.mxu0 0.0
    %1906 = vmatprep.subr.mxu0 0.0
    %1907 = vmatpush2.msra.mxu0 0.0
    %1908 = vmatprep.subr.mxu0 0.0
    %1909 = vmatpush2.msra.mxu0 0.0
    %1910 = vmatprep.subr.mxu0 0.0
    %1911 = vmatpush2.msra.mxu0 0.0
    %1912 = vmatprep.subr.mxu0 0.0
    %1913 = vmatpush2.msra.mxu0 0.0
    %1914 = vmatprep.subr.mxu0 0.0
    %1915 = vmatpush2.msra.mxu0 0.0
    %1916 = vmatprep.subr.mxu0 0.0
    %1917 = vmatpush2.msra.mxu0 0.0
    %1918 = vmatprep.subr.mxu0 0.0
    %1919 = vmatpush2.msra.mxu0 0.0
    %1920 = vmatprep.mubr.f32.mxu0 0.0
    %1921 = vmatmul.mubr.f32.gmra.mxu0 %v1854
    %v1922 = vpop.f32.mrf.mxu0
    %v1923 = vadd.f32 0.0, %v1922
    %v1924 = vpop.f32.mrf.mxu0
    %1925 = vdwg.mxu0
    %1927 = vrot.lane.b32.xlu0 %v1826, 112
    %v1928 = vpop.permute.xlu0 %1927
    %v1930 = vmax.f32 %v1826, %v1928
    %1932 = vrot.lane.b32.xlu0 %v1923, 112
    %v1933 = vpop.permute.xlu0 %1932
    %v1935 = vmax.f32 %v1923, %v1933
    %v1936 = vmax.f32 %v1930, %v1935
    %v1937 = vadd.f32 %v1936, %v269
    %v1938 = vmax.f32 %v1937, 0.0
    %s1939 = scalar_lea.vmem %s0, 80
    %v1940 = vld [vmem:[%s1939] sm:$0xf]
    %1941 = vrot.lane.b32.xlu0 %v1747, 16
    %v1942 = vpop.permute.xlu0 %1941
    %1944 = vrot.lane.b32.xlu0 %v1830, 32
    %v1945 = vpop.permute.xlu0 %1944
    %1947 = vrot.lane.b32.xlu0 %v1844, 48
    %v1948 = vpop.permute.xlu0 %1947
    %1951 = vrot.lane.b32.xlu0 %v1940, 64
    %v1952 = vpop.permute.xlu0 %1951
    %v1954 = vrot.slane %v1940, 1
    %1955 = vrot.lane.b32.xlu0 %v1954, 80
    %v1956 = vpop.permute.xlu0 %1955
    %v1958 = vsel %vm73, %v1729, %v1942
    %v1959 = vsel %vm75, %v1958, %v1945
    %v1960 = vsel %vm77, %v1959, %v1948
    %v1961 = vsel %vm79, %v1960, %v1952
    %v1962 = vsel %vm81, %v1961, %v1956
    %v1964 = vsel %vm83, %v1962, 0
    %1966 = vmatprep.subr.mxu0 0.0
    %1967 = vmatpush1.msra.mxu0 0.0
    %1968 = vmatprep.subr.mxu0 0.0
    %1969 = vmatpush1.msra.mxu0 0.0
    %1970 = vmatprep.subr.mxu0 0.0
    %1971 = vmatpush1.msra.mxu0 0.0
    %1972 = vmatprep.subr.mxu0 0.0
    %1973 = vmatpush1.msra.mxu0 0.0
    %1974 = vmatprep.subr.mxu0 0.0
    %1975 = vmatpush1.msra.mxu0 %v32
    %1976 = vmatprep.subr.mxu0 0.0
    %1977 = vmatpush1.msra.mxu0 %v31
    %1978 = vmatprep.subr.mxu0 0.0
    %1979 = vmatpush1.msra.mxu0 %v30
    %1980 = vmatprep.subr.mxu0 0.0
    %1981 = vmatpush1.msra.mxu0 %v29
    %1982 = vmatprep.subr.mxu0 0.0
    %1983 = vmatpush1.msra.mxu0 %v28
    %1984 = vmatprep.subr.mxu0 0.0
    %1985 = vmatpush1.msra.mxu0 %v27
    %1986 = vmatprep.subr.mxu0 0.0
    %1987 = vmatpush1.msra.mxu0 %v26
    %1988 = vmatprep.subr.mxu0 0.0
    %1989 = vmatpush1.msra.mxu0 %v25
    %1990 = vmatprep.subr.mxu0 0.0
    %1991 = vmatpush1.msra.mxu0 %v24
    %1992 = vmatprep.subr.mxu0 0.0
    %1993 = vmatpush1.msra.mxu0 %v23
    %1994 = vmatprep.subr.mxu0 0.0
    %1995 = vmatpush1.msra.mxu0 %v22
    %1996 = vmatprep.subr.mxu0 0.0
    %1997 = vmatpush1.msra.mxu0 %v21
    %1998 = vmatprep.subr.mxu0 0.0
    %1999 = vmatpush2.msra.mxu0 0.0
    %2000 = vmatprep.subr.mxu0 0.0
    %2001 = vmatpush2.msra.mxu0 0.0
    %2002 = vmatprep.subr.mxu0 0.0
    %2003 = vmatpush2.msra.mxu0 0.0
    %2004 = vmatprep.subr.mxu0 0.0
    %2005 = vmatpush2.msra.mxu0 0.0
    %2006 = vmatprep.subr.mxu0 0.0
    %2007 = vmatpush2.msra.mxu0 0.0
    %2008 = vmatprep.subr.mxu0 0.0
    %2009 = vmatpush2.msra.mxu0 0.0
    %2010 = vmatprep.subr.mxu0 0.0
    %2011 = vmatpush2.msra.mxu0 0.0
    %2012 = vmatprep.subr.mxu0 0.0
    %2013 = vmatpush2.msra.mxu0 0.0
    %2014 = vmatprep.subr.mxu0 0.0
    %2015 = vmatpush2.msra.mxu0 0.0
    %2016 = vmatprep.subr.mxu0 0.0
    %2017 = vmatpush2.msra.mxu0 0.0
    %2018 = vmatprep.subr.mxu0 0.0
    %2019 = vmatpush2.msra.mxu0 0.0
    %2020 = vmatprep.subr.mxu0 0.0
    %2021 = vmatpush2.msra.mxu0 0.0
    %2022 = vmatprep.subr.mxu0 0.0
    %2023 = vmatpush2.msra.mxu0 0.0
    %2024 = vmatprep.subr.mxu0 0.0
    %2025 = vmatpush2.msra.mxu0 0.0
    %2026 = vmatprep.subr.mxu0 0.0
    %2027 = vmatpush2.msra.mxu0 0.0
    %2028 = vmatprep.subr.mxu0 0.0
    %2029 = vmatpush2.msra.mxu0 0.0
    %2030 = vmatprep.mubr.f32.mxu0 0.0
    %2031 = vmatmul.mubr.f32.gmra.mxu0 %v1964
    %v2032 = vpop.f32.mrf.mxu0
    %v2033 = vadd.f32 0.0, %v2032
    %v2034 = vpop.f32.mrf.mxu0
    %2035 = vdwg.mxu0
    %s2036 = scalar_lea.vmem %s0, 84
    %v2037 = vld [vmem:[%s2036] sm:$0xf]
    %2038 = vrot.lane.b32.xlu0 %v1844, 16
    %v2039 = vpop.permute.xlu0 %2038
    %2041 = vrot.lane.b32.xlu0 %v1940, 32
    %v2042 = vpop.permute.xlu0 %2041
    %2044 = vrot.lane.b32.xlu0 %v1954, 48
    %v2045 = vpop.permute.xlu0 %2044
    %2048 = vrot.lane.b32.xlu0 %v2037, 64
    %v2049 = vpop.permute.xlu0 %2048
    %v2051 = vrot.slane %v2037, 1
    %2052 = vrot.lane.b32.xlu0 %v2051, 80
    %v2053 = vpop.permute.xlu0 %2052
    %v2055 = vsel %vm73, %v1830, %v2039
    %v2056 = vsel %vm75, %v2055, %v2042
    %v2057 = vsel %vm77, %v2056, %v2045
    %v2058 = vsel %vm79, %v2057, %v2049
    %v2059 = vsel %vm81, %v2058, %v2053
    %v2061 = vsel %vm83, %v2059, 0
    %2063 = vmatprep.subr.mxu0 0.0
    %2064 = vmatpush1.msra.mxu0 0.0
    %2065 = vmatprep.subr.mxu0 0.0
    %2066 = vmatpush1.msra.mxu0 0.0
    %2067 = vmatprep.subr.mxu0 0.0
    %2068 = vmatpush1.msra.mxu0 0.0
    %2069 = vmatprep.subr.mxu0 0.0
    %2070 = vmatpush1.msra.mxu0 0.0
    %2071 = vmatprep.subr.mxu0 0.0
    %2072 = vmatpush1.msra.mxu0 %v32
    %2073 = vmatprep.subr.mxu0 0.0
    %2074 = vmatpush1.msra.mxu0 %v31
    %2075 = vmatprep.subr.mxu0 0.0
    %2076 = vmatpush1.msra.mxu0 %v30
    %2077 = vmatprep.subr.mxu0 0.0
    %2078 = vmatpush1.msra.mxu0 %v29
    %2079 = vmatprep.subr.mxu0 0.0
    %2080 = vmatpush1.msra.mxu0 %v28
    %2081 = vmatprep.subr.mxu0 0.0
    %2082 = vmatpush1.msra.mxu0 %v27
    %2083 = vmatprep.subr.mxu0 0.0
    %2084 = vmatpush1.msra.mxu0 %v26
    %2085 = vmatprep.subr.mxu0 0.0
    %2086 = vmatpush1.msra.mxu0 %v25
    %2087 = vmatprep.subr.mxu0 0.0
    %2088 = vmatpush1.msra.mxu0 %v24
    %2089 = vmatprep.subr.mxu0 0.0
    %2090 = vmatpush1.msra.mxu0 %v23
    %2091 = vmatprep.subr.mxu0 0.0
    %2092 = vmatpush1.msra.mxu0 %v22
    %2093 = vmatprep.subr.mxu0 0.0
    %2094 = vmatpush1.msra.mxu0 %v21
    %2095 = vmatprep.subr.mxu0 0.0
    %2096 = vmatpush2.msra.mxu0 0.0
    %2097 = vmatprep.subr.mxu0 0.0
    %2098 = vmatpush2.msra.mxu0 0.0
    %2099 = vmatprep.subr.mxu0 0.0
    %2100 = vmatpush2.msra.mxu0 0.0
    %2101 = vmatprep.subr.mxu0 0.0
    %2102 = vmatpush2.msra.mxu0 0.0
    %2103 = vmatprep.subr.mxu0 0.0
    %2104 = vmatpush2.msra.mxu0 0.0
    %2105 = vmatprep.subr.mxu0 0.0
    %2106 = vmatpush2.msra.mxu0 0.0
    %2107 = vmatprep.subr.mxu0 0.0
    %2108 = vmatpush2.msra.mxu0 0.0
    %2109 = vmatprep.subr.mxu0 0.0
    %2110 = vmatpush2.msra.mxu0 0.0
    %2111 = vmatprep.subr.mxu0 0.0
    %2112 = vmatpush2.msra.mxu0 0.0
    %2113 = vmatprep.subr.mxu0 0.0
    %2114 = vmatpush2.msra.mxu0 0.0
    %2115 = vmatprep.subr.mxu0 0.0
    %2116 = vmatpush2.msra.mxu0 0.0
    %2117 = vmatprep.subr.mxu0 0.0
    %2118 = vmatpush2.msra.mxu0 0.0
    %2119 = vmatprep.subr.mxu0 0.0
    %2120 = vmatpush2.msra.mxu0 0.0
    %2121 = vmatprep.subr.mxu0 0.0
    %2122 = vmatpush2.msra.mxu0 0.0
    %2123 = vmatprep.subr.mxu0 0.0
    %2124 = vmatpush2.msra.mxu0 0.0
    %2125 = vmatprep.subr.mxu0 0.0
    %2126 = vmatpush2.msra.mxu0 0.0
    %2127 = vmatprep.mubr.f32.mxu0 0.0
    %2128 = vmatmul.mubr.f32.gmra.mxu0 %v2061
    %v2129 = vpop.f32.mrf.mxu0
    %v2130 = vadd.f32 0.0, %v2129
    %v2131 = vpop.f32.mrf.mxu0
    %2132 = vdwg.mxu0
    %2134 = vrot.lane.b32.xlu0 %v2033, 112
    %v2135 = vpop.permute.xlu0 %2134
    %v2137 = vmax.f32 %v2033, %v2135
    %2139 = vrot.lane.b32.xlu0 %v2130, 112
    %v2140 = vpop.permute.xlu0 %2139
    %v2142 = vmax.f32 %v2130, %v2140
    %v2143 = vmax.f32 %v2137, %v2142
    %v2144 = vadd.f32 %v2143, %v269
    %v2145 = vmax.f32 %v2144, 0.0
    %s2146 = scalar_lea.vmem %s0, 88
    %v2147 = vld [vmem:[%s2146] sm:$0xf]
    %2148 = vrot.lane.b32.xlu0 %v1954, 16
    %v2149 = vpop.permute.xlu0 %2148
    %2151 = vrot.lane.b32.xlu0 %v2037, 32
    %v2152 = vpop.permute.xlu0 %2151
    %2154 = vrot.lane.b32.xlu0 %v2051, 48
    %v2155 = vpop.permute.xlu0 %2154
    %2158 = vrot.lane.b32.xlu0 %v2147, 64
    %v2159 = vpop.permute.xlu0 %2158
    %v2161 = vrot.slane %v2147, 1
    %2162 = vrot.lane.b32.xlu0 %v2161, 80
    %v2163 = vpop.permute.xlu0 %2162
    %v2165 = vsel %vm73, %v1940, %v2149
    %v2166 = vsel %vm75, %v2165, %v2152
    %v2167 = vsel %vm77, %v2166, %v2155
    %v2168 = vsel %vm79, %v2167, %v2159
    %v2169 = vsel %vm81, %v2168, %v2163
    %v2171 = vsel %vm83, %v2169, 0
    %2173 = vmatprep.subr.mxu0 0.0
    %2174 = vmatpush1.msra.mxu0 0.0
    %2175 = vmatprep.subr.mxu0 0.0
    %2176 = vmatpush1.msra.mxu0 0.0
    %2177 = vmatprep.subr.mxu0 0.0
    %2178 = vmatpush1.msra.mxu0 0.0
    %2179 = vmatprep.subr.mxu0 0.0
    %2180 = vmatpush1.msra.mxu0 0.0
    %2181 = vmatprep.subr.mxu0 0.0
    %2182 = vmatpush1.msra.mxu0 %v32
    %2183 = vmatprep.subr.mxu0 0.0
    %2184 = vmatpush1.msra.mxu0 %v31
    %2185 = vmatprep.subr.mxu0 0.0
    %2186 = vmatpush1.msra.mxu0 %v30
    %2187 = vmatprep.subr.mxu0 0.0
    %2188 = vmatpush1.msra.mxu0 %v29
    %2189 = vmatprep.subr.mxu0 0.0
    %2190 = vmatpush1.msra.mxu0 %v28
    %2191 = vmatprep.subr.mxu0 0.0
    %2192 = vmatpush1.msra.mxu0 %v27
    %2193 = vmatprep.subr.mxu0 0.0
    %2194 = vmatpush1.msra.mxu0 %v26
    %2195 = vmatprep.subr.mxu0 0.0
    %2196 = vmatpush1.msra.mxu0 %v25
    %2197 = vmatprep.subr.mxu0 0.0
    %2198 = vmatpush1.msra.mxu0 %v24
    %2199 = vmatprep.subr.mxu0 0.0
    %2200 = vmatpush1.msra.mxu0 %v23
    %2201 = vmatprep.subr.mxu0 0.0
    %2202 = vmatpush1.msra.mxu0 %v22
    %2203 = vmatprep.subr.mxu0 0.0
    %2204 = vmatpush1.msra.mxu0 %v21
    %2205 = vmatprep.subr.mxu0 0.0
    %2206 = vmatpush2.msra.mxu0 0.0
    %2207 = vmatprep.subr.mxu0 0.0
    %2208 = vmatpush2.msra.mxu0 0.0
    %2209 = vmatprep.subr.mxu0 0.0
    %2210 = vmatpush2.msra.mxu0 0.0
    %2211 = vmatprep.subr.mxu0 0.0
    %2212 = vmatpush2.msra.mxu0 0.0
    %2213 = vmatprep.subr.mxu0 0.0
    %2214 = vmatpush2.msra.mxu0 0.0
    %2215 = vmatprep.subr.mxu0 0.0
    %2216 = vmatpush2.msra.mxu0 0.0
    %2217 = vmatprep.subr.mxu0 0.0
    %2218 = vmatpush2.msra.mxu0 0.0
    %2219 = vmatprep.subr.mxu0 0.0
    %2220 = vmatpush2.msra.mxu0 0.0
    %2221 = vmatprep.subr.mxu0 0.0
    %2222 = vmatpush2.msra.mxu0 0.0
    %2223 = vmatprep.subr.mxu0 0.0
    %2224 = vmatpush2.msra.mxu0 0.0
    %2225 = vmatprep.subr.mxu0 0.0
    %2226 = vmatpush2.msra.mxu0 0.0
    %2227 = vmatprep.subr.mxu0 0.0
    %2228 = vmatpush2.msra.mxu0 0.0
    %2229 = vmatprep.subr.mxu0 0.0
    %2230 = vmatpush2.msra.mxu0 0.0
    %2231 = vmatprep.subr.mxu0 0.0
    %2232 = vmatpush2.msra.mxu0 0.0
    %2233 = vmatprep.subr.mxu0 0.0
    %2234 = vmatpush2.msra.mxu0 0.0
    %2235 = vmatprep.subr.mxu0 0.0
    %2236 = vmatpush2.msra.mxu0 0.0
    %2237 = vmatprep.mubr.f32.mxu0 0.0
    %2238 = vmatmul.mubr.f32.gmra.mxu0 %v2171
    %v2239 = vpop.f32.mrf.mxu0
    %v2240 = vadd.f32 0.0, %v2239
    %v2241 = vpop.f32.mrf.mxu0
    %2242 = vdwg.mxu0
    %s2243 = scalar_lea.vmem %s0, 92
    %v2244 = vld [vmem:[%s2243] sm:$0xf]
    %2245 = vrot.lane.b32.xlu0 %v2051, 16
    %v2246 = vpop.permute.xlu0 %2245
    %2248 = vrot.lane.b32.xlu0 %v2147, 32
    %v2249 = vpop.permute.xlu0 %2248
    %2251 = vrot.lane.b32.xlu0 %v2161, 48
    %v2252 = vpop.permute.xlu0 %2251
    %2255 = vrot.lane.b32.xlu0 %v2244, 64
    %v2256 = vpop.permute.xlu0 %2255
    %v2258 = vrot.slane %v2244, 1
    %2259 = vrot.lane.b32.xlu0 %v2258, 80
    %v2260 = vpop.permute.xlu0 %2259
    %v2262 = vsel %vm73, %v2037, %v2246
    %v2263 = vsel %vm75, %v2262, %v2249
    %v2264 = vsel %vm77, %v2263, %v2252
    %v2265 = vsel %vm79, %v2264, %v2256
    %v2266 = vsel %vm81, %v2265, %v2260
    %v2268 = vsel %vm83, %v2266, 0
    %2270 = vmatprep.subr.mxu0 0.0
    %2271 = vmatpush1.msra.mxu0 0.0
    %2272 = vmatprep.subr.mxu0 0.0
    %2273 = vmatpush1.msra.mxu0 0.0
    %2274 = vmatprep.subr.mxu0 0.0
    %2275 = vmatpush1.msra.mxu0 0.0
    %2276 = vmatprep.subr.mxu0 0.0
    %2277 = vmatpush1.msra.mxu0 0.0
    %2278 = vmatprep.subr.mxu0 0.0
    %2279 = vmatpush1.msra.mxu0 %v32
    %2280 = vmatprep.subr.mxu0 0.0
    %2281 = vmatpush1.msra.mxu0 %v31
    %2282 = vmatprep.subr.mxu0 0.0
    %2283 = vmatpush1.msra.mxu0 %v30
    %2284 = vmatprep.subr.mxu0 0.0
    %2285 = vmatpush1.msra.mxu0 %v29
    %2286 = vmatprep.subr.mxu0 0.0
    %2287 = vmatpush1.msra.mxu0 %v28
    %2288 = vmatprep.subr.mxu0 0.0
    %2289 = vmatpush1.msra.mxu0 %v27
    %2290 = vmatprep.subr.mxu0 0.0
    %2291 = vmatpush1.msra.mxu0 %v26
    %2292 = vmatprep.subr.mxu0 0.0
    %2293 = vmatpush1.msra.mxu0 %v25
    %2294 = vmatprep.subr.mxu0 0.0
    %2295 = vmatpush1.msra.mxu0 %v24
    %2296 = vmatprep.subr.mxu0 0.0
    %2297 = vmatpush1.msra.mxu0 %v23
    %2298 = vmatprep.subr.mxu0 0.0
    %2299 = vmatpush1.msra.mxu0 %v22
    %2300 = vmatprep.subr.mxu0 0.0
    %2301 = vmatpush1.msra.mxu0 %v21
    %2302 = vmatprep.subr.mxu0 0.0
    %2303 = vmatpush2.msra.mxu0 0.0
    %2304 = vmatprep.subr.mxu0 0.0
    %2305 = vmatpush2.msra.mxu0 0.0
    %2306 = vmatprep.subr.mxu0 0.0
    %2307 = vmatpush2.msra.mxu0 0.0
    %2308 = vmatprep.subr.mxu0 0.0
    %2309 = vmatpush2.msra.mxu0 0.0
    %2310 = vmatprep.subr.mxu0 0.0
    %2311 = vmatpush2.msra.mxu0 0.0
    %2312 = vmatprep.subr.mxu0 0.0
    %2313 = vmatpush2.msra.mxu0 0.0
    %2314 = vmatprep.subr.mxu0 0.0
    %2315 = vmatpush2.msra.mxu0 0.0
    %2316 = vmatprep.subr.mxu0 0.0
    %2317 = vmatpush2.msra.mxu0 0.0
    %2318 = vmatprep.subr.mxu0 0.0
    %2319 = vmatpush2.msra.mxu0 0.0
    %2320 = vmatprep.subr.mxu0 0.0
    %2321 = vmatpush2.msra.mxu0 0.0
    %2322 = vmatprep.subr.mxu0 0.0
    %2323 = vmatpush2.msra.mxu0 0.0
    %2324 = vmatprep.subr.mxu0 0.0
    %2325 = vmatpush2.msra.mxu0 0.0
    %2326 = vmatprep.subr.mxu0 0.0
    %2327 = vmatpush2.msra.mxu0 0.0
    %2328 = vmatprep.subr.mxu0 0.0
    %2329 = vmatpush2.msra.mxu0 0.0
    %2330 = vmatprep.subr.mxu0 0.0
    %2331 = vmatpush2.msra.mxu0 0.0
    %2332 = vmatprep.subr.mxu0 0.0
    %2333 = vmatpush2.msra.mxu0 0.0
    %2334 = vmatprep.mubr.f32.mxu0 0.0
    %2335 = vmatmul.mubr.f32.gmra.mxu0 %v2268
    %v2336 = vpop.f32.mrf.mxu0
    %v2337 = vadd.f32 0.0, %v2336
    %v2338 = vpop.f32.mrf.mxu0
    %2339 = vdwg.mxu0
    %2341 = vrot.lane.b32.xlu0 %v2240, 112
    %v2342 = vpop.permute.xlu0 %2341
    %v2344 = vmax.f32 %v2240, %v2342
    %2346 = vrot.lane.b32.xlu0 %v2337, 112
    %v2347 = vpop.permute.xlu0 %2346
    %v2349 = vmax.f32 %v2337, %v2347
    %v2350 = vmax.f32 %v2344, %v2349
    %v2351 = vadd.f32 %v2350, %v269
    %v2352 = vmax.f32 %v2351, 0.0
    %s2353 = scalar_lea.vmem %s0, 96
    %v2354 = vld [vmem:[%s2353] sm:$0xf]
    %2355 = vrot.lane.b32.xlu0 %v2161, 16
    %v2356 = vpop.permute.xlu0 %2355
    %2358 = vrot.lane.b32.xlu0 %v2244, 32
    %v2359 = vpop.permute.xlu0 %2358
    %2361 = vrot.lane.b32.xlu0 %v2258, 48
    %v2362 = vpop.permute.xlu0 %2361
    %2365 = vrot.lane.b32.xlu0 %v2354, 64
    %v2366 = vpop.permute.xlu0 %2365
    %v2368 = vrot.slane %v2354, 1
    %2369 = vrot.lane.b32.xlu0 %v2368, 80
    %v2370 = vpop.permute.xlu0 %2369
    %v2372 = vsel %vm73, %v2147, %v2356
    %v2373 = vsel %vm75, %v2372, %v2359
    %v2374 = vsel %vm77, %v2373, %v2362
    %v2375 = vsel %vm79, %v2374, %v2366
    %v2376 = vsel %vm81, %v2375, %v2370
    %v2378 = vsel %vm83, %v2376, 0
    %2380 = vmatprep.subr.mxu0 0.0
    %2381 = vmatpush1.msra.mxu0 0.0
    %2382 = vmatprep.subr.mxu0 0.0
    %2383 = vmatpush1.msra.mxu0 0.0
    %2384 = vmatprep.subr.mxu0 0.0
    %2385 = vmatpush1.msra.mxu0 0.0
    %2386 = vmatprep.subr.mxu0 0.0
    %2387 = vmatpush1.msra.mxu0 0.0
    %2388 = vmatprep.subr.mxu0 0.0
    %2389 = vmatpush1.msra.mxu0 %v32
    %2390 = vmatprep.subr.mxu0 0.0
    %2391 = vmatpush1.msra.mxu0 %v31
    %2392 = vmatprep.subr.mxu0 0.0
    %2393 = vmatpush1.msra.mxu0 %v30
    %2394 = vmatprep.subr.mxu0 0.0
    %2395 = vmatpush1.msra.mxu0 %v29
    %2396 = vmatprep.subr.mxu0 0.0
    %2397 = vmatpush1.msra.mxu0 %v28
    %2398 = vmatprep.subr.mxu0 0.0
    %2399 = vmatpush1.msra.mxu0 %v27
    %2400 = vmatprep.subr.mxu0 0.0
    %2401 = vmatpush1.msra.mxu0 %v26
    %2402 = vmatprep.subr.mxu0 0.0
    %2403 = vmatpush1.msra.mxu0 %v25
    %2404 = vmatprep.subr.mxu0 0.0
    %2405 = vmatpush1.msra.mxu0 %v24
    %2406 = vmatprep.subr.mxu0 0.0
    %2407 = vmatpush1.msra.mxu0 %v23
    %2408 = vmatprep.subr.mxu0 0.0
    %2409 = vmatpush1.msra.mxu0 %v22
    %2410 = vmatprep.subr.mxu0 0.0
    %2411 = vmatpush1.msra.mxu0 %v21
    %2412 = vmatprep.subr.mxu0 0.0
    %2413 = vmatpush2.msra.mxu0 0.0
    %2414 = vmatprep.subr.mxu0 0.0
    %2415 = vmatpush2.msra.mxu0 0.0
    %2416 = vmatprep.subr.mxu0 0.0
    %2417 = vmatpush2.msra.mxu0 0.0
    %2418 = vmatprep.subr.mxu0 0.0
    %2419 = vmatpush2.msra.mxu0 0.0
    %2420 = vmatprep.subr.mxu0 0.0
    %2421 = vmatpush2.msra.mxu0 0.0
    %2422 = vmatprep.subr.mxu0 0.0
    %2423 = vmatpush2.msra.mxu0 0.0
    %2424 = vmatprep.subr.mxu0 0.0
    %2425 = vmatpush2.msra.mxu0 0.0
    %2426 = vmatprep.subr.mxu0 0.0
    %2427 = vmatpush2.msra.mxu0 0.0
    %2428 = vmatprep.subr.mxu0 0.0
    %2429 = vmatpush2.msra.mxu0 0.0
    %2430 = vmatprep.subr.mxu0 0.0
    %2431 = vmatpush2.msra.mxu0 0.0
    %2432 = vmatprep.subr.mxu0 0.0
    %2433 = vmatpush2.msra.mxu0 0.0
    %2434 = vmatprep.subr.mxu0 0.0
    %2435 = vmatpush2.msra.mxu0 0.0
    %2436 = vmatprep.subr.mxu0 0.0
    %2437 = vmatpush2.msra.mxu0 0.0
    %2438 = vmatprep.subr.mxu0 0.0
    %2439 = vmatpush2.msra.mxu0 0.0
    %2440 = vmatprep.subr.mxu0 0.0
    %2441 = vmatpush2.msra.mxu0 0.0
    %2442 = vmatprep.subr.mxu0 0.0
    %2443 = vmatpush2.msra.mxu0 0.0
    %2444 = vmatprep.mubr.f32.mxu0 0.0
    %2445 = vmatmul.mubr.f32.gmra.mxu0 %v2378
    %v2446 = vpop.f32.mrf.mxu0
    %v2447 = vadd.f32 0.0, %v2446
    %v2448 = vpop.f32.mrf.mxu0
    %2449 = vdwg.mxu0
    %s2450 = scalar_lea.vmem %s0, 100
    %v2451 = vld [vmem:[%s2450] sm:$0xf]
    %2452 = vrot.lane.b32.xlu0 %v2258, 16
    %v2453 = vpop.permute.xlu0 %2452
    %2455 = vrot.lane.b32.xlu0 %v2354, 32
    %v2456 = vpop.permute.xlu0 %2455
    %2458 = vrot.lane.b32.xlu0 %v2368, 48
    %v2459 = vpop.permute.xlu0 %2458
    %2462 = vrot.lane.b32.xlu0 %v2451, 64
    %v2463 = vpop.permute.xlu0 %2462
    %v2465 = vrot.slane %v2451, 1
    %2466 = vrot.lane.b32.xlu0 %v2465, 80
    %v2467 = vpop.permute.xlu0 %2466
    %v2469 = vsel %vm73, %v2244, %v2453
    %v2470 = vsel %vm75, %v2469, %v2456
    %v2471 = vsel %vm77, %v2470, %v2459
    %v2472 = vsel %vm79, %v2471, %v2463
    %v2473 = vsel %vm81, %v2472, %v2467
    %v2475 = vsel %vm83, %v2473, 0
    %2477 = vmatprep.subr.mxu0 0.0
    %2478 = vmatpush1.msra.mxu0 0.0
    %2479 = vmatprep.subr.mxu0 0.0
    %2480 = vmatpush1.msra.mxu0 0.0
    %2481 = vmatprep.subr.mxu0 0.0
    %2482 = vmatpush1.msra.mxu0 0.0
    %2483 = vmatprep.subr.mxu0 0.0
    %2484 = vmatpush1.msra.mxu0 0.0
    %2485 = vmatprep.subr.mxu0 0.0
    %2486 = vmatpush1.msra.mxu0 %v32
    %2487 = vmatprep.subr.mxu0 0.0
    %2488 = vmatpush1.msra.mxu0 %v31
    %2489 = vmatprep.subr.mxu0 0.0
    %2490 = vmatpush1.msra.mxu0 %v30
    %2491 = vmatprep.subr.mxu0 0.0
    %2492 = vmatpush1.msra.mxu0 %v29
    %2493 = vmatprep.subr.mxu0 0.0
    %2494 = vmatpush1.msra.mxu0 %v28
    %2495 = vmatprep.subr.mxu0 0.0
    %2496 = vmatpush1.msra.mxu0 %v27
    %2497 = vmatprep.subr.mxu0 0.0
    %2498 = vmatpush1.msra.mxu0 %v26
    %2499 = vmatprep.subr.mxu0 0.0
    %2500 = vmatpush1.msra.mxu0 %v25
    %2501 = vmatprep.subr.mxu0 0.0
    %2502 = vmatpush1.msra.mxu0 %v24
    %2503 = vmatprep.subr.mxu0 0.0
    %2504 = vmatpush1.msra.mxu0 %v23
    %2505 = vmatprep.subr.mxu0 0.0
    %2506 = vmatpush1.msra.mxu0 %v22
    %2507 = vmatprep.subr.mxu0 0.0
    %2508 = vmatpush1.msra.mxu0 %v21
    %2509 = vmatprep.subr.mxu0 0.0
    %2510 = vmatpush2.msra.mxu0 0.0
    %2511 = vmatprep.subr.mxu0 0.0
    %2512 = vmatpush2.msra.mxu0 0.0
    %2513 = vmatprep.subr.mxu0 0.0
    %2514 = vmatpush2.msra.mxu0 0.0
    %2515 = vmatprep.subr.mxu0 0.0
    %2516 = vmatpush2.msra.mxu0 0.0
    %2517 = vmatprep.subr.mxu0 0.0
    %2518 = vmatpush2.msra.mxu0 0.0
    %2519 = vmatprep.subr.mxu0 0.0
    %2520 = vmatpush2.msra.mxu0 0.0
    %2521 = vmatprep.subr.mxu0 0.0
    %2522 = vmatpush2.msra.mxu0 0.0
    %2523 = vmatprep.subr.mxu0 0.0
    %2524 = vmatpush2.msra.mxu0 0.0
    %2525 = vmatprep.subr.mxu0 0.0
    %2526 = vmatpush2.msra.mxu0 0.0
    %2527 = vmatprep.subr.mxu0 0.0
    %2528 = vmatpush2.msra.mxu0 0.0
    %2529 = vmatprep.subr.mxu0 0.0
    %2530 = vmatpush2.msra.mxu0 0.0
    %2531 = vmatprep.subr.mxu0 0.0
    %2532 = vmatpush2.msra.mxu0 0.0
    %2533 = vmatprep.subr.mxu0 0.0
    %2534 = vmatpush2.msra.mxu0 0.0
    %2535 = vmatprep.subr.mxu0 0.0
    %2536 = vmatpush2.msra.mxu0 0.0
    %2537 = vmatprep.subr.mxu0 0.0
    %2538 = vmatpush2.msra.mxu0 0.0
    %2539 = vmatprep.subr.mxu0 0.0
    %2540 = vmatpush2.msra.mxu0 0.0
    %2541 = vmatprep.mubr.f32.mxu0 0.0
    %2542 = vmatmul.mubr.f32.gmra.mxu0 %v2475
    %v2543 = vpop.f32.mrf.mxu0
    %v2544 = vadd.f32 0.0, %v2543
    %v2545 = vpop.f32.mrf.mxu0
    %2546 = vdwg.mxu0
    %2548 = vrot.lane.b32.xlu0 %v2447, 112
    %v2549 = vpop.permute.xlu0 %2548
    %v2551 = vmax.f32 %v2447, %v2549
    %2553 = vrot.lane.b32.xlu0 %v2544, 112
    %v2554 = vpop.permute.xlu0 %2553
    %v2556 = vmax.f32 %v2544, %v2554
    %v2557 = vmax.f32 %v2551, %v2556
    %v2558 = vadd.f32 %v2557, %v269
    %v2559 = vmax.f32 %v2558, 0.0
    %s2560 = scalar_lea.vmem %s0, 104
    %v2561 = vld [vmem:[%s2560] sm:$0xf]
    %2562 = vrot.lane.b32.xlu0 %v2368, 16
    %v2563 = vpop.permute.xlu0 %2562
    %2565 = vrot.lane.b32.xlu0 %v2451, 32
    %v2566 = vpop.permute.xlu0 %2565
    %2568 = vrot.lane.b32.xlu0 %v2465, 48
    %v2569 = vpop.permute.xlu0 %2568
    %2572 = vrot.lane.b32.xlu0 %v2561, 64
    %v2573 = vpop.permute.xlu0 %2572
    %v2575 = vrot.slane %v2561, 1
    %2576 = vrot.lane.b32.xlu0 %v2575, 80
    %v2577 = vpop.permute.xlu0 %2576
    %v2579 = vsel %vm73, %v2354, %v2563
    %v2580 = vsel %vm75, %v2579, %v2566
    %v2581 = vsel %vm77, %v2580, %v2569
    %v2582 = vsel %vm79, %v2581, %v2573
    %v2583 = vsel %vm81, %v2582, %v2577
    %v2585 = vsel %vm83, %v2583, 0
    %2587 = vmatprep.subr.mxu0 0.0
    %2588 = vmatpush1.msra.mxu0 0.0
    %2589 = vmatprep.subr.mxu0 0.0
    %2590 = vmatpush1.msra.mxu0 0.0
    %2591 = vmatprep.subr.mxu0 0.0
    %2592 = vmatpush1.msra.mxu0 0.0
    %2593 = vmatprep.subr.mxu0 0.0
    %2594 = vmatpush1.msra.mxu0 0.0
    %2595 = vmatprep.subr.mxu0 0.0
    %2596 = vmatpush1.msra.mxu0 %v32
    %2597 = vmatprep.subr.mxu0 0.0
    %2598 = vmatpush1.msra.mxu0 %v31
    %2599 = vmatprep.subr.mxu0 0.0
    %2600 = vmatpush1.msra.mxu0 %v30
    %2601 = vmatprep.subr.mxu0 0.0
    %2602 = vmatpush1.msra.mxu0 %v29
    %2603 = vmatprep.subr.mxu0 0.0
    %2604 = vmatpush1.msra.mxu0 %v28
    %2605 = vmatprep.subr.mxu0 0.0
    %2606 = vmatpush1.msra.mxu0 %v27
    %2607 = vmatprep.subr.mxu0 0.0
    %2608 = vmatpush1.msra.mxu0 %v26
    %2609 = vmatprep.subr.mxu0 0.0
    %2610 = vmatpush1.msra.mxu0 %v25
    %2611 = vmatprep.subr.mxu0 0.0
    %2612 = vmatpush1.msra.mxu0 %v24
    %2613 = vmatprep.subr.mxu0 0.0
    %2614 = vmatpush1.msra.mxu0 %v23
    %2615 = vmatprep.subr.mxu0 0.0
    %2616 = vmatpush1.msra.mxu0 %v22
    %2617 = vmatprep.subr.mxu0 0.0
    %2618 = vmatpush1.msra.mxu0 %v21
    %2619 = vmatprep.subr.mxu0 0.0
    %2620 = vmatpush2.msra.mxu0 0.0
    %2621 = vmatprep.subr.mxu0 0.0
    %2622 = vmatpush2.msra.mxu0 0.0
    %2623 = vmatprep.subr.mxu0 0.0
    %2624 = vmatpush2.msra.mxu0 0.0
    %2625 = vmatprep.subr.mxu0 0.0
    %2626 = vmatpush2.msra.mxu0 0.0
    %2627 = vmatprep.subr.mxu0 0.0
    %2628 = vmatpush2.msra.mxu0 0.0
    %2629 = vmatprep.subr.mxu0 0.0
    %2630 = vmatpush2.msra.mxu0 0.0
    %2631 = vmatprep.subr.mxu0 0.0
    %2632 = vmatpush2.msra.mxu0 0.0
    %2633 = vmatprep.subr.mxu0 0.0
    %2634 = vmatpush2.msra.mxu0 0.0
    %2635 = vmatprep.subr.mxu0 0.0
    %2636 = vmatpush2.msra.mxu0 0.0
    %2637 = vmatprep.subr.mxu0 0.0
    %2638 = vmatpush2.msra.mxu0 0.0
    %2639 = vmatprep.subr.mxu0 0.0
    %2640 = vmatpush2.msra.mxu0 0.0
    %2641 = vmatprep.subr.mxu0 0.0
    %2642 = vmatpush2.msra.mxu0 0.0
    %2643 = vmatprep.subr.mxu0 0.0
    %2644 = vmatpush2.msra.mxu0 0.0
    %2645 = vmatprep.subr.mxu0 0.0
    %2646 = vmatpush2.msra.mxu0 0.0
    %2647 = vmatprep.subr.mxu0 0.0
    %2648 = vmatpush2.msra.mxu0 0.0
    %2649 = vmatprep.subr.mxu0 0.0
    %2650 = vmatpush2.msra.mxu0 0.0
    %2651 = vmatprep.mubr.f32.mxu0 0.0
    %2652 = vmatmul.mubr.f32.gmra.mxu0 %v2585
    %v2653 = vpop.f32.mrf.mxu0
    %v2654 = vadd.f32 0.0, %v2653
    %v2655 = vpop.f32.mrf.mxu0
    %2656 = vdwg.mxu0
    %s2657 = scalar_lea.vmem %s0, 108
    %v2658 = vld [vmem:[%s2657] sm:$0xf]
    %2659 = vrot.lane.b32.xlu0 %v2465, 16
    %v2660 = vpop.permute.xlu0 %2659
    %2662 = vrot.lane.b32.xlu0 %v2561, 32
    %v2663 = vpop.permute.xlu0 %2662
    %2665 = vrot.lane.b32.xlu0 %v2575, 48
    %v2666 = vpop.permute.xlu0 %2665
    %2669 = vrot.lane.b32.xlu0 %v2658, 64
    %v2670 = vpop.permute.xlu0 %2669
    %v2672 = vrot.slane %v2658, 1
    %2673 = vrot.lane.b32.xlu0 %v2672, 80
    %v2674 = vpop.permute.xlu0 %2673
    %v2676 = vsel %vm73, %v2451, %v2660
    %v2677 = vsel %vm75, %v2676, %v2663
    %v2678 = vsel %vm77, %v2677, %v2666
    %v2679 = vsel %vm79, %v2678, %v2670
    %v2680 = vsel %vm81, %v2679, %v2674
    %v2682 = vsel %vm83, %v2680, 0
    %2684 = vmatprep.subr.mxu0 0.0
    %2685 = vmatpush1.msra.mxu0 0.0
    %2686 = vmatprep.subr.mxu0 0.0
    %2687 = vmatpush1.msra.mxu0 0.0
    %2688 = vmatprep.subr.mxu0 0.0
    %2689 = vmatpush1.msra.mxu0 0.0
    %2690 = vmatprep.subr.mxu0 0.0
    %2691 = vmatpush1.msra.mxu0 0.0
    %2692 = vmatprep.subr.mxu0 0.0
    %2693 = vmatpush1.msra.mxu0 %v32
    %2694 = vmatprep.subr.mxu0 0.0
    %2695 = vmatpush1.msra.mxu0 %v31
    %2696 = vmatprep.subr.mxu0 0.0
    %2697 = vmatpush1.msra.mxu0 %v30
    %2698 = vmatprep.subr.mxu0 0.0
    %2699 = vmatpush1.msra.mxu0 %v29
    %2700 = vmatprep.subr.mxu0 0.0
    %2701 = vmatpush1.msra.mxu0 %v28
    %2702 = vmatprep.subr.mxu0 0.0
    %2703 = vmatpush1.msra.mxu0 %v27
    %2704 = vmatprep.subr.mxu0 0.0
    %2705 = vmatpush1.msra.mxu0 %v26
    %2706 = vmatprep.subr.mxu0 0.0
    %2707 = vmatpush1.msra.mxu0 %v25
    %2708 = vmatprep.subr.mxu0 0.0
    %2709 = vmatpush1.msra.mxu0 %v24
    %2710 = vmatprep.subr.mxu0 0.0
    %2711 = vmatpush1.msra.mxu0 %v23
    %2712 = vmatprep.subr.mxu0 0.0
    %2713 = vmatpush1.msra.mxu0 %v22
    %2714 = vmatprep.subr.mxu0 0.0
    %2715 = vmatpush1.msra.mxu0 %v21
    %2716 = vmatprep.subr.mxu0 0.0
    %2717 = vmatpush2.msra.mxu0 0.0
    %2718 = vmatprep.subr.mxu0 0.0
    %2719 = vmatpush2.msra.mxu0 0.0
    %2720 = vmatprep.subr.mxu0 0.0
    %2721 = vmatpush2.msra.mxu0 0.0
    %2722 = vmatprep.subr.mxu0 0.0
    %2723 = vmatpush2.msra.mxu0 0.0
    %2724 = vmatprep.subr.mxu0 0.0
    %2725 = vmatpush2.msra.mxu0 0.0
    %2726 = vmatprep.subr.mxu0 0.0
    %2727 = vmatpush2.msra.mxu0 0.0
    %2728 = vmatprep.subr.mxu0 0.0
    %2729 = vmatpush2.msra.mxu0 0.0
    %2730 = vmatprep.subr.mxu0 0.0
    %2731 = vmatpush2.msra.mxu0 0.0
    %2732 = vmatprep.subr.mxu0 0.0
    %2733 = vmatpush2.msra.mxu0 0.0
    %2734 = vmatprep.subr.mxu0 0.0
    %2735 = vmatpush2.msra.mxu0 0.0
    %2736 = vmatprep.subr.mxu0 0.0
    %2737 = vmatpush2.msra.mxu0 0.0
    %2738 = vmatprep.subr.mxu0 0.0
    %2739 = vmatpush2.msra.mxu0 0.0
    %2740 = vmatprep.subr.mxu0 0.0
    %2741 = vmatpush2.msra.mxu0 0.0
    %2742 = vmatprep.subr.mxu0 0.0
    %2743 = vmatpush2.msra.mxu0 0.0
    %2744 = vmatprep.subr.mxu0 0.0
    %2745 = vmatpush2.msra.mxu0 0.0
    %2746 = vmatprep.subr.mxu0 0.0
    %2747 = vmatpush2.msra.mxu0 0.0
    %2748 = vmatprep.mubr.f32.mxu0 0.0
    %2749 = vmatmul.mubr.f32.gmra.mxu0 %v2682
    %v2750 = vpop.f32.mrf.mxu0
    %v2751 = vadd.f32 0.0, %v2750
    %v2752 = vpop.f32.mrf.mxu0
    %2753 = vdwg.mxu0
    %2755 = vrot.lane.b32.xlu0 %v2654, 112
    %v2756 = vpop.permute.xlu0 %2755
    %v2758 = vmax.f32 %v2654, %v2756
    %2760 = vrot.lane.b32.xlu0 %v2751, 112
    %v2761 = vpop.permute.xlu0 %2760
    %v2763 = vmax.f32 %v2751, %v2761
    %v2764 = vmax.f32 %v2758, %v2763
    %v2765 = vadd.f32 %v2764, %v269
    %v2766 = vmax.f32 %v2765, 0.0
    %s2767 = scalar_lea.vmem %s0, 112
    %v2768 = vld [vmem:[%s2767] sm:$0xf]
    %2769 = vrot.lane.b32.xlu0 %v2575, 16
    %v2770 = vpop.permute.xlu0 %2769
    %2772 = vrot.lane.b32.xlu0 %v2658, 32
    %v2773 = vpop.permute.xlu0 %2772
    %2775 = vrot.lane.b32.xlu0 %v2672, 48
    %v2776 = vpop.permute.xlu0 %2775
    %2779 = vrot.lane.b32.xlu0 %v2768, 64
    %v2780 = vpop.permute.xlu0 %2779
    %v2782 = vrot.slane %v2768, 1
    %2783 = vrot.lane.b32.xlu0 %v2782, 80
    %v2784 = vpop.permute.xlu0 %2783
    %v2786 = vsel %vm73, %v2561, %v2770
    %v2787 = vsel %vm75, %v2786, %v2773
    %v2788 = vsel %vm77, %v2787, %v2776
    %v2789 = vsel %vm79, %v2788, %v2780
    %v2790 = vsel %vm81, %v2789, %v2784
    %v2792 = vsel %vm83, %v2790, 0
    %2794 = vmatprep.subr.mxu0 0.0
    %2795 = vmatpush1.msra.mxu0 0.0
    %2796 = vmatprep.subr.mxu0 0.0
    %2797 = vmatpush1.msra.mxu0 0.0
    %2798 = vmatprep.subr.mxu0 0.0
    %2799 = vmatpush1.msra.mxu0 0.0
    %2800 = vmatprep.subr.mxu0 0.0
    %2801 = vmatpush1.msra.mxu0 0.0
    %2802 = vmatprep.subr.mxu0 0.0
    %2803 = vmatpush1.msra.mxu0 %v32
    %2804 = vmatprep.subr.mxu0 0.0
    %2805 = vmatpush1.msra.mxu0 %v31
    %2806 = vmatprep.subr.mxu0 0.0
    %2807 = vmatpush1.msra.mxu0 %v30
    %2808 = vmatprep.subr.mxu0 0.0
    %2809 = vmatpush1.msra.mxu0 %v29
    %2810 = vmatprep.subr.mxu0 0.0
    %2811 = vmatpush1.msra.mxu0 %v28
    %2812 = vmatprep.subr.mxu0 0.0
    %2813 = vmatpush1.msra.mxu0 %v27
    %2814 = vmatprep.subr.mxu0 0.0
    %2815 = vmatpush1.msra.mxu0 %v26
    %2816 = vmatprep.subr.mxu0 0.0
    %2817 = vmatpush1.msra.mxu0 %v25
    %2818 = vmatprep.subr.mxu0 0.0
    %2819 = vmatpush1.msra.mxu0 %v24
    %2820 = vmatprep.subr.mxu0 0.0
    %2821 = vmatpush1.msra.mxu0 %v23
    %2822 = vmatprep.subr.mxu0 0.0
    %2823 = vmatpush1.msra.mxu0 %v22
    %2824 = vmatprep.subr.mxu0 0.0
    %2825 = vmatpush1.msra.mxu0 %v21
    %2826 = vmatprep.subr.mxu0 0.0
    %2827 = vmatpush2.msra.mxu0 0.0
    %2828 = vmatprep.subr.mxu0 0.0
    %2829 = vmatpush2.msra.mxu0 0.0
    %2830 = vmatprep.subr.mxu0 0.0
    %2831 = vmatpush2.msra.mxu0 0.0
    %2832 = vmatprep.subr.mxu0 0.0
    %2833 = vmatpush2.msra.mxu0 0.0
    %2834 = vmatprep.subr.mxu0 0.0
    %2835 = vmatpush2.msra.mxu0 0.0
    %2836 = vmatprep.subr.mxu0 0.0
    %2837 = vmatpush2.msra.mxu0 0.0
    %2838 = vmatprep.subr.mxu0 0.0
    %2839 = vmatpush2.msra.mxu0 0.0
    %2840 = vmatprep.subr.mxu0 0.0
    %2841 = vmatpush2.msra.mxu0 0.0
    %2842 = vmatprep.subr.mxu0 0.0
    %2843 = vmatpush2.msra.mxu0 0.0
    %2844 = vmatprep.subr.mxu0 0.0
    %2845 = vmatpush2.msra.mxu0 0.0
    %2846 = vmatprep.subr.mxu0 0.0
    %2847 = vmatpush2.msra.mxu0 0.0
    %2848 = vmatprep.subr.mxu0 0.0
    %2849 = vmatpush2.msra.mxu0 0.0
    %2850 = vmatprep.subr.mxu0 0.0
    %2851 = vmatpush2.msra.mxu0 0.0
    %2852 = vmatprep.subr.mxu0 0.0
    %2853 = vmatpush2.msra.mxu0 0.0
    %2854 = vmatprep.subr.mxu0 0.0
    %2855 = vmatpush2.msra.mxu0 0.0
    %2856 = vmatprep.subr.mxu0 0.0
    %2857 = vmatpush2.msra.mxu0 0.0
    %2858 = vmatprep.mubr.f32.mxu0 0.0
    %2859 = vmatmul.mubr.f32.gmra.mxu0 %v2792
    %v2860 = vpop.f32.mrf.mxu0
    %v2861 = vadd.f32 0.0, %v2860
    %v2862 = vpop.f32.mrf.mxu0
    %2863 = vdwg.mxu0
    %s2864 = scalar_lea.vmem %s0, 116
    %v2865 = vld [vmem:[%s2864] sm:$0xf]
    %2866 = vrot.lane.b32.xlu0 %v2672, 16
    %v2867 = vpop.permute.xlu0 %2866
    %2869 = vrot.lane.b32.xlu0 %v2768, 32
    %v2870 = vpop.permute.xlu0 %2869
    %2872 = vrot.lane.b32.xlu0 %v2782, 48
    %v2873 = vpop.permute.xlu0 %2872
    %2876 = vrot.lane.b32.xlu0 %v2865, 64
    %v2877 = vpop.permute.xlu0 %2876
    %v2879 = vrot.slane %v2865, 1
    %2880 = vrot.lane.b32.xlu0 %v2879, 80
    %v2881 = vpop.permute.xlu0 %2880
    %v2883 = vsel %vm73, %v2658, %v2867
    %v2884 = vsel %vm75, %v2883, %v2870
    %v2885 = vsel %vm77, %v2884, %v2873
    %v2886 = vsel %vm79, %v2885, %v2877
    %v2887 = vsel %vm81, %v2886, %v2881
    %v2889 = vsel %vm83, %v2887, 0
    %2891 = vmatprep.subr.mxu0 0.0
    %2892 = vmatpush1.msra.mxu0 0.0
    %2893 = vmatprep.subr.mxu0 0.0
    %2894 = vmatpush1.msra.mxu0 0.0
    %2895 = vmatprep.subr.mxu0 0.0
    %2896 = vmatpush1.msra.mxu0 0.0
    %2897 = vmatprep.subr.mxu0 0.0
    %2898 = vmatpush1.msra.mxu0 0.0
    %2899 = vmatprep.subr.mxu0 0.0
    %2900 = vmatpush1.msra.mxu0 %v32
    %2901 = vmatprep.subr.mxu0 0.0
    %2902 = vmatpush1.msra.mxu0 %v31
    %2903 = vmatprep.subr.mxu0 0.0
    %2904 = vmatpush1.msra.mxu0 %v30
    %2905 = vmatprep.subr.mxu0 0.0
    %2906 = vmatpush1.msra.mxu0 %v29
    %2907 = vmatprep.subr.mxu0 0.0
    %2908 = vmatpush1.msra.mxu0 %v28
    %2909 = vmatprep.subr.mxu0 0.0
    %2910 = vmatpush1.msra.mxu0 %v27
    %2911 = vmatprep.subr.mxu0 0.0
    %2912 = vmatpush1.msra.mxu0 %v26
    %2913 = vmatprep.subr.mxu0 0.0
    %2914 = vmatpush1.msra.mxu0 %v25
    %2915 = vmatprep.subr.mxu0 0.0
    %2916 = vmatpush1.msra.mxu0 %v24
    %2917 = vmatprep.subr.mxu0 0.0
    %2918 = vmatpush1.msra.mxu0 %v23
    %2919 = vmatprep.subr.mxu0 0.0
    %2920 = vmatpush1.msra.mxu0 %v22
    %2921 = vmatprep.subr.mxu0 0.0
    %2922 = vmatpush1.msra.mxu0 %v21
    %2923 = vmatprep.subr.mxu0 0.0
    %2924 = vmatpush2.msra.mxu0 0.0
    %2925 = vmatprep.subr.mxu0 0.0
    %2926 = vmatpush2.msra.mxu0 0.0
    %2927 = vmatprep.subr.mxu0 0.0
    %2928 = vmatpush2.msra.mxu0 0.0
    %2929 = vmatprep.subr.mxu0 0.0
    %2930 = vmatpush2.msra.mxu0 0.0
    %2931 = vmatprep.subr.mxu0 0.0
    %2932 = vmatpush2.msra.mxu0 0.0
    %2933 = vmatprep.subr.mxu0 0.0
    %2934 = vmatpush2.msra.mxu0 0.0
    %2935 = vmatprep.subr.mxu0 0.0
    %2936 = vmatpush2.msra.mxu0 0.0
    %2937 = vmatprep.subr.mxu0 0.0
    %2938 = vmatpush2.msra.mxu0 0.0
    %2939 = vmatprep.subr.mxu0 0.0
    %2940 = vmatpush2.msra.mxu0 0.0
    %2941 = vmatprep.subr.mxu0 0.0
    %2942 = vmatpush2.msra.mxu0 0.0
    %2943 = vmatprep.subr.mxu0 0.0
    %2944 = vmatpush2.msra.mxu0 0.0
    %2945 = vmatprep.subr.mxu0 0.0
    %2946 = vmatpush2.msra.mxu0 0.0
    %2947 = vmatprep.subr.mxu0 0.0
    %2948 = vmatpush2.msra.mxu0 0.0
    %2949 = vmatprep.subr.mxu0 0.0
    %2950 = vmatpush2.msra.mxu0 0.0
    %2951 = vmatprep.subr.mxu0 0.0
    %2952 = vmatpush2.msra.mxu0 0.0
    %2953 = vmatprep.subr.mxu0 0.0
    %2954 = vmatpush2.msra.mxu0 0.0
    %2955 = vmatprep.mubr.f32.mxu0 0.0
    %2956 = vmatmul.mubr.f32.gmra.mxu0 %v2889
    %v2957 = vpop.f32.mrf.mxu0
    %v2958 = vadd.f32 0.0, %v2957
    %v2959 = vpop.f32.mrf.mxu0
    %2960 = vdwg.mxu0
    %2962 = vrot.lane.b32.xlu0 %v2861, 112
    %v2963 = vpop.permute.xlu0 %2962
    %v2965 = vmax.f32 %v2861, %v2963
    %2967 = vrot.lane.b32.xlu0 %v2958, 112
    %v2968 = vpop.permute.xlu0 %2967
    %v2970 = vmax.f32 %v2958, %v2968
    %v2971 = vmax.f32 %v2965, %v2970
    %v2972 = vadd.f32 %v2971, %v269
    %v2973 = vmax.f32 %v2972, 0.0
    %v2975 = vrot.slane %v1938, 1
    %2976 = vrot.lane.b32.xlu0 %v2975, 16
    %v2977 = vpop.permute.xlu0 %2976
    %2980 = vrot.lane.b32.xlu0 %v2145, 32
    %v2981 = vpop.permute.xlu0 %2980
    %v2983 = vrot.slane %v2145, 1
    %2984 = vrot.lane.b32.xlu0 %v2983, 48
    %v2985 = vpop.permute.xlu0 %2984
    %2988 = vrot.lane.b32.xlu0 %v2352, 64
    %v2989 = vpop.permute.xlu0 %2988
    %v2991 = vrot.slane %v2352, 1
    %2992 = vrot.lane.b32.xlu0 %v2991, 80
    %v2993 = vpop.permute.xlu0 %2992
    %v2995 = vsel %vm73, %v1938, %v2977
    %v2996 = vsel %vm75, %v2995, %v2981
    %v2997 = vsel %vm77, %v2996, %v2985
    %v2998 = vsel %vm79, %v2997, %v2989
    %v2999 = vsel %vm81, %v2998, %v2993
    %v3001 = vsel %vm83, %v2999, 0
    %3003 = vmatprep.subr.mxu0 0.0
    %3004 = vmatpush1.msra.mxu0 0.0
    %3005 = vmatprep.subr.mxu0 0.0
    %3006 = vmatpush1.msra.mxu0 0.0
    %3007 = vmatprep.subr.mxu0 0.0
    %3008 = vmatpush1.msra.mxu0 0.0
    %3009 = vmatprep.subr.mxu0 0.0
    %3010 = vmatpush1.msra.mxu0 0.0
    %3011 = vmatprep.subr.mxu0 0.0
    %3012 = vmatpush1.msra.mxu0 %v44
    %3013 = vmatprep.subr.mxu0 0.0
    %3014 = vmatpush1.msra.mxu0 %v43
    %3015 = vmatprep.subr.mxu0 0.0
    %3016 = vmatpush1.msra.mxu0 %v42
    %3017 = vmatprep.subr.mxu0 0.0
    %3018 = vmatpush1.msra.mxu0 %v41
    %3019 = vmatprep.subr.mxu0 0.0
    %3020 = vmatpush1.msra.mxu0 %v40
    %3021 = vmatprep.subr.mxu0 0.0
    %3022 = vmatpush1.msra.mxu0 %v39
    %3023 = vmatprep.subr.mxu0 0.0
    %3024 = vmatpush1.msra.mxu0 %v38
    %3025 = vmatprep.subr.mxu0 0.0
    %3026 = vmatpush1.msra.mxu0 %v37
    %3027 = vmatprep.subr.mxu0 0.0
    %3028 = vmatpush1.msra.mxu0 %v36
    %3029 = vmatprep.subr.mxu0 0.0
    %3030 = vmatpush1.msra.mxu0 %v35
    %3031 = vmatprep.subr.mxu0 0.0
    %3032 = vmatpush1.msra.mxu0 %v34
    %3033 = vmatprep.subr.mxu0 0.0
    %3034 = vmatpush1.msra.mxu0 %v33
    %3035 = vmatprep.subr.mxu0 0.0
    %3036 = vmatpush2.msra.mxu0 0.0
    %3037 = vmatprep.subr.mxu0 0.0
    %3038 = vmatpush2.msra.mxu0 0.0
    %3039 = vmatprep.subr.mxu0 0.0
    %3040 = vmatpush2.msra.mxu0 0.0
    %3041 = vmatprep.subr.mxu0 0.0
    %3042 = vmatpush2.msra.mxu0 0.0
    %3043 = vmatprep.subr.mxu0 0.0
    %3044 = vmatpush2.msra.mxu0 0.0
    %3045 = vmatprep.subr.mxu0 0.0
    %3046 = vmatpush2.msra.mxu0 0.0
    %3047 = vmatprep.subr.mxu0 0.0
    %3048 = vmatpush2.msra.mxu0 0.0
    %3049 = vmatprep.subr.mxu0 0.0
    %3050 = vmatpush2.msra.mxu0 0.0
    %3051 = vmatprep.subr.mxu0 0.0
    %3052 = vmatpush2.msra.mxu0 0.0
    %3053 = vmatprep.subr.mxu0 0.0
    %3054 = vmatpush2.msra.mxu0 0.0
    %3055 = vmatprep.subr.mxu0 0.0
    %3056 = vmatpush2.msra.mxu0 0.0
    %3057 = vmatprep.subr.mxu0 0.0
    %3058 = vmatpush2.msra.mxu0 0.0
    %3059 = vmatprep.subr.mxu0 0.0
    %3060 = vmatpush2.msra.mxu0 0.0
    %3061 = vmatprep.subr.mxu0 0.0
    %3062 = vmatpush2.msra.mxu0 0.0
    %3063 = vmatprep.subr.mxu0 0.0
    %3064 = vmatpush2.msra.mxu0 0.0
    %3065 = vmatprep.subr.mxu0 0.0
    %3066 = vmatpush2.msra.mxu0 0.0
    %3067 = vmatprep.mubr.f32.mxu0 0.0
    %3068 = vmatmul.mubr.f32.gmra.mxu0 %v3001
    %v3069 = vpop.f32.mrf.mxu0
    %v3070 = vadd.f32 0.0, %v3069
    %v3071 = vpop.f32.mrf.mxu0
    %3072 = vdwg.mxu0
    %3073 = vrot.lane.b32.xlu0 %v2983, 16
    %v3074 = vpop.permute.xlu0 %3073
    %3076 = vrot.lane.b32.xlu0 %v2352, 32
    %v3077 = vpop.permute.xlu0 %3076
    %3079 = vrot.lane.b32.xlu0 %v2991, 48
    %v3080 = vpop.permute.xlu0 %3079
    %3083 = vrot.lane.b32.xlu0 %v2559, 64
    %v3084 = vpop.permute.xlu0 %3083
    %v3086 = vrot.slane %v2559, 1
    %3087 = vrot.lane.b32.xlu0 %v3086, 80
    %v3088 = vpop.permute.xlu0 %3087
    %v3090 = vsel %vm73, %v2145, %v3074
    %v3091 = vsel %vm75, %v3090, %v3077
    %v3092 = vsel %vm77, %v3091, %v3080
    %v3093 = vsel %vm79, %v3092, %v3084
    %v3094 = vsel %vm81, %v3093, %v3088
    %v3096 = vsel %vm83, %v3094, 0
    %3098 = vmatprep.subr.mxu0 0.0
    %3099 = vmatpush1.msra.mxu0 0.0
    %3100 = vmatprep.subr.mxu0 0.0
    %3101 = vmatpush1.msra.mxu0 0.0
    %3102 = vmatprep.subr.mxu0 0.0
    %3103 = vmatpush1.msra.mxu0 0.0
    %3104 = vmatprep.subr.mxu0 0.0
    %3105 = vmatpush1.msra.mxu0 0.0
    %3106 = vmatprep.subr.mxu0 0.0
    %3107 = vmatpush1.msra.mxu0 %v44
    %3108 = vmatprep.subr.mxu0 0.0
    %3109 = vmatpush1.msra.mxu0 %v43
    %3110 = vmatprep.subr.mxu0 0.0
    %3111 = vmatpush1.msra.mxu0 %v42
    %3112 = vmatprep.subr.mxu0 0.0
    %3113 = vmatpush1.msra.mxu0 %v41
    %3114 = vmatprep.subr.mxu0 0.0
    %3115 = vmatpush1.msra.mxu0 %v40
    %3116 = vmatprep.subr.mxu0 0.0
    %3117 = vmatpush1.msra.mxu0 %v39
    %3118 = vmatprep.subr.mxu0 0.0
    %3119 = vmatpush1.msra.mxu0 %v38
    %3120 = vmatprep.subr.mxu0 0.0
    %3121 = vmatpush1.msra.mxu0 %v37
    %3122 = vmatprep.subr.mxu0 0.0
    %3123 = vmatpush1.msra.mxu0 %v36
    %3124 = vmatprep.subr.mxu0 0.0
    %3125 = vmatpush1.msra.mxu0 %v35
    %3126 = vmatprep.subr.mxu0 0.0
    %3127 = vmatpush1.msra.mxu0 %v34
    %3128 = vmatprep.subr.mxu0 0.0
    %3129 = vmatpush1.msra.mxu0 %v33
    %3130 = vmatprep.subr.mxu0 0.0
    %3131 = vmatpush2.msra.mxu0 0.0
    %3132 = vmatprep.subr.mxu0 0.0
    %3133 = vmatpush2.msra.mxu0 0.0
    %3134 = vmatprep.subr.mxu0 0.0
    %3135 = vmatpush2.msra.mxu0 0.0
    %3136 = vmatprep.subr.mxu0 0.0
    %3137 = vmatpush2.msra.mxu0 0.0
    %3138 = vmatprep.subr.mxu0 0.0
    %3139 = vmatpush2.msra.mxu0 0.0
    %3140 = vmatprep.subr.mxu0 0.0
    %3141 = vmatpush2.msra.mxu0 0.0
    %3142 = vmatprep.subr.mxu0 0.0
    %3143 = vmatpush2.msra.mxu0 0.0
    %3144 = vmatprep.subr.mxu0 0.0
    %3145 = vmatpush2.msra.mxu0 0.0
    %3146 = vmatprep.subr.mxu0 0.0
    %3147 = vmatpush2.msra.mxu0 0.0
    %3148 = vmatprep.subr.mxu0 0.0
    %3149 = vmatpush2.msra.mxu0 0.0
    %3150 = vmatprep.subr.mxu0 0.0
    %3151 = vmatpush2.msra.mxu0 0.0
    %3152 = vmatprep.subr.mxu0 0.0
    %3153 = vmatpush2.msra.mxu0 0.0
    %3154 = vmatprep.subr.mxu0 0.0
    %3155 = vmatpush2.msra.mxu0 0.0
    %3156 = vmatprep.subr.mxu0 0.0
    %3157 = vmatpush2.msra.mxu0 0.0
    %3158 = vmatprep.subr.mxu0 0.0
    %3159 = vmatpush2.msra.mxu0 0.0
    %3160 = vmatprep.subr.mxu0 0.0
    %3161 = vmatpush2.msra.mxu0 0.0
    %3162 = vmatprep.mubr.f32.mxu0 0.0
    %3163 = vmatmul.mubr.f32.gmra.mxu0 %v3096
    %v3164 = vpop.f32.mrf.mxu0
    %v3165 = vadd.f32 0.0, %v3164
    %v3166 = vpop.f32.mrf.mxu0
    %3167 = vdwg.mxu0
    %3169 = vrot.lane.b32.xlu0 %v3070, 120
    %v3170 = vpop.permute.xlu0 %3169
    %v3172 = vmax.f32 %v3070, %v3170
    %3174 = vrot.lane.b32.xlu0 %v3165, 120
    %v3175 = vpop.permute.xlu0 %3174
    %v3177 = vmax.f32 %v3165, %v3175
    %v3178 = vmax.f32 %v3172, %v3177
    %v3179 = vadd.f32 %v3178, %v1517
    %v3180 = vmax.f32 %v3179, 0.0
    %3181 = vrot.lane.b32.xlu0 %v2991, 16
    %v3182 = vpop.permute.xlu0 %3181
    %3184 = vrot.lane.b32.xlu0 %v2559, 32
    %v3185 = vpop.permute.xlu0 %3184
    %3187 = vrot.lane.b32.xlu0 %v3086, 48
    %v3188 = vpop.permute.xlu0 %3187
    %3191 = vrot.lane.b32.xlu0 %v2766, 64
    %v3192 = vpop.permute.xlu0 %3191
    %v3194 = vrot.slane %v2766, 1
    %3195 = vrot.lane.b32.xlu0 %v3194, 80
    %v3196 = vpop.permute.xlu0 %3195
    %v3198 = vsel %vm73, %v2352, %v3182
    %v3199 = vsel %vm75, %v3198, %v3185
    %v3200 = vsel %vm77, %v3199, %v3188
    %v3201 = vsel %vm79, %v3200, %v3192
    %v3202 = vsel %vm81, %v3201, %v3196
    %v3204 = vsel %vm83, %v3202, 0
    %3206 = vmatprep.subr.mxu0 0.0
    %3207 = vmatpush1.msra.mxu0 0.0
    %3208 = vmatprep.subr.mxu0 0.0
    %3209 = vmatpush1.msra.mxu0 0.0
    %3210 = vmatprep.subr.mxu0 0.0
    %3211 = vmatpush1.msra.mxu0 0.0
    %3212 = vmatprep.subr.mxu0 0.0
    %3213 = vmatpush1.msra.mxu0 0.0
    %3214 = vmatprep.subr.mxu0 0.0
    %3215 = vmatpush1.msra.mxu0 %v44
    %3216 = vmatprep.subr.mxu0 0.0
    %3217 = vmatpush1.msra.mxu0 %v43
    %3218 = vmatprep.subr.mxu0 0.0
    %3219 = vmatpush1.msra.mxu0 %v42
    %3220 = vmatprep.subr.mxu0 0.0
    %3221 = vmatpush1.msra.mxu0 %v41
    %3222 = vmatprep.subr.mxu0 0.0
    %3223 = vmatpush1.msra.mxu0 %v40
    %3224 = vmatprep.subr.mxu0 0.0
    %3225 = vmatpush1.msra.mxu0 %v39
    %3226 = vmatprep.subr.mxu0 0.0
    %3227 = vmatpush1.msra.mxu0 %v38
    %3228 = vmatprep.subr.mxu0 0.0
    %3229 = vmatpush1.msra.mxu0 %v37
    %3230 = vmatprep.subr.mxu0 0.0
    %3231 = vmatpush1.msra.mxu0 %v36
    %3232 = vmatprep.subr.mxu0 0.0
    %3233 = vmatpush1.msra.mxu0 %v35
    %3234 = vmatprep.subr.mxu0 0.0
    %3235 = vmatpush1.msra.mxu0 %v34
    %3236 = vmatprep.subr.mxu0 0.0
    %3237 = vmatpush1.msra.mxu0 %v33
    %3238 = vmatprep.subr.mxu0 0.0
    %3239 = vmatpush2.msra.mxu0 0.0
    %3240 = vmatprep.subr.mxu0 0.0
    %3241 = vmatpush2.msra.mxu0 0.0
    %3242 = vmatprep.subr.mxu0 0.0
    %3243 = vmatpush2.msra.mxu0 0.0
    %3244 = vmatprep.subr.mxu0 0.0
    %3245 = vmatpush2.msra.mxu0 0.0
    %3246 = vmatprep.subr.mxu0 0.0
    %3247 = vmatpush2.msra.mxu0 0.0
    %3248 = vmatprep.subr.mxu0 0.0
    %3249 = vmatpush2.msra.mxu0 0.0
    %3250 = vmatprep.subr.mxu0 0.0
    %3251 = vmatpush2.msra.mxu0 0.0
    %3252 = vmatprep.subr.mxu0 0.0
    %3253 = vmatpush2.msra.mxu0 0.0
    %3254 = vmatprep.subr.mxu0 0.0
    %3255 = vmatpush2.msra.mxu0 0.0
    %3256 = vmatprep.subr.mxu0 0.0
    %3257 = vmatpush2.msra.mxu0 0.0
    %3258 = vmatprep.subr.mxu0 0.0
    %3259 = vmatpush2.msra.mxu0 0.0
    %3260 = vmatprep.subr.mxu0 0.0
    %3261 = vmatpush2.msra.mxu0 0.0
    %3262 = vmatprep.subr.mxu0 0.0
    %3263 = vmatpush2.msra.mxu0 0.0
    %3264 = vmatprep.subr.mxu0 0.0
    %3265 = vmatpush2.msra.mxu0 0.0
    %3266 = vmatprep.subr.mxu0 0.0
    %3267 = vmatpush2.msra.mxu0 0.0
    %3268 = vmatprep.subr.mxu0 0.0
    %3269 = vmatpush2.msra.mxu0 0.0
    %3270 = vmatprep.mubr.f32.mxu0 0.0
    %3271 = vmatmul.mubr.f32.gmra.mxu0 %v3204
    %v3272 = vpop.f32.mrf.mxu0
    %v3273 = vadd.f32 0.0, %v3272
    %v3274 = vpop.f32.mrf.mxu0
    %3275 = vdwg.mxu0
    %3276 = vrot.lane.b32.xlu0 %v3086, 16
    %v3277 = vpop.permute.xlu0 %3276
    %3279 = vrot.lane.b32.xlu0 %v2766, 32
    %v3280 = vpop.permute.xlu0 %3279
    %3282 = vrot.lane.b32.xlu0 %v3194, 48
    %v3283 = vpop.permute.xlu0 %3282
    %3286 = vrot.lane.b32.xlu0 %v2973, 64
    %v3287 = vpop.permute.xlu0 %3286
    %v3289 = vrot.slane %v2973, 1
    %3290 = vrot.lane.b32.xlu0 %v3289, 80
    %v3291 = vpop.permute.xlu0 %3290
    %v3293 = vsel %vm73, %v2559, %v3277
    %v3294 = vsel %vm75, %v3293, %v3280
    %v3295 = vsel %vm77, %v3294, %v3283
    %v3296 = vsel %vm79, %v3295, %v3287
    %v3297 = vsel %vm81, %v3296, %v3291
    %v3299 = vsel %vm83, %v3297, 0
    %3301 = vmatprep.subr.mxu0 0.0
    %3302 = vmatpush1.msra.mxu0 0.0
    %3303 = vmatprep.subr.mxu0 0.0
    %3304 = vmatpush1.msra.mxu0 0.0
    %3305 = vmatprep.subr.mxu0 0.0
    %3306 = vmatpush1.msra.mxu0 0.0
    %3307 = vmatprep.subr.mxu0 0.0
    %3308 = vmatpush1.msra.mxu0 0.0
    %3309 = vmatprep.subr.mxu0 0.0
    %3310 = vmatpush1.msra.mxu0 %v44
    %3311 = vmatprep.subr.mxu0 0.0
    %3312 = vmatpush1.msra.mxu0 %v43
    %3313 = vmatprep.subr.mxu0 0.0
    %3314 = vmatpush1.msra.mxu0 %v42
    %3315 = vmatprep.subr.mxu0 0.0
    %3316 = vmatpush1.msra.mxu0 %v41
    %3317 = vmatprep.subr.mxu0 0.0
    %3318 = vmatpush1.msra.mxu0 %v40
    %3319 = vmatprep.subr.mxu0 0.0
    %3320 = vmatpush1.msra.mxu0 %v39
    %3321 = vmatprep.subr.mxu0 0.0
    %3322 = vmatpush1.msra.mxu0 %v38
    %3323 = vmatprep.subr.mxu0 0.0
    %3324 = vmatpush1.msra.mxu0 %v37
    %3325 = vmatprep.subr.mxu0 0.0
    %3326 = vmatpush1.msra.mxu0 %v36
    %3327 = vmatprep.subr.mxu0 0.0
    %3328 = vmatpush1.msra.mxu0 %v35
    %3329 = vmatprep.subr.mxu0 0.0
    %3330 = vmatpush1.msra.mxu0 %v34
    %3331 = vmatprep.subr.mxu0 0.0
    %3332 = vmatpush1.msra.mxu0 %v33
    %3333 = vmatprep.subr.mxu0 0.0
    %3334 = vmatpush2.msra.mxu0 0.0
    %3335 = vmatprep.subr.mxu0 0.0
    %3336 = vmatpush2.msra.mxu0 0.0
    %3337 = vmatprep.subr.mxu0 0.0
    %3338 = vmatpush2.msra.mxu0 0.0
    %3339 = vmatprep.subr.mxu0 0.0
    %3340 = vmatpush2.msra.mxu0 0.0
    %3341 = vmatprep.subr.mxu0 0.0
    %3342 = vmatpush2.msra.mxu0 0.0
    %3343 = vmatprep.subr.mxu0 0.0
    %3344 = vmatpush2.msra.mxu0 0.0
    %3345 = vmatprep.subr.mxu0 0.0
    %3346 = vmatpush2.msra.mxu0 0.0
    %3347 = vmatprep.subr.mxu0 0.0
    %3348 = vmatpush2.msra.mxu0 0.0
    %3349 = vmatprep.subr.mxu0 0.0
    %3350 = vmatpush2.msra.mxu0 0.0
    %3351 = vmatprep.subr.mxu0 0.0
    %3352 = vmatpush2.msra.mxu0 0.0
    %3353 = vmatprep.subr.mxu0 0.0
    %3354 = vmatpush2.msra.mxu0 0.0
    %3355 = vmatprep.subr.mxu0 0.0
    %3356 = vmatpush2.msra.mxu0 0.0
    %3357 = vmatprep.subr.mxu0 0.0
    %3358 = vmatpush2.msra.mxu0 0.0
    %3359 = vmatprep.subr.mxu0 0.0
    %3360 = vmatpush2.msra.mxu0 0.0
    %3361 = vmatprep.subr.mxu0 0.0
    %3362 = vmatpush2.msra.mxu0 0.0
    %3363 = vmatprep.subr.mxu0 0.0
    %3364 = vmatpush2.msra.mxu0 0.0
    %3365 = vmatprep.mubr.f32.mxu0 0.0
    %3366 = vmatmul.mubr.f32.gmra.mxu0 %v3299
    %v3367 = vpop.f32.mrf.mxu0
    %v3368 = vadd.f32 0.0, %v3367
    %v3369 = vpop.f32.mrf.mxu0
    %3370 = vdwg.mxu0
    %3372 = vrot.lane.b32.xlu0 %v3273, 120
    %v3373 = vpop.permute.xlu0 %3372
    %v3375 = vmax.f32 %v3273, %v3373
    %3377 = vrot.lane.b32.xlu0 %v3368, 120
    %v3378 = vpop.permute.xlu0 %3377
    %v3380 = vmax.f32 %v3368, %v3378
    %v3381 = vmax.f32 %v3375, %v3380
    %v3382 = vadd.f32 %v3381, %v1517
    %v3383 = vmax.f32 %v3382, 0.0
    %vm3384 = vcmask 58368
    %3385 = vst.msk [vmem:[#allocation2] sm:$0x3] %vm3384, %v1520
    %3386 = vst.msk [vmem:[#allocation2 + $0x2] sm:$0x3] %vm3384, %v1723
    %3387 = vst.msk [vmem:[#allocation2 + $0x4] sm:$0x3] %vm3384, %v3180
    %3388 = vst.msk [vmem:[#allocation2 + $0x6] sm:$0x3] %vm3384, %v3383
    // Predicated region
    $region22: #{tpu_custom_call.1} parent=1 // pred_check
      _
    $region23: #{tpu_custom_call.1} parent=1 // pred_check_branch
      %3390 = sbr.rel (0) target = $region25
    $region24: #{tpu_custom_call.1} parent=1 // pred_region
      %s3392 = ssub.s32 128, 128
      %3393 = vsyncadd [#allocation3], %s3392
      %s3394 = sshll.u32 [#allocation2], 4
      %s3395 = int_to_ptr.vmem [resolvable:$true] %s3394
      %3400 = dma.vmem_to_hbm [thread:$0]  %s3395, 128, %s5, [#allocation3], 32, 32, 2
    $region25: #{tpu_custom_call.1} parent=1 // pred_fallthru
      _
    // Predicated region
    $region26: #{tpu_custom_call.1} parent=1 // pred_check
      _
    $region27: #{tpu_custom_call.1} parent=1 // pred_check_branch
      %3402 = sbr.rel (0) target = $region29
    $region28: #{tpu_custom_call.1} parent=1 // pred_region
      %3403 = dma.done [#allocation3], 128
    $region29: #{tpu_custom_call.1} parent=1 // pred_fallthru
      _
    %3404 = vsyncpa [#allocation3], 1

</llo_original>
